<compile_context>
chip_gen: v6e
topology: v6e:2x2x1
jax: 0.10.0
libtpu: 0.0.40
codegen_flags: <defaults>
</compile_context>

<pallas_src>
import functools

import numpy as np
import jax
import jax.numpy as jnp
from jax.experimental import pallas as pl
from jax.experimental.pallas import tpu as pltpu


def _valid_dys(d, H):
    """Vertical tap offsets of a 3x3 conv with dilation d that can touch an
    H-row image (taps that only see zero padding are dropped at trace time)."""
    return [dy for dy in (-d, 0, d) if abs(dy) < H]


# -----------------------------------------------------------------------------
# Fused forward kernel (one grid step == one batch element)
# -----------------------------------------------------------------------------
def _fused_canet_kernel(
        x_ref, out_ref,
        r1a_w, r1a_b, r1b_w, r1b_b,
        r2a_w, r2a_b, r2b_w, r2b_b,
        r3a_w, r3a_b, r3b_w, r3b_b,
        a1_w, a1_b, a2_w, a2_b, a3_w, a3_b, a4_w, a4_b,
        a5_w, a5_b,
        o_ref, padbuf,
        *, H, W, C, padH):
    f32 = jnp.float32
    WC = W * C

    # Zero only the halo strips (sublane-aligned); the centre is rewritten
    # before every conv.  Halos give 'same' zero padding for vertical taps;
    # horizontal taps/padding live inside the packed weights.
    padbuf[0:padH, :] = jnp.zeros((padH, WC), f32)
    padbuf[padH + H:padH + H + padH, :] = jnp.zeros((padH, WC), f32)

    def stage(a):
        padbuf[padH:padH + H, :] = a

    def taps(d):
        """(H, n_dy*W*C) operand: currently-staged activation shifted by each
        valid vertical tap offset, lane-concatenated (free when W*C % 128 == 0:
        whole 128-lane chunks, no relayout)."""
        planes = [padbuf[padH + dy:padH + dy + H, :] for dy in _valid_dys(d, H)]
        return planes[0] if len(planes) == 1 else jnp.concatenate(planes, axis=-1)

    def mm(operand, w_ref, b_ref):
        y = jnp.dot(operand, w_ref[...], preferred_element_type=f32) + b_ref[...]
        return jnp.maximum(y, 0.0)

    x = x_ref[0]        # (H, W*C), lane index = w*C + c
    out0 = out_ref[0]   # (H, W*C)

    # resblock1 over cat([x, out], channels): the channel concat is fused into a
    # single dot by stacking both operands' tap windows along the K axis.
    stage(x);    px = taps(1)
    stage(out0); po = taps(1)
    h = mm(jnp.concatenate([px, po], axis=-1), r1a_w, r1a_b)
    stage(h)
    x = x + mm(taps(1), r1b_w, r1b_b)

    # resblock2 / resblock3
    stage(x); h = mm(taps(1), r2a_w, r2a_b)
    stage(h); x = x + mm(taps(1), r2b_w, r2b_b)
    stage(x); h = mm(taps(1), r3a_w, r3a_b)
    stage(h); x = x + mm(taps(1), r3b_w, r3b_b)

    # ASPP branches (Conv2dBlock: conv + ReLU + Dropout2d(eval) == identity).
    a1 = mm(x, a1_w, a1_b)                 # 1x1 conv: block-diagonal packed dot
    stage(x)                               # staged once, reused by aspp2/3/4
    a2 = mm(taps(6),  a2_w, a2_b)
    a3 = mm(taps(12), a3_w, a3_b)
    a4 = mm(taps(18), a4_w, a4_b)          # at 16x16 only the centre tap survives

    # aspp5: 1x1 conv over cat([out, a1..a4]) == one K = 5*W*C dot.
    cat5 = jnp.concatenate([out0, a1, a2, a3, a4], axis=-1)
    o_ref[0] = mm(cat5, a5_w, a5_b).astype(o_ref.dtype)


# -----------------------------------------------------------------------------
# Host-side weight packing: fold the horizontal taps (and image-boundary
# masking) of each conv into a banded block matrix over the (w, c) lane axis.
# -----------------------------------------------------------------------------
def _pack_conv3x3(w, d, H, W):
    """(3,3,Cin,Cout) HWIO weight, dilation d -> (n_dy*W*Cin, W*Cout) matrix
    matching the kernel's lane layout (lane = w*C + c) and taps() dy order."""
    blocks = []
    for dy in _valid_dys(d, H):
        kh = dy // d + 1
        m = jnp.zeros((W * w.shape[2], W * w.shape[3]), jnp.float32)
        for kw in range(3):
            dx = (kw - 1) * d
            if abs(dx) >= W:
                continue                               # tap fully in horizontal pad
            sel = np.eye(W, W, k=-dx, dtype=np.float32)  # sel[wi,wo]=1 iff wi==wo+dx
            m = m + jnp.kron(sel, w[kh, kw])
        blocks.append(m)
    return jnp.concatenate(blocks, axis=0)


def _pack_conv1x1(w, W):
    """(Cin,Cout) 1x1 conv weight -> (W*Cin, W*Cout) block-diagonal matrix."""
    return jnp.kron(np.eye(W, dtype=np.float32), w)


def _pack_bias(b, W):
    return jnp.tile(b, W).reshape(1, -1)               # lane = w*Cout + co


# -----------------------------------------------------------------------------
# Wrapper: layout plumbing + weight packing + pallas_call
# -----------------------------------------------------------------------------
@jax.jit
def iterative_optimization_forward(params, x_nchw, out_nchw):
    N, C, H, W = x_nchw.shape
    WC = W * C

    # NCHW -> (N, H, W*C): rows on sublanes, (w, c) folded into lanes.  With
    # W*C == 128 every activation / output tile is fully lane-dense.
    def to_l(a):
        return a.transpose(0, 2, 3, 1).reshape(N, H, WC)
    x_l, o_l = to_l(x_nchw), to_l(out_nchw)

    def conv3(name, d=1):
        w, b = params[name]
        return _pack_conv3x3(w, d, H, W), _pack_bias(b, W)

    def conv1(name):
        w, b = params[name]
        return _pack_conv1x1(w[0, 0], W), _pack_bias(b, W)

    # resblock1's first conv sees cat([x, out], channels): split its weight and
    # stack the two packed halves along K in the kernel's [x-taps, out-taps] order.
    w1a, b1a = params['res1_c1']
    r1a_w = jnp.concatenate([_pack_conv3x3(w1a[:, :, :C, :], 1, H, W),
                             _pack_conv3x3(w1a[:, :, C:, :], 1, H, W)], axis=0)
    r1a_b = _pack_bias(b1a, W)

    r1b_w, r1b_b = conv3('res1_c2')
    r2a_w, r2a_b = conv3('res2_c1'); r2b_w, r2b_b = conv3('res2_c2')
    r3a_w, r3a_b = conv3('res3_c1'); r3b_w, r3b_b = conv3('res3_c2')
    a1_w, a1_b = conv1('aspp1')
    a2_w, a2_b = conv3('aspp2', 6)
    a3_w, a3_b = conv3('aspp3', 12)
    a4_w, a4_b = conv3('aspp4', 18)

    # aspp5: 1x1 over cat([out, a1..a4], channels); per-branch blocks stacked
    # along K in the kernel's lane-concat order [out, a1, a2, a3, a4].
    w5, b5 = params['aspp5']
    a5_w = jnp.concatenate(
        [_pack_conv1x1(w5[0, 0, i * C:(i + 1) * C, :], W) for i in range(5)], axis=0)
    a5_b = _pack_bias(b5, W)

    # Vertical halo: largest vertical tap offset that can touch the image,
    # rounded up to a sublane multiple so staging and halo-zeroing stay aligned.
    max_dy = max([d for d in (1, 6, 12, 18) if d < H] + [1])
    padH = max(8, -(-max_dy // 8) * 8)

    args = [x_l, o_l,
            r1a_w, r1a_b, r1b_w, r1b_b,
            r2a_w, r2a_b, r2b_w, r2b_b,
            r3a_w, r3a_b, r3b_w, r3b_b,
            a1_w, a1_b, a2_w, a2_b, a3_w, a3_b, a4_w, a4_b,
            a5_w, a5_b]

    batch_spec = pl.BlockSpec((1, H, WC), lambda n: (n, 0, 0))
    in_specs = [batch_spec, batch_spec]
    for a in args[2:]:                                   # full-array (untiled) blocks
        in_specs.append(pl.BlockSpec(a.shape, lambda n, nd=a.ndim: (0,) * nd))

    kernel = functools.partial(_fused_canet_kernel, H=H, W=W, C=C, padH=padH)
    out = pl.pallas_call(
        kernel,
        out_shape=jax.ShapeDtypeStruct((N, H, WC), jnp.float32),
        grid=(N,),
        in_specs=in_specs,
        out_specs=batch_spec,
        scratch_shapes=[pltpu.VMEM((H + 2 * padH, WC), jnp.float32)],
        compiler_params=pltpu.CompilerParams(
            dimension_semantics=("parallel",),
            vmem_limit_bytes=32 * 1024 * 1024),
    )(*args)

    # (N, H, W*C) -> NCHW
    return out.reshape(N, H, W, C).transpose(0, 3, 1, 2)


# -----------------------------------------------------------------------------
# Deterministic parameter init (PyTorch Conv2d default: U(-1/sqrt(fan_in), +)).
# Weights stored in HWIO layout (KH, KW, Cin, Cout).
# -----------------------------------------------------------------------------
def make_params(key, C):
    # NOTE: `conv1x1` from __init__ is unused in forward(), so it is omitted.
    specs = {
        'res1_c1': (3, 2 * C, C), 'res1_c2': (3, C, C),
        'res2_c1': (3, C, C),     'res2_c2': (3, C, C),
        'res3_c1': (3, C, C),     'res3_c2': (3, C, C),
        'aspp1':   (1, C, C),
        'aspp2':   (3, C, C),
        'aspp3':   (3, C, C),
        'aspp4':   (3, C, C),
        'aspp5':   (1, 5 * C, C),
    }
    params = {}
    for i, (name, (k, cin, cout)) in enumerate(specs.items()):
        kw_key, kb_key = jax.random.split(jax.random.fold_in(key, i))
        bound = 1.0 / float((cin * k * k) ** 0.5)
        w = jax.random.uniform(kw_key, (k, k, cin, cout), jnp.float32, -bound, bound)
        b = jax.random.uniform(kb_key, (cout,), jnp.float32, -bound, bound)
        params[name] = (w, b)
    return params


# -----------------------------------------------------------------------------
# Pure-JAX reference (lax.conv_general_dilated) for correctness check
# -----------------------------------------------------------------------------
def _ref_conv(x, w, b, dil):
    k = w.shape[0]
    pad = dil * (k - 1) // 2
    y = jax.lax.conv_general_dilated(
        x, w, window_strides=(1, 1),
        padding=[(pad, pad), (pad, pad)],
        rhs_dilation=(dil, dil),
        dimension_numbers=('NHWC', 'HWIO', 'NHWC'))
    return jnp.maximum(y + b, 0.0)


def reference_forward(params, x_nchw, out_nchw):
    x = jnp.transpose(x_nchw, (0, 2, 3, 1))
    out = jnp.transpose(out_nchw, (0, 2, 3, 1))

    def cb(name, inp, dil=1):
        w, b = params[name]
        return _ref_conv(inp, w, b, dil)

    concat = jnp.concatenate([x, out], axis=-1)
    x = x + cb('res1_c2', cb('res1_c1', concat))
    x = x + cb('res2_c2', cb('res2_c1', x))
    x = x + cb('res3_c2', cb('res3_c1', x))
    out = jnp.concatenate(
        [out, cb('aspp1', x), cb('aspp2', x, 6), cb('aspp3', x, 12), cb('aspp4', x, 18)],
        axis=-1)
    out = cb('aspp5', out)
    return jnp.transpose(out, (0, 3, 1, 2))


if __name__ == "__main__":
    N, C, H, W = 2, 8, 16, 16          # in_channels == out_channels (required by residuals)
    key = jax.random.PRNGKey(0)
    kx, ko, kp = jax.random.split(key, 3)
    x = jax.random.normal(kx, (N, C, H, W), jnp.float32)
    out = jax.random.normal(ko, (N, C, H, W), jnp.float32)
    params = make_params(kp, C)

    y = iterative_optimization_forward(params, x, out)
    y = jax.block_until_ready(y)

    y_ref = reference_forward(params, x, out)
    assert y.shape == (N, C, H, W), y.shape
    err = float(jnp.max(jnp.abs(y - y_ref)))
    assert jnp.allclose(y, y_ref, atol=1e-4, rtol=1e-4), err

    print("KERNEL_OK")
</pallas_src>

<mosaic_0001>
module attributes {stable_mosaic.version = 11 : i64} {
  func.func @_fused_canet_kernel(%arg0: i32, %arg1: memref<1x16x128xf32, #tpu.memory_space<vmem>>, %arg2: memref<1x16x128xf32, #tpu.memory_space<vmem>>, %arg3: memref<768x128xf32, #tpu.memory_space<vmem>>, %arg4: memref<1x128xf32, #tpu.memory_space<vmem>>, %arg5: memref<384x128xf32, #tpu.memory_space<vmem>>, %arg6: memref<1x128xf32, #tpu.memory_space<vmem>>, %arg7: memref<384x128xf32, #tpu.memory_space<vmem>>, %arg8: memref<1x128xf32, #tpu.memory_space<vmem>>, %arg9: memref<384x128xf32, #tpu.memory_space<vmem>>, %arg10: memref<1x128xf32, #tpu.memory_space<vmem>>, %arg11: memref<384x128xf32, #tpu.memory_space<vmem>>, %arg12: memref<1x128xf32, #tpu.memory_space<vmem>>, %arg13: memref<384x128xf32, #tpu.memory_space<vmem>>, %arg14: memref<1x128xf32, #tpu.memory_space<vmem>>, %arg15: memref<128x128xf32, #tpu.memory_space<vmem>>, %arg16: memref<1x128xf32, #tpu.memory_space<vmem>>, %arg17: memref<384x128xf32, #tpu.memory_space<vmem>>, %arg18: memref<1x128xf32, #tpu.memory_space<vmem>>, %arg19: memref<384x128xf32, #tpu.memory_space<vmem>>, %arg20: memref<1x128xf32, #tpu.memory_space<vmem>>, %arg21: memref<128x128xf32, #tpu.memory_space<vmem>>, %arg22: memref<1x128xf32, #tpu.memory_space<vmem>>, %arg23: memref<640x128xf32, #tpu.memory_space<vmem>>, %arg24: memref<1x128xf32, #tpu.memory_space<vmem>>, %arg25: memref<1x16x128xf32, #tpu.memory_space<vmem>>, %arg26: memref<48x128xf32, #tpu.memory_space<vmem>>) attributes {dimension_semantics = [#tpu.dimension_semantics<parallel>], iteration_bounds = array<i64: 2>, scalar_prefetch = 0 : i64, scratch_operands = 1 : i64, tpu.core_type = #tpu.core_type<tc>, window_params = [{transform_indices = @transform_0, window_bounds = array<i64: 1, 16, 128>}, {transform_indices = @transform_1, window_bounds = array<i64: 1, 16, 128>}, {pipeline_mode = #tpu.pipeline_mode<synchronous>, transform_indices = @transform_2, window_bounds = array<i64: 768, 128>}, {pipeline_mode = #tpu.pipeline_mode<synchronous>, transform_indices = @transform_3, window_bounds = array<i64: 1, 128>}, {pipeline_mode = #tpu.pipeline_mode<synchronous>, transform_indices = @transform_4, window_bounds = array<i64: 384, 128>}, {pipeline_mode = #tpu.pipeline_mode<synchronous>, transform_indices = @transform_5, window_bounds = array<i64: 1, 128>}, {pipeline_mode = #tpu.pipeline_mode<synchronous>, transform_indices = @transform_6, window_bounds = array<i64: 384, 128>}, {pipeline_mode = #tpu.pipeline_mode<synchronous>, transform_indices = @transform_7, window_bounds = array<i64: 1, 128>}, {pipeline_mode = #tpu.pipeline_mode<synchronous>, transform_indices = @transform_8, window_bounds = array<i64: 384, 128>}, {pipeline_mode = #tpu.pipeline_mode<synchronous>, transform_indices = @transform_9, window_bounds = array<i64: 1, 128>}, {pipeline_mode = #tpu.pipeline_mode<synchronous>, transform_indices = @transform_10, window_bounds = array<i64: 384, 128>}, {pipeline_mode = #tpu.pipeline_mode<synchronous>, transform_indices = @transform_11, window_bounds = array<i64: 1, 128>}, {pipeline_mode = #tpu.pipeline_mode<synchronous>, transform_indices = @transform_12, window_bounds = array<i64: 384, 128>}, {pipeline_mode = #tpu.pipeline_mode<synchronous>, transform_indices = @transform_13, window_bounds = array<i64: 1, 128>}, {pipeline_mode = #tpu.pipeline_mode<synchronous>, transform_indices = @transform_14, window_bounds = array<i64: 128, 128>}, {pipeline_mode = #tpu.pipeline_mode<synchronous>, transform_indices = @transform_15, window_bounds = array<i64: 1, 128>}, {pipeline_mode = #tpu.pipeline_mode<synchronous>, transform_indices = @transform_16, window_bounds = array<i64: 384, 128>}, {pipeline_mode = #tpu.pipeline_mode<synchronous>, transform_indices = @transform_17, window_bounds = array<i64: 1, 128>}, {pipeline_mode = #tpu.pipeline_mode<synchronous>, transform_indices = @transform_18, window_bounds = array<i64: 384, 128>}, {pipeline_mode = #tpu.pipeline_mode<synchronous>, transform_indices = @transform_19, window_bounds = array<i64: 1, 128>}, {pipeline_mode = #tpu.pipeline_mode<synchronous>, transform_indices = @transform_20, window_bounds = array<i64: 128, 128>}, {pipeline_mode = #tpu.pipeline_mode<synchronous>, transform_indices = @transform_21, window_bounds = array<i64: 1, 128>}, {pipeline_mode = #tpu.pipeline_mode<synchronous>, transform_indices = @transform_22, window_bounds = array<i64: 640, 128>}, {pipeline_mode = #tpu.pipeline_mode<synchronous>, transform_indices = @transform_23, window_bounds = array<i64: 1, 128>}, {transform_indices = @transform_24, window_bounds = array<i64: 1, 16, 128>}]} {
    %cst = arith.constant 0.000000e+00 : f32
    %0 = vector.broadcast %cst : f32 to vector<16x128xf32>
    %c0 = arith.constant 0 : index
    %c0_0 = arith.constant 0 : index
    %1 = vector.load %arg26[%c0, %c0_0] : memref<48x128xf32, #tpu.memory_space<vmem>>, vector<16x128xf32>
    tpu.vector_store %arg26[%c0, %c0_0], %0 {strides = array<i32>} : memref<48x128xf32, #tpu.memory_space<vmem>>, vector<16x128xf32>,
    %cst_1 = arith.constant 0.000000e+00 : f32
    %2 = vector.broadcast %cst_1 : f32 to vector<16x128xf32>
    %c32 = arith.constant 32 : index
    %c0_2 = arith.constant 0 : index
    %3 = vector.load %arg26[%c32, %c0_2] : memref<48x128xf32, #tpu.memory_space<vmem>>, vector<16x128xf32>
    tpu.vector_store %arg26[%c32, %c0_2], %2 {strides = array<i32>} : memref<48x128xf32, #tpu.memory_space<vmem>>, vector<16x128xf32>,
    %c0_3 = arith.constant 0 : index
    %c0_4 = arith.constant 0 : index
    %c0_5 = arith.constant 0 : index
    %4 = vector.load %arg1[%c0_3, %c0_4, %c0_5] : memref<1x16x128xf32, #tpu.memory_space<vmem>>, vector<1x16x128xf32>
    %5 = vector.shape_cast %4 : vector<1x16x128xf32> to vector<16x128xf32>
    %c0_6 = arith.constant 0 : index
    %c0_7 = arith.constant 0 : index
    %c0_8 = arith.constant 0 : index
    %6 = vector.load %arg2[%c0_6, %c0_7, %c0_8] : memref<1x16x128xf32, #tpu.memory_space<vmem>>, vector<1x16x128xf32>
    %7 = vector.shape_cast %6 : vector<1x16x128xf32> to vector<16x128xf32>
    %c16 = arith.constant 16 : index
    %c0_9 = arith.constant 0 : index
    %8 = vector.load %arg26[%c16, %c0_9] : memref<48x128xf32, #tpu.memory_space<vmem>>, vector<16x128xf32>
    tpu.vector_store %arg26[%c16, %c0_9], %5 {strides = array<i32>} : memref<48x128xf32, #tpu.memory_space<vmem>>, vector<16x128xf32>,
    %c15 = arith.constant 15 : index
    %c0_10 = arith.constant 0 : index
    %9 = vector.load %arg26[%c15, %c0_10] : memref<48x128xf32, #tpu.memory_space<vmem>>, vector<16x128xf32>
    %c16_11 = arith.constant 16 : index
    %c0_12 = arith.constant 0 : index
    %10 = vector.load %arg26[%c16_11, %c0_12] : memref<48x128xf32, #tpu.memory_space<vmem>>, vector<16x128xf32>
    %c17 = arith.constant 17 : index
    %c0_13 = arith.constant 0 : index
    %11 = vector.load %arg26[%c17, %c0_13] : memref<48x128xf32, #tpu.memory_space<vmem>>, vector<16x128xf32>
    %12 = tpu.concatenate %9, %10, %11 in 1 : vector<16x128xf32>, vector<16x128xf32>, vector<16x128xf32> -> vector<16x384xf32>
    %c16_14 = arith.constant 16 : index
    %c0_15 = arith.constant 0 : index
    %13 = vector.load %arg26[%c16_14, %c0_15] : memref<48x128xf32, #tpu.memory_space<vmem>>, vector<16x128xf32>
    tpu.vector_store %arg26[%c16_14, %c0_15], %7 {strides = array<i32>} : memref<48x128xf32, #tpu.memory_space<vmem>>, vector<16x128xf32>,
    %c15_16 = arith.constant 15 : index
    %c0_17 = arith.constant 0 : index
    %14 = vector.load %arg26[%c15_16, %c0_17] : memref<48x128xf32, #tpu.memory_space<vmem>>, vector<16x128xf32>
    %c16_18 = arith.constant 16 : index
    %c0_19 = arith.constant 0 : index
    %15 = vector.load %arg26[%c16_18, %c0_19] : memref<48x128xf32, #tpu.memory_space<vmem>>, vector<16x128xf32>
    %c17_20 = arith.constant 17 : index
    %c0_21 = arith.constant 0 : index
    %16 = vector.load %arg26[%c17_20, %c0_21] : memref<48x128xf32, #tpu.memory_space<vmem>>, vector<16x128xf32>
    %17 = tpu.concatenate %14, %15, %16 in 1 : vector<16x128xf32>, vector<16x128xf32>, vector<16x128xf32> -> vector<16x384xf32>
    %18 = tpu.concatenate %12, %17 in 1 : vector<16x384xf32>, vector<16x384xf32> -> vector<16x768xf32>
    %c0_22 = arith.constant 0 : index
    %c0_23 = arith.constant 0 : index
    %19 = vector.load %arg3[%c0_22, %c0_23] : memref<768x128xf32, #tpu.memory_space<vmem>>, vector<768x128xf32>
    %cst_24 = arith.constant dense<0.000000e+00> : vector<16x128xf32>
    %20 = tpu.matmul %18, %19, %cst_24 {dimension_numbers = #tpu.dot_dimension_numbers<[1], [0], [0], [1], [0, 0, 1, 1], [], []>} : vector<16x768xf32>, vector<768x128xf32>, vector<16x128xf32> -> vector<16x128xf32>
    %c0_25 = arith.constant 0 : index
    %c0_26 = arith.constant 0 : index
    %21 = vector.load %arg4[%c0_25, %c0_26] : memref<1x128xf32, #tpu.memory_space<vmem>>, vector<1x128xf32>
    %22 = vector.broadcast %21 : vector<1x128xf32> to vector<16x128xf32>
    %23 = arith.addf %20, %22 : vector<16x128xf32>
    %cst_27 = arith.constant 0.000000e+00 : f32
    %24 = vector.broadcast %cst_27 : f32 to vector<16x128xf32>
    %25 = arith.maximumf %23, %24 : vector<16x128xf32>
    %c16_28 = arith.constant 16 : index
    %c0_29 = arith.constant 0 : index
    %26 = vector.load %arg26[%c16_28, %c0_29] : memref<48x128xf32, #tpu.memory_space<vmem>>, vector<16x128xf32>
    tpu.vector_store %arg26[%c16_28, %c0_29], %25 {strides = array<i32>} : memref<48x128xf32, #tpu.memory_space<vmem>>, vector<16x128xf32>,
    %c15_30 = arith.constant 15 : index
    %c0_31 = arith.constant 0 : index
    %27 = vector.load %arg26[%c15_30, %c0_31] : memref<48x128xf32, #tpu.memory_space<vmem>>, vector<16x128xf32>
    %c16_32 = arith.constant 16 : index
    %c0_33 = arith.constant 0 : index
    %28 = vector.load %arg26[%c16_32, %c0_33] : memref<48x128xf32, #tpu.memory_space<vmem>>, vector<16x128xf32>
    %c17_34 = arith.constant 17 : index
    %c0_35 = arith.constant 0 : index
    %29 = vector.load %arg26[%c17_34, %c0_35] : memref<48x128xf32, #tpu.memory_space<vmem>>, vector<16x128xf32>
    %30 = tpu.concatenate %27, %28, %29 in 1 : vector<16x128xf32>, vector<16x128xf32>, vector<16x128xf32> -> vector<16x384xf32>
    %c0_36 = arith.constant 0 : index
    %c0_37 = arith.constant 0 : index
    %31 = vector.load %arg5[%c0_36, %c0_37] : memref<384x128xf32, #tpu.memory_space<vmem>>, vector<384x128xf32>
    %cst_38 = arith.constant dense<0.000000e+00> : vector<16x128xf32>
    %32 = tpu.matmul %30, %31, %cst_38 {dimension_numbers = #tpu.dot_dimension_numbers<[1], [0], [0], [1], [0, 0, 1, 1], [], []>} : vector<16x384xf32>, vector<384x128xf32>, vector<16x128xf32> -> vector<16x128xf32>
    %c0_39 = arith.constant 0 : index
    %c0_40 = arith.constant 0 : index
    %33 = vector.load %arg6[%c0_39, %c0_40] : memref<1x128xf32, #tpu.memory_space<vmem>>, vector<1x128xf32>
    %34 = vector.broadcast %33 : vector<1x128xf32> to vector<16x128xf32>
    %35 = arith.addf %32, %34 : vector<16x128xf32>
    %cst_41 = arith.constant 0.000000e+00 : f32
    %36 = vector.broadcast %cst_41 : f32 to vector<16x128xf32>
    %37 = arith.maximumf %35, %36 : vector<16x128xf32>
    %38 = arith.addf %5, %37 : vector<16x128xf32>
    %c16_42 = arith.constant 16 : index
    %c0_43 = arith.constant 0 : index
    %39 = vector.load %arg26[%c16_42, %c0_43] : memref<48x128xf32, #tpu.memory_space<vmem>>, vector<16x128xf32>
    tpu.vector_store %arg26[%c16_42, %c0_43], %38 {strides = array<i32>} : memref<48x128xf32, #tpu.memory_space<vmem>>, vector<16x128xf32>,
    %c15_44 = arith.constant 15 : index
    %c0_45 = arith.constant 0 : index
    %40 = vector.load %arg26[%c15_44, %c0_45] : memref<48x128xf32, #tpu.memory_space<vmem>>, vector<16x128xf32>
    %c16_46 = arith.constant 16 : index
    %c0_47 = arith.constant 0 : index
    %41 = vector.load %arg26[%c16_46, %c0_47] : memref<48x128xf32, #tpu.memory_space<vmem>>, vector<16x128xf32>
    %c17_48 = arith.constant 17 : index
    %c0_49 = arith.constant 0 : index
    %42 = vector.load %arg26[%c17_48, %c0_49] : memref<48x128xf32, #tpu.memory_space<vmem>>, vector<16x128xf32>
    %43 = tpu.concatenate %40, %41, %42 in 1 : vector<16x128xf32>, vector<16x128xf32>, vector<16x128xf32> -> vector<16x384xf32>
    %c0_50 = arith.constant 0 : index
    %c0_51 = arith.constant 0 : index
    %44 = vector.load %arg7[%c0_50, %c0_51] : memref<384x128xf32, #tpu.memory_space<vmem>>, vector<384x128xf32>
    %cst_52 = arith.constant dense<0.000000e+00> : vector<16x128xf32>
    %45 = tpu.matmul %43, %44, %cst_52 {dimension_numbers = #tpu.dot_dimension_numbers<[1], [0], [0], [1], [0, 0, 1, 1], [], []>} : vector<16x384xf32>, vector<384x128xf32>, vector<16x128xf32> -> vector<16x128xf32>
    %c0_53 = arith.constant 0 : index
    %c0_54 = arith.constant 0 : index
    %46 = vector.load %arg8[%c0_53, %c0_54] : memref<1x128xf32, #tpu.memory_space<vmem>>, vector<1x128xf32>
    %47 = vector.broadcast %46 : vector<1x128xf32> to vector<16x128xf32>
    %48 = arith.addf %45, %47 : vector<16x128xf32>
    %cst_55 = arith.constant 0.000000e+00 : f32
    %49 = vector.broadcast %cst_55 : f32 to vector<16x128xf32>
    %50 = arith.maximumf %48, %49 : vector<16x128xf32>
    %c16_56 = arith.constant 16 : index
    %c0_57 = arith.constant 0 : index
    %51 = vector.load %arg26[%c16_56, %c0_57] : memref<48x128xf32, #tpu.memory_space<vmem>>, vector<16x128xf32>
    tpu.vector_store %arg26[%c16_56, %c0_57], %50 {strides = array<i32>} : memref<48x128xf32, #tpu.memory_space<vmem>>, vector<16x128xf32>,
    %c15_58 = arith.constant 15 : index
    %c0_59 = arith.constant 0 : index
    %52 = vector.load %arg26[%c15_58, %c0_59] : memref<48x128xf32, #tpu.memory_space<vmem>>, vector<16x128xf32>
    %c16_60 = arith.constant 16 : index
    %c0_61 = arith.constant 0 : index
    %53 = vector.load %arg26[%c16_60, %c0_61] : memref<48x128xf32, #tpu.memory_space<vmem>>, vector<16x128xf32>
    %c17_62 = arith.constant 17 : index
    %c0_63 = arith.constant 0 : index
    %54 = vector.load %arg26[%c17_62, %c0_63] : memref<48x128xf32, #tpu.memory_space<vmem>>, vector<16x128xf32>
    %55 = tpu.concatenate %52, %53, %54 in 1 : vector<16x128xf32>, vector<16x128xf32>, vector<16x128xf32> -> vector<16x384xf32>
    %c0_64 = arith.constant 0 : index
    %c0_65 = arith.constant 0 : index
    %56 = vector.load %arg9[%c0_64, %c0_65] : memref<384x128xf32, #tpu.memory_space<vmem>>, vector<384x128xf32>
    %cst_66 = arith.constant dense<0.000000e+00> : vector<16x128xf32>
    %57 = tpu.matmul %55, %56, %cst_66 {dimension_numbers = #tpu.dot_dimension_numbers<[1], [0], [0], [1], [0, 0, 1, 1], [], []>} : vector<16x384xf32>, vector<384x128xf32>, vector<16x128xf32> -> vector<16x128xf32>
    %c0_67 = arith.constant 0 : index
    %c0_68 = arith.constant 0 : index
    %58 = vector.load %arg10[%c0_67, %c0_68] : memref<1x128xf32, #tpu.memory_space<vmem>>, vector<1x128xf32>
    %59 = vector.broadcast %58 : vector<1x128xf32> to vector<16x128xf32>
    %60 = arith.addf %57, %59 : vector<16x128xf32>
    %cst_69 = arith.constant 0.000000e+00 : f32
    %61 = vector.broadcast %cst_69 : f32 to vector<16x128xf32>
    %62 = arith.maximumf %60, %61 : vector<16x128xf32>
    %63 = arith.addf %38, %62 : vector<16x128xf32>
    %c16_70 = arith.constant 16 : index
    %c0_71 = arith.constant 0 : index
    %64 = vector.load %arg26[%c16_70, %c0_71] : memref<48x128xf32, #tpu.memory_space<vmem>>, vector<16x128xf32>
    tpu.vector_store %arg26[%c16_70, %c0_71], %63 {strides = array<i32>} : memref<48x128xf32, #tpu.memory_space<vmem>>, vector<16x128xf32>,
    %c15_72 = arith.constant 15 : index
    %c0_73 = arith.constant 0 : index
    %65 = vector.load %arg26[%c15_72, %c0_73] : memref<48x128xf32, #tpu.memory_space<vmem>>, vector<16x128xf32>
    %c16_74 = arith.constant 16 : index
    %c0_75 = arith.constant 0 : index
    %66 = vector.load %arg26[%c16_74, %c0_75] : memref<48x128xf32, #tpu.memory_space<vmem>>, vector<16x128xf32>
    %c17_76 = arith.constant 17 : index
    %c0_77 = arith.constant 0 : index
    %67 = vector.load %arg26[%c17_76, %c0_77] : memref<48x128xf32, #tpu.memory_space<vmem>>, vector<16x128xf32>
    %68 = tpu.concatenate %65, %66, %67 in 1 : vector<16x128xf32>, vector<16x128xf32>, vector<16x128xf32> -> vector<16x384xf32>
    %c0_78 = arith.constant 0 : index
    %c0_79 = arith.constant 0 : index
    %69 = vector.load %arg11[%c0_78, %c0_79] : memref<384x128xf32, #tpu.memory_space<vmem>>, vector<384x128xf32>
    %cst_80 = arith.constant dense<0.000000e+00> : vector<16x128xf32>
    %70 = tpu.matmul %68, %69, %cst_80 {dimension_numbers = #tpu.dot_dimension_numbers<[1], [0], [0], [1], [0, 0, 1, 1], [], []>} : vector<16x384xf32>, vector<384x128xf32>, vector<16x128xf32> -> vector<16x128xf32>
    %c0_81 = arith.constant 0 : index
    %c0_82 = arith.constant 0 : index
    %71 = vector.load %arg12[%c0_81, %c0_82] : memref<1x128xf32, #tpu.memory_space<vmem>>, vector<1x128xf32>
    %72 = vector.broadcast %71 : vector<1x128xf32> to vector<16x128xf32>
    %73 = arith.addf %70, %72 : vector<16x128xf32>
    %cst_83 = arith.constant 0.000000e+00 : f32
    %74 = vector.broadcast %cst_83 : f32 to vector<16x128xf32>
    %75 = arith.maximumf %73, %74 : vector<16x128xf32>
    %c16_84 = arith.constant 16 : index
    %c0_85 = arith.constant 0 : index
    %76 = vector.load %arg26[%c16_84, %c0_85] : memref<48x128xf32, #tpu.memory_space<vmem>>, vector<16x128xf32>
    tpu.vector_store %arg26[%c16_84, %c0_85], %75 {strides = array<i32>} : memref<48x128xf32, #tpu.memory_space<vmem>>, vector<16x128xf32>,
    %c15_86 = arith.constant 15 : index
    %c0_87 = arith.constant 0 : index
    %77 = vector.load %arg26[%c15_86, %c0_87] : memref<48x128xf32, #tpu.memory_space<vmem>>, vector<16x128xf32>
    %c16_88 = arith.constant 16 : index
    %c0_89 = arith.constant 0 : index
    %78 = vector.load %arg26[%c16_88, %c0_89] : memref<48x128xf32, #tpu.memory_space<vmem>>, vector<16x128xf32>
    %c17_90 = arith.constant 17 : index
    %c0_91 = arith.constant 0 : index
    %79 = vector.load %arg26[%c17_90, %c0_91] : memref<48x128xf32, #tpu.memory_space<vmem>>, vector<16x128xf32>
    %80 = tpu.concatenate %77, %78, %79 in 1 : vector<16x128xf32>, vector<16x128xf32>, vector<16x128xf32> -> vector<16x384xf32>
    %c0_92 = arith.constant 0 : index
    %c0_93 = arith.constant 0 : index
    %81 = vector.load %arg13[%c0_92, %c0_93] : memref<384x128xf32, #tpu.memory_space<vmem>>, vector<384x128xf32>
    %cst_94 = arith.constant dense<0.000000e+00> : vector<16x128xf32>
    %82 = tpu.matmul %80, %81, %cst_94 {dimension_numbers = #tpu.dot_dimension_numbers<[1], [0], [0], [1], [0, 0, 1, 1], [], []>} : vector<16x384xf32>, vector<384x128xf32>, vector<16x128xf32> -> vector<16x128xf32>
    %c0_95 = arith.constant 0 : index
    %c0_96 = arith.constant 0 : index
    %83 = vector.load %arg14[%c0_95, %c0_96] : memref<1x128xf32, #tpu.memory_space<vmem>>, vector<1x128xf32>
    %84 = vector.broadcast %83 : vector<1x128xf32> to vector<16x128xf32>
    %85 = arith.addf %82, %84 : vector<16x128xf32>
    %cst_97 = arith.constant 0.000000e+00 : f32
    %86 = vector.broadcast %cst_97 : f32 to vector<16x128xf32>
    %87 = arith.maximumf %85, %86 : vector<16x128xf32>
    %88 = arith.addf %63, %87 : vector<16x128xf32>
    %c0_98 = arith.constant 0 : index
    %c0_99 = arith.constant 0 : index
    %89 = vector.load %arg15[%c0_98, %c0_99] : memref<128x128xf32, #tpu.memory_space<vmem>>, vector<128x128xf32>
    %cst_100 = arith.constant dense<0.000000e+00> : vector<16x128xf32>
    %90 = tpu.matmul %88, %89, %cst_100 {dimension_numbers = #tpu.dot_dimension_numbers<[1], [0], [0], [1], [0, 0, 1, 1], [], []>} : vector<16x128xf32>, vector<128x128xf32>, vector<16x128xf32> -> vector<16x128xf32>
    %c0_101 = arith.constant 0 : index
    %c0_102 = arith.constant 0 : index
    %91 = vector.load %arg16[%c0_101, %c0_102] : memref<1x128xf32, #tpu.memory_space<vmem>>, vector<1x128xf32>
    %92 = vector.broadcast %91 : vector<1x128xf32> to vector<16x128xf32>
    %93 = arith.addf %90, %92 : vector<16x128xf32>
    %cst_103 = arith.constant 0.000000e+00 : f32
    %94 = vector.broadcast %cst_103 : f32 to vector<16x128xf32>
    %95 = arith.maximumf %93, %94 : vector<16x128xf32>
    %c16_104 = arith.constant 16 : index
    %c0_105 = arith.constant 0 : index
    %96 = vector.load %arg26[%c16_104, %c0_105] : memref<48x128xf32, #tpu.memory_space<vmem>>, vector<16x128xf32>
    tpu.vector_store %arg26[%c16_104, %c0_105], %88 {strides = array<i32>} : memref<48x128xf32, #tpu.memory_space<vmem>>, vector<16x128xf32>,
    %c10 = arith.constant 10 : index
    %c0_106 = arith.constant 0 : index
    %97 = vector.load %arg26[%c10, %c0_106] : memref<48x128xf32, #tpu.memory_space<vmem>>, vector<16x128xf32>
    %c16_107 = arith.constant 16 : index
    %c0_108 = arith.constant 0 : index
    %98 = vector.load %arg26[%c16_107, %c0_108] : memref<48x128xf32, #tpu.memory_space<vmem>>, vector<16x128xf32>
    %c22 = arith.constant 22 : index
    %c0_109 = arith.constant 0 : index
    %99 = vector.load %arg26[%c22, %c0_109] : memref<48x128xf32, #tpu.memory_space<vmem>>, vector<16x128xf32>
    %100 = tpu.concatenate %97, %98, %99 in 1 : vector<16x128xf32>, vector<16x128xf32>, vector<16x128xf32> -> vector<16x384xf32>
    %c0_110 = arith.constant 0 : index
    %c0_111 = arith.constant 0 : index
    %101 = vector.load %arg17[%c0_110, %c0_111] : memref<384x128xf32, #tpu.memory_space<vmem>>, vector<384x128xf32>
    %cst_112 = arith.constant dense<0.000000e+00> : vector<16x128xf32>
    %102 = tpu.matmul %100, %101, %cst_112 {dimension_numbers = #tpu.dot_dimension_numbers<[1], [0], [0], [1], [0, 0, 1, 1], [], []>} : vector<16x384xf32>, vector<384x128xf32>, vector<16x128xf32> -> vector<16x128xf32>
    %c0_113 = arith.constant 0 : index
    %c0_114 = arith.constant 0 : index
    %103 = vector.load %arg18[%c0_113, %c0_114] : memref<1x128xf32, #tpu.memory_space<vmem>>, vector<1x128xf32>
    %104 = vector.broadcast %103 : vector<1x128xf32> to vector<16x128xf32>
    %105 = arith.addf %102, %104 : vector<16x128xf32>
    %cst_115 = arith.constant 0.000000e+00 : f32
    %106 = vector.broadcast %cst_115 : f32 to vector<16x128xf32>
    %107 = arith.maximumf %105, %106 : vector<16x128xf32>
    %c4 = arith.constant 4 : index
    %c0_116 = arith.constant 0 : index
    %108 = vector.load %arg26[%c4, %c0_116] : memref<48x128xf32, #tpu.memory_space<vmem>>, vector<16x128xf32>
    %c16_117 = arith.constant 16 : index
    %c0_118 = arith.constant 0 : index
    %109 = vector.load %arg26[%c16_117, %c0_118] : memref<48x128xf32, #tpu.memory_space<vmem>>, vector<16x128xf32>
    %c28 = arith.constant 28 : index
    %c0_119 = arith.constant 0 : index
    %110 = vector.load %arg26[%c28, %c0_119] : memref<48x128xf32, #tpu.memory_space<vmem>>, vector<16x128xf32>
    %111 = tpu.concatenate %108, %109, %110 in 1 : vector<16x128xf32>, vector<16x128xf32>, vector<16x128xf32> -> vector<16x384xf32>
    %c0_120 = arith.constant 0 : index
    %c0_121 = arith.constant 0 : index
    %112 = vector.load %arg19[%c0_120, %c0_121] : memref<384x128xf32, #tpu.memory_space<vmem>>, vector<384x128xf32>
    %cst_122 = arith.constant dense<0.000000e+00> : vector<16x128xf32>
    %113 = tpu.matmul %111, %112, %cst_122 {dimension_numbers = #tpu.dot_dimension_numbers<[1], [0], [0], [1], [0, 0, 1, 1], [], []>} : vector<16x384xf32>, vector<384x128xf32>, vector<16x128xf32> -> vector<16x128xf32>
    %c0_123 = arith.constant 0 : index
    %c0_124 = arith.constant 0 : index
    %114 = vector.load %arg20[%c0_123, %c0_124] : memref<1x128xf32, #tpu.memory_space<vmem>>, vector<1x128xf32>
    %115 = vector.broadcast %114 : vector<1x128xf32> to vector<16x128xf32>
    %116 = arith.addf %113, %115 : vector<16x128xf32>
    %cst_125 = arith.constant 0.000000e+00 : f32
    %117 = vector.broadcast %cst_125 : f32 to vector<16x128xf32>
    %118 = arith.maximumf %116, %117 : vector<16x128xf32>
    %c16_126 = arith.constant 16 : index
    %c0_127 = arith.constant 0 : index
    %119 = vector.load %arg26[%c16_126, %c0_127] : memref<48x128xf32, #tpu.memory_space<vmem>>, vector<16x128xf32>
    %c0_128 = arith.constant 0 : index
    %c0_129 = arith.constant 0 : index
    %120 = vector.load %arg21[%c0_128, %c0_129] : memref<128x128xf32, #tpu.memory_space<vmem>>, vector<128x128xf32>
    %cst_130 = arith.constant dense<0.000000e+00> : vector<16x128xf32>
    %121 = tpu.matmul %119, %120, %cst_130 {dimension_numbers = #tpu.dot_dimension_numbers<[1], [0], [0], [1], [0, 0, 1, 1], [], []>} : vector<16x128xf32>, vector<128x128xf32>, vector<16x128xf32> -> vector<16x128xf32>
    %c0_131 = arith.constant 0 : index
    %c0_132 = arith.constant 0 : index
    %122 = vector.load %arg22[%c0_131, %c0_132] : memref<1x128xf32, #tpu.memory_space<vmem>>, vector<1x128xf32>
    %123 = vector.broadcast %122 : vector<1x128xf32> to vector<16x128xf32>
    %124 = arith.addf %121, %123 : vector<16x128xf32>
    %cst_133 = arith.constant 0.000000e+00 : f32
    %125 = vector.broadcast %cst_133 : f32 to vector<16x128xf32>
    %126 = arith.maximumf %124, %125 : vector<16x128xf32>
    %127 = tpu.concatenate %7, %95, %107, %118, %126 in 1 : vector<16x128xf32>, vector<16x128xf32>, vector<16x128xf32>, vector<16x128xf32>, vector<16x128xf32> -> vector<16x640xf32>
    %c0_134 = arith.constant 0 : index
    %c0_135 = arith.constant 0 : index
    %128 = vector.load %arg23[%c0_134, %c0_135] : memref<640x128xf32, #tpu.memory_space<vmem>>, vector<640x128xf32>
    %cst_136 = arith.constant dense<0.000000e+00> : vector<16x128xf32>
    %129 = tpu.matmul %127, %128, %cst_136 {dimension_numbers = #tpu.dot_dimension_numbers<[1], [0], [0], [1], [0, 0, 1, 1], [], []>} : vector<16x640xf32>, vector<640x128xf32>, vector<16x128xf32> -> vector<16x128xf32>
    %c0_137 = arith.constant 0 : index
    %c0_138 = arith.constant 0 : index
    %130 = vector.load %arg24[%c0_137, %c0_138] : memref<1x128xf32, #tpu.memory_space<vmem>>, vector<1x128xf32>
    %131 = vector.broadcast %130 : vector<1x128xf32> to vector<16x128xf32>
    %132 = arith.addf %129, %131 : vector<16x128xf32>
    %cst_139 = arith.constant 0.000000e+00 : f32
    %133 = vector.broadcast %cst_139 : f32 to vector<16x128xf32>
    %134 = arith.maximumf %132, %133 : vector<16x128xf32>
    %c0_140 = arith.constant 0 : index
    %c0_141 = arith.constant 0 : index
    %c0_142 = arith.constant 0 : index
    %135 = vector.load %arg25[%c0_140, %c0_141, %c0_142] : memref<1x16x128xf32, #tpu.memory_space<vmem>>, vector<1x16x128xf32>
    %136 = vector.shape_cast %135 : vector<1x16x128xf32> to vector<16x128xf32>
    %137 = vector.shape_cast %134 : vector<16x128xf32> to vector<1x16x128xf32>
    tpu.vector_store %arg25[%c0_140, %c0_141, %c0_142], %137 {strides = array<i32>} : memref<1x16x128xf32, #tpu.memory_space<vmem>>, vector<1x16x128xf32>,
    return
  }
  func.func @transform_0(%arg0: i32) -> (i32, i32, i32) {
    %c0_i32 = arith.constant 0 : i32
    %c0_i32_0 = arith.constant 0 : i32
    %c0_i32_1 = arith.constant 0 : i32
    return %arg0, %c0_i32, %c0_i32_0 : i32, i32, i32
  }
  func.func @transform_1(%arg0: i32) -> (i32, i32, i32) {
    %c0_i32 = arith.constant 0 : i32
    %c0_i32_0 = arith.constant 0 : i32
    %c0_i32_1 = arith.constant 0 : i32
    return %arg0, %c0_i32, %c0_i32_0 : i32, i32, i32
  }
  func.func @transform_2(%arg0: i32) -> (i32, i32) {
    %c0_i32 = arith.constant 0 : i32
    %c0_i32_0 = arith.constant 0 : i32
    %c0_i32_1 = arith.constant 0 : i32
    return %c0_i32, %c0_i32_0 : i32, i32
  }
  func.func @transform_3(%arg0: i32) -> (i32, i32) {
    %c0_i32 = arith.constant 0 : i32
    %c0_i32_0 = arith.constant 0 : i32
    %c0_i32_1 = arith.constant 0 : i32
    return %c0_i32, %c0_i32_0 : i32, i32
  }
  func.func @transform_4(%arg0: i32) -> (i32, i32) {
    %c0_i32 = arith.constant 0 : i32
    %c0_i32_0 = arith.constant 0 : i32
    %c0_i32_1 = arith.constant 0 : i32
    return %c0_i32, %c0_i32_0 : i32, i32
  }
  func.func @transform_5(%arg0: i32) -> (i32, i32) {
    %c0_i32 = arith.constant 0 : i32
    %c0_i32_0 = arith.constant 0 : i32
    %c0_i32_1 = arith.constant 0 : i32
    return %c0_i32, %c0_i32_0 : i32, i32
  }
  func.func @transform_6(%arg0: i32) -> (i32, i32) {
    %c0_i32 = arith.constant 0 : i32
    %c0_i32_0 = arith.constant 0 : i32
    %c0_i32_1 = arith.constant 0 : i32
    return %c0_i32, %c0_i32_0 : i32, i32
  }
  func.func @transform_7(%arg0: i32) -> (i32, i32) {
    %c0_i32 = arith.constant 0 : i32
    %c0_i32_0 = arith.constant 0 : i32
    %c0_i32_1 = arith.constant 0 : i32
    return %c0_i32, %c0_i32_0 : i32, i32
  }
  func.func @transform_8(%arg0: i32) -> (i32, i32) {
    %c0_i32 = arith.constant 0 : i32
    %c0_i32_0 = arith.constant 0 : i32
    %c0_i32_1 = arith.constant 0 : i32
    return %c0_i32, %c0_i32_0 : i32, i32
  }
  func.func @transform_9(%arg0: i32) -> (i32, i32) {
    %c0_i32 = arith.constant 0 : i32
    %c0_i32_0 = arith.constant 0 : i32
    %c0_i32_1 = arith.constant 0 : i32
    return %c0_i32, %c0_i32_0 : i32, i32
  }
  func.func @transform_10(%arg0: i32) -> (i32, i32) {
    %c0_i32 = arith.constant 0 : i32
    %c0_i32_0 = arith.constant 0 : i32
    %c0_i32_1 = arith.constant 0 : i32
    return %c0_i32, %c0_i32_0 : i32, i32
  }
  func.func @transform_11(%arg0: i32) -> (i32, i32) {
    %c0_i32 = arith.constant 0 : i32
    %c0_i32_0 = arith.constant 0 : i32
    %c0_i32_1 = arith.constant 0 : i32
    return %c0_i32, %c0_i32_0 : i32, i32
  }
  func.func @transform_12(%arg0: i32) -> (i32, i32) {
    %c0_i32 = arith.constant 0 : i32
    %c0_i32_0 = arith.constant 0 : i32
    %c0_i32_1 = arith.constant 0 : i32
    return %c0_i32, %c0_i32_0 : i32, i32
  }
  func.func @transform_13(%arg0: i32) -> (i32, i32) {
    %c0_i32 = arith.constant 0 : i32
    %c0_i32_0 = arith.constant 0 : i32
    %c0_i32_1 = arith.constant 0 : i32
    return %c0_i32, %c0_i32_0 : i32, i32
  }
  func.func @transform_14(%arg0: i32) -> (i32, i32) {
    %c0_i32 = arith.constant 0 : i32
    %c0_i32_0 = arith.constant 0 : i32
    %c0_i32_1 = arith.constant 0 : i32
    return %c0_i32, %c0_i32_0 : i32, i32
  }
  func.func @transform_15(%arg0: i32) -> (i32, i32) {
    %c0_i32 = arith.constant 0 : i32
    %c0_i32_0 = arith.constant 0 : i32
    %c0_i32_1 = arith.constant 0 : i32
    return %c0_i32, %c0_i32_0 : i32, i32
  }
  func.func @transform_16(%arg0: i32) -> (i32, i32) {
    %c0_i32 = arith.constant 0 : i32
    %c0_i32_0 = arith.constant 0 : i32
    %c0_i32_1 = arith.constant 0 : i32
    return %c0_i32, %c0_i32_0 : i32, i32
  }
  func.func @transform_17(%arg0: i32) -> (i32, i32) {
    %c0_i32 = arith.constant 0 : i32
    %c0_i32_0 = arith.constant 0 : i32
    %c0_i32_1 = arith.constant 0 : i32
    return %c0_i32, %c0_i32_0 : i32, i32
  }
  func.func @transform_18(%arg0: i32) -> (i32, i32) {
    %c0_i32 = arith.constant 0 : i32
    %c0_i32_0 = arith.constant 0 : i32
    %c0_i32_1 = arith.constant 0 : i32
    return %c0_i32, %c0_i32_0 : i32, i32
  }
  func.func @transform_19(%arg0: i32) -> (i32, i32) {
    %c0_i32 = arith.constant 0 : i32
    %c0_i32_0 = arith.constant 0 : i32
    %c0_i32_1 = arith.constant 0 : i32
    return %c0_i32, %c0_i32_0 : i32, i32
  }
  func.func @transform_20(%arg0: i32) -> (i32, i32) {
    %c0_i32 = arith.constant 0 : i32
    %c0_i32_0 = arith.constant 0 : i32
    %c0_i32_1 = arith.constant 0 : i32
    return %c0_i32, %c0_i32_0 : i32, i32
  }
  func.func @transform_21(%arg0: i32) -> (i32, i32) {
    %c0_i32 = arith.constant 0 : i32
    %c0_i32_0 = arith.constant 0 : i32
    %c0_i32_1 = arith.constant 0 : i32
    return %c0_i32, %c0_i32_0 : i32, i32
  }
  func.func @transform_22(%arg0: i32) -> (i32, i32) {
    %c0_i32 = arith.constant 0 : i32
    %c0_i32_0 = arith.constant 0 : i32
    %c0_i32_1 = arith.constant 0 : i32
    return %c0_i32, %c0_i32_0 : i32, i32
  }
  func.func @transform_23(%arg0: i32) -> (i32, i32) {
    %c0_i32 = arith.constant 0 : i32
    %c0_i32_0 = arith.constant 0 : i32
    %c0_i32_1 = arith.constant 0 : i32
    return %c0_i32, %c0_i32_0 : i32, i32
  }
  func.func @transform_24(%arg0: i32) -> (i32, i32, i32) {
    %c0_i32 = arith.constant 0 : i32
    %c0_i32_0 = arith.constant 0 : i32
    %c0_i32_1 = arith.constant 0 : i32
    return %arg0, %c0_i32, %c0_i32_0 : i32, i32, i32
  }
}

</mosaic_0001>

<llo_original>
// kernel: tile.89
$region0: #{tile.89}
  %s0 = inlined_call_operand.vmem [shape: f32[16,8], index: 0, kind: input, shape index: {}]
  %s1 = inlined_call_operand.vmem [shape: f32[1,128], index: 1, kind: output, shape index: {}]
  $region1: #{tile.89} parent=0
    #allocation0 [shape = 'u8[4096]{0}', space=vmem, size = 0x1000, scoped, tag = 'scoped mem for output reshape']
    %v2 = vld [vmem:[%s0] sm:$0x1]
    %vm3 = vcmask 64512
    %4 = vst.msk [vmem:[#allocation0] sm:$0x1] %vm3, %v2
    %s5 = scalar_lea.vmem %s0, 15
    %v6 = vld [vmem:[%s5] sm:$0x1]
    %7 = vrot.lane.b32.xlu0 %v6, 120
    %v8 = vpop.permute.xlu0 %7
    %vm9 = vcmask 1048512
    %10 = vst.msk [vmem:[#allocation0] sm:$0x1] %vm9, %v8
    %s11 = scalar_lea.vmem %s0, 14
    %v12 = vld [vmem:[%s11] sm:$0x1]
    %13 = vrot.lane.b32.xlu0 %v12, 112
    %v14 = vpop.permute.xlu0 %13
    %vm15 = vcmask 982912
    %16 = vst.msk [vmem:[#allocation0] sm:$0x1] %vm15, %v14
    %s17 = scalar_lea.vmem %s0, 13
    %v18 = vld [vmem:[%s17] sm:$0x1]
    %19 = vrot.lane.b32.xlu0 %v18, 104
    %v20 = vpop.permute.xlu0 %19
    %vm21 = vcmask 917312
    %22 = vst.msk [vmem:[#allocation0] sm:$0x1] %vm21, %v20
    %s23 = scalar_lea.vmem %s0, 12
    %v24 = vld [vmem:[%s23] sm:$0x1]
    %25 = vrot.lane.b32.xlu0 %v24, 96
    %v26 = vpop.permute.xlu0 %25
    %vm27 = vcmask 851712
    %28 = vst.msk [vmem:[#allocation0] sm:$0x1] %vm27, %v26
    %s29 = scalar_lea.vmem %s0, 11
    %v30 = vld [vmem:[%s29] sm:$0x1]
    %31 = vrot.lane.b32.xlu0 %v30, 88
    %v32 = vpop.permute.xlu0 %31
    %vm33 = vcmask 786112
    %34 = vst.msk [vmem:[#allocation0] sm:$0x1] %vm33, %v32
    %s35 = scalar_lea.vmem %s0, 10
    %v36 = vld [vmem:[%s35] sm:$0x1]
    %37 = vrot.lane.b32.xlu0 %v36, 80
    %v38 = vpop.permute.xlu0 %37
    %vm39 = vcmask 720512
    %40 = vst.msk [vmem:[#allocation0] sm:$0x1] %vm39, %v38
    %s41 = scalar_lea.vmem %s0, 9
    %v42 = vld [vmem:[%s41] sm:$0x1]
    %43 = vrot.lane.b32.xlu0 %v42, 72
    %v44 = vpop.permute.xlu0 %43
    %vm45 = vcmask 654912
    %46 = vst.msk [vmem:[#allocation0] sm:$0x1] %vm45, %v44
    %s47 = scalar_lea.vmem %s0, 8
    %v48 = vld [vmem:[%s47] sm:$0x1]
    %49 = vrot.lane.b32.xlu0 %v48, 64
    %v50 = vpop.permute.xlu0 %49
    %vm51 = vcmask 589312
    %52 = vst.msk [vmem:[#allocation0] sm:$0x1] %vm51, %v50
    %s53 = scalar_lea.vmem %s0, 7
    %v54 = vld [vmem:[%s53] sm:$0x1]
    %55 = vrot.lane.b32.xlu0 %v54, 56
    %v56 = vpop.permute.xlu0 %55
    %vm57 = vcmask 523712
    %58 = vst.msk [vmem:[#allocation0] sm:$0x1] %vm57, %v56
    %s59 = scalar_lea.vmem %s0, 6
    %v60 = vld [vmem:[%s59] sm:$0x1]
    %61 = vrot.lane.b32.xlu0 %v60, 48
    %v62 = vpop.permute.xlu0 %61
    %vm63 = vcmask 458112
    %64 = vst.msk [vmem:[#allocation0] sm:$0x1] %vm63, %v62
    %s65 = scalar_lea.vmem %s0, 5
    %v66 = vld [vmem:[%s65] sm:$0x1]
    %67 = vrot.lane.b32.xlu0 %v66, 40
    %v68 = vpop.permute.xlu0 %67
    %vm69 = vcmask 392512
    %70 = vst.msk [vmem:[#allocation0] sm:$0x1] %vm69, %v68
    %s71 = scalar_lea.vmem %s0, 4
    %v72 = vld [vmem:[%s71] sm:$0x1]
    %73 = vrot.lane.b32.xlu0 %v72, 32
    %v74 = vpop.permute.xlu0 %73
    %vm75 = vcmask 326912
    %76 = vst.msk [vmem:[#allocation0] sm:$0x1] %vm75, %v74
    %s77 = scalar_lea.vmem %s0, 3
    %v78 = vld [vmem:[%s77] sm:$0x1]
    %79 = vrot.lane.b32.xlu0 %v78, 24
    %v80 = vpop.permute.xlu0 %79
    %vm81 = vcmask 261312
    %82 = vst.msk [vmem:[#allocation0] sm:$0x1] %vm81, %v80
    %s83 = scalar_lea.vmem %s0, 2
    %v84 = vld [vmem:[%s83] sm:$0x1]
    %85 = vrot.lane.b32.xlu0 %v84, 16
    %v86 = vpop.permute.xlu0 %85
    %vm87 = vcmask 195712
    %88 = vst.msk [vmem:[#allocation0] sm:$0x1] %vm87, %v86
    %s89 = scalar_lea.vmem %s0, 1
    %v90 = vld [vmem:[%s89] sm:$0x1]
    %91 = vrot.lane.b32.xlu0 %v90, 8
    %v92 = vpop.permute.xlu0 %91
    %vm93 = vcmask 130112
    %94 = vst.msk [vmem:[#allocation0] sm:$0x1] %vm93, %v92
    %s96 = sshll.u32 1, 1
    %s97 = ssub.s32 %s96, 1
    %v99 = vld [vmem:[#allocation0] sm:%s97]
    %s100 = sshll.u32 1, 1
    %s101 = ssub.s32 %s100, 1
    %102 = vst [vmem:[%s1] sm:%s101] %v99

// kernel: tile.88
$region0: #{tile.88}
  #allocation0 [shape = 's32[1]{0}', space=sflag, size = 0x4, scoped, tag = 'scoped memory for tile.88']
  %s0 = inlined_call_operand.vmem [shape: f32[8], index: 0, kind: input, shape index: {}]
  %s1 = inlined_call_operand.vmem [shape: f32[16,8], index: 1, kind: output, shape index: {}]
  // Predicated region
  $region2: #{tile.88} parent=0 // pred_check
    _
  $region3: #{tile.88} parent=0 // pred_check_branch
    %3 = sbr.rel (0) target = $region5
  $region4: #{tile.88} parent=0 // pred_region
    _
  $region5: #{tile.88} parent=0 // pred_fallthru
    _
  %v4 = vld [vmem:[%s0] ss:$0 sm:$0xff]
  %5 = vst [vmem:[%s1] sm:$0xff] %v4
  %s6 = scalar_lea.vmem %s1, 8
  %7 = vst [vmem:[%s6] sm:$0xff] %v4

// kernel: iterative_optimization_forward.1
$region0: #{iterative_optimization_forward.1}
  #allocation0 [shape = 'u32[]', space=smem, size = 0x4, offset = 0x4, fixed_abs, tag = 'smem constant byte address 0x4 - core index']
  #allocation1 [shape = 'u32[144,128]{1,0:T(1,128)}', space=vmem, size = 0x12000, scoped, tag = 'internal scratch']
  #allocation2 [shape = 'f32[48,128]{1,0:T(8,128)}', space=vmem, size = 0x6000, scoped, tag = 'scratch operand']
  %s0 = inlined_call_operand.vmem [shape: f32[2,16,128], index: 0, kind: input, shape index: {}]
  %s1 = inlined_call_operand.vmem [shape: f32[2,16,128], index: 1, kind: input, shape index: {}]
  %s2 = inlined_call_operand.vmem [shape: f32[768,128], index: 2, kind: input, shape index: {}]
  %s3 = inlined_call_operand.vmem [shape: f32[1,128], index: 3, kind: input, shape index: {}]
  %s4 = inlined_call_operand.vmem [shape: f32[384,128], index: 4, kind: input, shape index: {}]
  %s5 = inlined_call_operand.vmem [shape: f32[1,128], index: 5, kind: input, shape index: {}]
  %s6 = inlined_call_operand.vmem [shape: f32[384,128], index: 6, kind: input, shape index: {}]
  %s7 = inlined_call_operand.vmem [shape: f32[1,128], index: 7, kind: input, shape index: {}]
  %s8 = inlined_call_operand.vmem [shape: f32[384,128], index: 8, kind: input, shape index: {}]
  %s9 = inlined_call_operand.vmem [shape: f32[1,128], index: 9, kind: input, shape index: {}]
  %s10 = inlined_call_operand.vmem [shape: f32[384,128], index: 10, kind: input, shape index: {}]
  %s11 = inlined_call_operand.vmem [shape: f32[1,128], index: 11, kind: input, shape index: {}]
  %s12 = inlined_call_operand.vmem [shape: f32[384,128], index: 12, kind: input, shape index: {}]
  %s13 = inlined_call_operand.vmem [shape: f32[1,128], index: 13, kind: input, shape index: {}]
  %s14 = inlined_call_operand.vmem [shape: f32[128,128], index: 14, kind: input, shape index: {}]
  %s15 = inlined_call_operand.vmem [shape: f32[1,128], index: 15, kind: input, shape index: {}]
  %s16 = inlined_call_operand.vmem [shape: f32[384,128], index: 16, kind: input, shape index: {}]
  %s17 = inlined_call_operand.vmem [shape: f32[1,128], index: 17, kind: input, shape index: {}]
  %s18 = inlined_call_operand.vmem [shape: f32[384,128], index: 18, kind: input, shape index: {}]
  %s19 = inlined_call_operand.vmem [shape: f32[1,128], index: 19, kind: input, shape index: {}]
  %s20 = inlined_call_operand.vmem [shape: f32[128,128], index: 20, kind: input, shape index: {}]
  %s21 = inlined_call_operand.vmem [shape: f32[1,128], index: 21, kind: input, shape index: {}]
  %s22 = inlined_call_operand.vmem [shape: f32[640,128], index: 22, kind: input, shape index: {}]
  %s23 = inlined_call_operand.vmem [shape: f32[1,128], index: 23, kind: input, shape index: {}]
  %s24 = inlined_call_operand.vmem [shape: f32[2,16,128], index: 24, kind: output, shape index: {}]
  %s25 = sld [smem:[#allocation0]]
  $region129: #{iterative_optimization_forward.1} parent=0
    _
  %s27 = ssub.s32 1, %s25
  %s28 = scalar_select 0, %s27, %s25
  loop: start=0, step=1, limit=4
  $region2: #{iterative_optimization_forward.1} parent=0 // loop_pre_header
    _
  $region3: #{iterative_optimization_forward.1} parent=0 // loop_header
    %s30 = sphi 0, %s34
    %p31 = scmp.ge.s32.totalorder %s30, 4
    %s40 = sphi 0, %s42
    %s43 = sphi 0, %s40
    %s44 = sphi 0, %s43
    %s60 = sphi 0, %s44
    %s66 = sphi 0, %s68
    %s69 = sphi 0, %s66
    %s70 = sphi 0, %s69
    %s86 = sphi 0, %s70
    %s90 = sphi 0, %s90
    %s92 = sphi 0, %s90
    %s93 = sphi 0, %s92
    %s107 = sphi 0, %s93
    %s111 = sphi 0, %s111
    %s113 = sphi 0, %s111
    %s114 = sphi 0, %s113
    %s128 = sphi 0, %s114
    %s132 = sphi 0, %s132
    %s134 = sphi 0, %s132
    %s135 = sphi 0, %s134
    %s149 = sphi 0, %s135
    %s153 = sphi 0, %s153
    %s155 = sphi 0, %s153
    %s156 = sphi 0, %s155
    %s170 = sphi 0, %s156
    %s174 = sphi 0, %s174
    %s176 = sphi 0, %s174
    %s177 = sphi 0, %s176
    %s191 = sphi 0, %s177
    %s195 = sphi 0, %s195
    %s197 = sphi 0, %s195
    %s198 = sphi 0, %s197
    %s212 = sphi 0, %s198
    %s216 = sphi 0, %s216
    %s218 = sphi 0, %s216
    %s219 = sphi 0, %s218
    %s233 = sphi 0, %s219
    %s237 = sphi 0, %s237
    %s239 = sphi 0, %s237
    %s240 = sphi 0, %s239
    %s254 = sphi 0, %s240
    %s258 = sphi 0, %s258
    %s260 = sphi 0, %s258
    %s261 = sphi 0, %s260
    %s275 = sphi 0, %s261
    %s279 = sphi 0, %s279
    %s281 = sphi 0, %s279
    %s282 = sphi 0, %s281
    %s296 = sphi 0, %s282
    %s300 = sphi 0, %s300
    %s302 = sphi 0, %s300
    %s303 = sphi 0, %s302
    %s317 = sphi 0, %s303
    %s321 = sphi 0, %s321
    %s323 = sphi 0, %s321
    %s324 = sphi 0, %s323
    %s338 = sphi 0, %s324
    %s342 = sphi 0, %s342
    %s344 = sphi 0, %s342
    %s345 = sphi 0, %s344
    %s359 = sphi 0, %s345
    %s363 = sphi 0, %s363
    %s365 = sphi 0, %s363
    %s366 = sphi 0, %s365
    %s380 = sphi 0, %s366
    %s384 = sphi 0, %s384
    %s386 = sphi 0, %s384
    %s387 = sphi 0, %s386
    %s401 = sphi 0, %s387
    %s405 = sphi 0, %s405
    %s407 = sphi 0, %s405
    %s408 = sphi 0, %s407
    %s422 = sphi 0, %s408
    %s426 = sphi 0, %s426
    %s428 = sphi 0, %s426
    %s429 = sphi 0, %s428
    %s443 = sphi 0, %s429
    %s447 = sphi 0, %s447
    %s449 = sphi 0, %s447
    %s450 = sphi 0, %s449
    %s464 = sphi 0, %s450
    %s468 = sphi 0, %s468
    %s470 = sphi 0, %s468
    %s471 = sphi 0, %s470
    %s485 = sphi 0, %s471
    %s489 = sphi 0, %s489
    %s491 = sphi 0, %s489
    %s492 = sphi 0, %s491
    %s506 = sphi 0, %s492
    %s510 = sphi 0, %s510
    %s512 = sphi 0, %s510
    %s513 = sphi 0, %s512
    %s527 = sphi 0, %s513
    %s531 = sphi 0, %s531
    %s533 = sphi 0, %s531
    %s534 = sphi 0, %s533
    %s548 = sphi 0, %s534
    %s554 = sphi 0, %s556
    %s557 = sphi 0, %s554
    %s558 = sphi 0, %s557
    %s574 = sphi 0, %s558
  $region4: #{iterative_optimization_forward.1} parent=0 // loop_header_branch
    %33 = sbr.rel (%p31) target = $region8
  $region5: #{iterative_optimization_forward.1} parent=0 // loop_body
    %s35 = ssub.s32 %s30, 1
    %s36 = ssub.s32 %s30, 2
    %s37 = sadd.s32 %s30, 1
    %s38 = ssub.s32 %s30, %s37
    %p39 = scmp.eq.s32.totalorder %s38, 0
    %s41 = sadd.s32 %s40, 1
    %s42 = scalar_select %p39, %s40, %s41
    %p45 = pneg %p39
    %p46 = scmp.eq.s32.totalorder %s30, 1
    %p47 = por %p45, %p46
    %p48 = scmp.ne.s32.totalorder %s40, %s43
    %p49 = scmp.eq.s32.totalorder %s30, 0
    %p50 = por %p48, %p49
    %p51 = scmp.ne.s32.totalorder %s40, %s43
    %p52 = scmp.eq.s32.totalorder %s35, 1
    %p53 = por %p51, %p52
    %p54 = scmp.ne.s32.totalorder %s43, %s44
    %p55 = scmp.eq.s32.totalorder %s35, 0
    %p56 = por %p54, %p55
    %p57 = scmp.ne.s32.totalorder %s43, %s44
    %p58 = scmp.eq.s32.totalorder %s36, 1
    %p59 = por %p57, %p58
    %p61 = scmp.ne.s32.totalorder %s44, %s60
    %p62 = scmp.eq.s32.totalorder %s36, 0
    %p63 = por %p61, %p62
    %s64 = ssub.s32 %s30, %s37
    %p65 = scmp.eq.s32.totalorder %s64, 0
    %s67 = sadd.s32 %s66, 1
    %s68 = scalar_select %p65, %s66, %s67
    %p71 = pneg %p65
    %p72 = scmp.eq.s32.totalorder %s30, 1
    %p73 = por %p71, %p72
    %p74 = scmp.ne.s32.totalorder %s66, %s69
    %p75 = scmp.eq.s32.totalorder %s30, 0
    %p76 = por %p74, %p75
    %p77 = scmp.ne.s32.totalorder %s66, %s69
    %p78 = scmp.eq.s32.totalorder %s35, 1
    %p79 = por %p77, %p78
    %p80 = scmp.ne.s32.totalorder %s69, %s70
    %p81 = scmp.eq.s32.totalorder %s35, 0
    %p82 = por %p80, %p81
    %p83 = scmp.ne.s32.totalorder %s69, %s70
    %p84 = scmp.eq.s32.totalorder %s36, 1
    %p85 = por %p83, %p84
    %p87 = scmp.ne.s32.totalorder %s70, %s86
    %p88 = scmp.eq.s32.totalorder %s36, 0
    %p89 = por %p87, %p88
    %s91 = sadd.s32 %s90, 1
    %p94 = scmp.eq.s32.totalorder %s30, 1
    %p95 = scmp.ne.s32.totalorder %s90, %s92
    %p96 = scmp.eq.s32.totalorder %s30, 0
    %p97 = por %p95, %p96
    %p98 = scmp.ne.s32.totalorder %s90, %s92
    %p99 = scmp.eq.s32.totalorder %s35, 1
    %p100 = por %p98, %p99
    %p101 = scmp.ne.s32.totalorder %s92, %s93
    %p102 = scmp.eq.s32.totalorder %s35, 0
    %p103 = por %p101, %p102
    %p104 = scmp.ne.s32.totalorder %s92, %s93
    %p105 = scmp.eq.s32.totalorder %s36, 1
    %p106 = por %p104, %p105
    %p108 = scmp.ne.s32.totalorder %s93, %s107
    %p109 = scmp.eq.s32.totalorder %s36, 0
    %p110 = por %p108, %p109
    %s112 = sadd.s32 %s111, 1
    %p115 = scmp.eq.s32.totalorder %s30, 1
    %p116 = scmp.ne.s32.totalorder %s111, %s113
    %p117 = scmp.eq.s32.totalorder %s30, 0
    %p118 = por %p116, %p117
    %p119 = scmp.ne.s32.totalorder %s111, %s113
    %p120 = scmp.eq.s32.totalorder %s35, 1
    %p121 = por %p119, %p120
    %p122 = scmp.ne.s32.totalorder %s113, %s114
    %p123 = scmp.eq.s32.totalorder %s35, 0
    %p124 = por %p122, %p123
    %p125 = scmp.ne.s32.totalorder %s113, %s114
    %p126 = scmp.eq.s32.totalorder %s36, 1
    %p127 = por %p125, %p126
    %p129 = scmp.ne.s32.totalorder %s114, %s128
    %p130 = scmp.eq.s32.totalorder %s36, 0
    %p131 = por %p129, %p130
    %s133 = sadd.s32 %s132, 1
    %p136 = scmp.eq.s32.totalorder %s30, 1
    %p137 = scmp.ne.s32.totalorder %s132, %s134
    %p138 = scmp.eq.s32.totalorder %s30, 0
    %p139 = por %p137, %p138
    %p140 = scmp.ne.s32.totalorder %s132, %s134
    %p141 = scmp.eq.s32.totalorder %s35, 1
    %p142 = por %p140, %p141
    %p143 = scmp.ne.s32.totalorder %s134, %s135
    %p144 = scmp.eq.s32.totalorder %s35, 0
    %p145 = por %p143, %p144
    %p146 = scmp.ne.s32.totalorder %s134, %s135
    %p147 = scmp.eq.s32.totalorder %s36, 1
    %p148 = por %p146, %p147
    %p150 = scmp.ne.s32.totalorder %s135, %s149
    %p151 = scmp.eq.s32.totalorder %s36, 0
    %p152 = por %p150, %p151
    %s154 = sadd.s32 %s153, 1
    %p157 = scmp.eq.s32.totalorder %s30, 1
    %p158 = scmp.ne.s32.totalorder %s153, %s155
    %p159 = scmp.eq.s32.totalorder %s30, 0
    %p160 = por %p158, %p159
    %p161 = scmp.ne.s32.totalorder %s153, %s155
    %p162 = scmp.eq.s32.totalorder %s35, 1
    %p163 = por %p161, %p162
    %p164 = scmp.ne.s32.totalorder %s155, %s156
    %p165 = scmp.eq.s32.totalorder %s35, 0
    %p166 = por %p164, %p165
    %p167 = scmp.ne.s32.totalorder %s155, %s156
    %p168 = scmp.eq.s32.totalorder %s36, 1
    %p169 = por %p167, %p168
    %p171 = scmp.ne.s32.totalorder %s156, %s170
    %p172 = scmp.eq.s32.totalorder %s36, 0
    %p173 = por %p171, %p172
    %s175 = sadd.s32 %s174, 1
    %p178 = scmp.eq.s32.totalorder %s30, 1
    %p179 = scmp.ne.s32.totalorder %s174, %s176
    %p180 = scmp.eq.s32.totalorder %s30, 0
    %p181 = por %p179, %p180
    %p182 = scmp.ne.s32.totalorder %s174, %s176
    %p183 = scmp.eq.s32.totalorder %s35, 1
    %p184 = por %p182, %p183
    %p185 = scmp.ne.s32.totalorder %s176, %s177
    %p186 = scmp.eq.s32.totalorder %s35, 0
    %p187 = por %p185, %p186
    %p188 = scmp.ne.s32.totalorder %s176, %s177
    %p189 = scmp.eq.s32.totalorder %s36, 1
    %p190 = por %p188, %p189
    %p192 = scmp.ne.s32.totalorder %s177, %s191
    %p193 = scmp.eq.s32.totalorder %s36, 0
    %p194 = por %p192, %p193
    %s196 = sadd.s32 %s195, 1
    %p199 = scmp.eq.s32.totalorder %s30, 1
    %p200 = scmp.ne.s32.totalorder %s195, %s197
    %p201 = scmp.eq.s32.totalorder %s30, 0
    %p202 = por %p200, %p201
    %p203 = scmp.ne.s32.totalorder %s195, %s197
    %p204 = scmp.eq.s32.totalorder %s35, 1
    %p205 = por %p203, %p204
    %p206 = scmp.ne.s32.totalorder %s197, %s198
    %p207 = scmp.eq.s32.totalorder %s35, 0
    %p208 = por %p206, %p207
    %p209 = scmp.ne.s32.totalorder %s197, %s198
    %p210 = scmp.eq.s32.totalorder %s36, 1
    %p211 = por %p209, %p210
    %p213 = scmp.ne.s32.totalorder %s198, %s212
    %p214 = scmp.eq.s32.totalorder %s36, 0
    %p215 = por %p213, %p214
    %s217 = sadd.s32 %s216, 1
    %p220 = scmp.eq.s32.totalorder %s30, 1
    %p221 = scmp.ne.s32.totalorder %s216, %s218
    %p222 = scmp.eq.s32.totalorder %s30, 0
    %p223 = por %p221, %p222
    %p224 = scmp.ne.s32.totalorder %s216, %s218
    %p225 = scmp.eq.s32.totalorder %s35, 1
    %p226 = por %p224, %p225
    %p227 = scmp.ne.s32.totalorder %s218, %s219
    %p228 = scmp.eq.s32.totalorder %s35, 0
    %p229 = por %p227, %p228
    %p230 = scmp.ne.s32.totalorder %s218, %s219
    %p231 = scmp.eq.s32.totalorder %s36, 1
    %p232 = por %p230, %p231
    %p234 = scmp.ne.s32.totalorder %s219, %s233
    %p235 = scmp.eq.s32.totalorder %s36, 0
    %p236 = por %p234, %p235
    %s238 = sadd.s32 %s237, 1
    %p241 = scmp.eq.s32.totalorder %s30, 1
    %p242 = scmp.ne.s32.totalorder %s237, %s239
    %p243 = scmp.eq.s32.totalorder %s30, 0
    %p244 = por %p242, %p243
    %p245 = scmp.ne.s32.totalorder %s237, %s239
    %p246 = scmp.eq.s32.totalorder %s35, 1
    %p247 = por %p245, %p246
    %p248 = scmp.ne.s32.totalorder %s239, %s240
    %p249 = scmp.eq.s32.totalorder %s35, 0
    %p250 = por %p248, %p249
    %p251 = scmp.ne.s32.totalorder %s239, %s240
    %p252 = scmp.eq.s32.totalorder %s36, 1
    %p253 = por %p251, %p252
    %p255 = scmp.ne.s32.totalorder %s240, %s254
    %p256 = scmp.eq.s32.totalorder %s36, 0
    %p257 = por %p255, %p256
    %s259 = sadd.s32 %s258, 1
    %p262 = scmp.eq.s32.totalorder %s30, 1
    %p263 = scmp.ne.s32.totalorder %s258, %s260
    %p264 = scmp.eq.s32.totalorder %s30, 0
    %p265 = por %p263, %p264
    %p266 = scmp.ne.s32.totalorder %s258, %s260
    %p267 = scmp.eq.s32.totalorder %s35, 1
    %p268 = por %p266, %p267
    %p269 = scmp.ne.s32.totalorder %s260, %s261
    %p270 = scmp.eq.s32.totalorder %s35, 0
    %p271 = por %p269, %p270
    %p272 = scmp.ne.s32.totalorder %s260, %s261
    %p273 = scmp.eq.s32.totalorder %s36, 1
    %p274 = por %p272, %p273
    %p276 = scmp.ne.s32.totalorder %s261, %s275
    %p277 = scmp.eq.s32.totalorder %s36, 0
    %p278 = por %p276, %p277
    %s280 = sadd.s32 %s279, 1
    %p283 = scmp.eq.s32.totalorder %s30, 1
    %p284 = scmp.ne.s32.totalorder %s279, %s281
    %p285 = scmp.eq.s32.totalorder %s30, 0
    %p286 = por %p284, %p285
    %p287 = scmp.ne.s32.totalorder %s279, %s281
    %p288 = scmp.eq.s32.totalorder %s35, 1
    %p289 = por %p287, %p288
    %p290 = scmp.ne.s32.totalorder %s281, %s282
    %p291 = scmp.eq.s32.totalorder %s35, 0
    %p292 = por %p290, %p291
    %p293 = scmp.ne.s32.totalorder %s281, %s282
    %p294 = scmp.eq.s32.totalorder %s36, 1
    %p295 = por %p293, %p294
    %p297 = scmp.ne.s32.totalorder %s282, %s296
    %p298 = scmp.eq.s32.totalorder %s36, 0
    %p299 = por %p297, %p298
    %s301 = sadd.s32 %s300, 1
    %p304 = scmp.eq.s32.totalorder %s30, 1
    %p305 = scmp.ne.s32.totalorder %s300, %s302
    %p306 = scmp.eq.s32.totalorder %s30, 0
    %p307 = por %p305, %p306
    %p308 = scmp.ne.s32.totalorder %s300, %s302
    %p309 = scmp.eq.s32.totalorder %s35, 1
    %p310 = por %p308, %p309
    %p311 = scmp.ne.s32.totalorder %s302, %s303
    %p312 = scmp.eq.s32.totalorder %s35, 0
    %p313 = por %p311, %p312
    %p314 = scmp.ne.s32.totalorder %s302, %s303
    %p315 = scmp.eq.s32.totalorder %s36, 1
    %p316 = por %p314, %p315
    %p318 = scmp.ne.s32.totalorder %s303, %s317
    %p319 = scmp.eq.s32.totalorder %s36, 0
    %p320 = por %p318, %p319
    %s322 = sadd.s32 %s321, 1
    %p325 = scmp.eq.s32.totalorder %s30, 1
    %p326 = scmp.ne.s32.totalorder %s321, %s323
    %p327 = scmp.eq.s32.totalorder %s30, 0
    %p328 = por %p326, %p327
    %p329 = scmp.ne.s32.totalorder %s321, %s323
    %p330 = scmp.eq.s32.totalorder %s35, 1
    %p331 = por %p329, %p330
    %p332 = scmp.ne.s32.totalorder %s323, %s324
    %p333 = scmp.eq.s32.totalorder %s35, 0
    %p334 = por %p332, %p333
    %p335 = scmp.ne.s32.totalorder %s323, %s324
    %p336 = scmp.eq.s32.totalorder %s36, 1
    %p337 = por %p335, %p336
    %p339 = scmp.ne.s32.totalorder %s324, %s338
    %p340 = scmp.eq.s32.totalorder %s36, 0
    %p341 = por %p339, %p340
    %s343 = sadd.s32 %s342, 1
    %p346 = scmp.eq.s32.totalorder %s30, 1
    %p347 = scmp.ne.s32.totalorder %s342, %s344
    %p348 = scmp.eq.s32.totalorder %s30, 0
    %p349 = por %p347, %p348
    %p350 = scmp.ne.s32.totalorder %s342, %s344
    %p351 = scmp.eq.s32.totalorder %s35, 1
    %p352 = por %p350, %p351
    %p353 = scmp.ne.s32.totalorder %s344, %s345
    %p354 = scmp.eq.s32.totalorder %s35, 0
    %p355 = por %p353, %p354
    %p356 = scmp.ne.s32.totalorder %s344, %s345
    %p357 = scmp.eq.s32.totalorder %s36, 1
    %p358 = por %p356, %p357
    %p360 = scmp.ne.s32.totalorder %s345, %s359
    %p361 = scmp.eq.s32.totalorder %s36, 0
    %p362 = por %p360, %p361
    %s364 = sadd.s32 %s363, 1
    %p367 = scmp.eq.s32.totalorder %s30, 1
    %p368 = scmp.ne.s32.totalorder %s363, %s365
    %p369 = scmp.eq.s32.totalorder %s30, 0
    %p370 = por %p368, %p369
    %p371 = scmp.ne.s32.totalorder %s363, %s365
    %p372 = scmp.eq.s32.totalorder %s35, 1
    %p373 = por %p371, %p372
    %p374 = scmp.ne.s32.totalorder %s365, %s366
    %p375 = scmp.eq.s32.totalorder %s35, 0
    %p376 = por %p374, %p375
    %p377 = scmp.ne.s32.totalorder %s365, %s366
    %p378 = scmp.eq.s32.totalorder %s36, 1
    %p379 = por %p377, %p378
    %p381 = scmp.ne.s32.totalorder %s366, %s380
    %p382 = scmp.eq.s32.totalorder %s36, 0
    %p383 = por %p381, %p382
    %s385 = sadd.s32 %s384, 1
    %p388 = scmp.eq.s32.totalorder %s30, 1
    %p389 = scmp.ne.s32.totalorder %s384, %s386
    %p390 = scmp.eq.s32.totalorder %s30, 0
    %p391 = por %p389, %p390
    %p392 = scmp.ne.s32.totalorder %s384, %s386
    %p393 = scmp.eq.s32.totalorder %s35, 1
    %p394 = por %p392, %p393
    %p395 = scmp.ne.s32.totalorder %s386, %s387
    %p396 = scmp.eq.s32.totalorder %s35, 0
    %p397 = por %p395, %p396
    %p398 = scmp.ne.s32.totalorder %s386, %s387
    %p399 = scmp.eq.s32.totalorder %s36, 1
    %p400 = por %p398, %p399
    %p402 = scmp.ne.s32.totalorder %s387, %s401
    %p403 = scmp.eq.s32.totalorder %s36, 0
    %p404 = por %p402, %p403
    %s406 = sadd.s32 %s405, 1
    %p409 = scmp.eq.s32.totalorder %s30, 1
    %p410 = scmp.ne.s32.totalorder %s405, %s407
    %p411 = scmp.eq.s32.totalorder %s30, 0
    %p412 = por %p410, %p411
    %p413 = scmp.ne.s32.totalorder %s405, %s407
    %p414 = scmp.eq.s32.totalorder %s35, 1
    %p415 = por %p413, %p414
    %p416 = scmp.ne.s32.totalorder %s407, %s408
    %p417 = scmp.eq.s32.totalorder %s35, 0
    %p418 = por %p416, %p417
    %p419 = scmp.ne.s32.totalorder %s407, %s408
    %p420 = scmp.eq.s32.totalorder %s36, 1
    %p421 = por %p419, %p420
    %p423 = scmp.ne.s32.totalorder %s408, %s422
    %p424 = scmp.eq.s32.totalorder %s36, 0
    %p425 = por %p423, %p424
    %s427 = sadd.s32 %s426, 1
    %p430 = scmp.eq.s32.totalorder %s30, 1
    %p431 = scmp.ne.s32.totalorder %s426, %s428
    %p432 = scmp.eq.s32.totalorder %s30, 0
    %p433 = por %p431, %p432
    %p434 = scmp.ne.s32.totalorder %s426, %s428
    %p435 = scmp.eq.s32.totalorder %s35, 1
    %p436 = por %p434, %p435
    %p437 = scmp.ne.s32.totalorder %s428, %s429
    %p438 = scmp.eq.s32.totalorder %s35, 0
    %p439 = por %p437, %p438
    %p440 = scmp.ne.s32.totalorder %s428, %s429
    %p441 = scmp.eq.s32.totalorder %s36, 1
    %p442 = por %p440, %p441
    %p444 = scmp.ne.s32.totalorder %s429, %s443
    %p445 = scmp.eq.s32.totalorder %s36, 0
    %p446 = por %p444, %p445
    %s448 = sadd.s32 %s447, 1
    %p451 = scmp.eq.s32.totalorder %s30, 1
    %p452 = scmp.ne.s32.totalorder %s447, %s449
    %p453 = scmp.eq.s32.totalorder %s30, 0
    %p454 = por %p452, %p453
    %p455 = scmp.ne.s32.totalorder %s447, %s449
    %p456 = scmp.eq.s32.totalorder %s35, 1
    %p457 = por %p455, %p456
    %p458 = scmp.ne.s32.totalorder %s449, %s450
    %p459 = scmp.eq.s32.totalorder %s35, 0
    %p460 = por %p458, %p459
    %p461 = scmp.ne.s32.totalorder %s449, %s450
    %p462 = scmp.eq.s32.totalorder %s36, 1
    %p463 = por %p461, %p462
    %p465 = scmp.ne.s32.totalorder %s450, %s464
    %p466 = scmp.eq.s32.totalorder %s36, 0
    %p467 = por %p465, %p466
    %s469 = sadd.s32 %s468, 1
    %p472 = scmp.eq.s32.totalorder %s30, 1
    %p473 = scmp.ne.s32.totalorder %s468, %s470
    %p474 = scmp.eq.s32.totalorder %s30, 0
    %p475 = por %p473, %p474
    %p476 = scmp.ne.s32.totalorder %s468, %s470
    %p477 = scmp.eq.s32.totalorder %s35, 1
    %p478 = por %p476, %p477
    %p479 = scmp.ne.s32.totalorder %s470, %s471
    %p480 = scmp.eq.s32.totalorder %s35, 0
    %p481 = por %p479, %p480
    %p482 = scmp.ne.s32.totalorder %s470, %s471
    %p483 = scmp.eq.s32.totalorder %s36, 1
    %p484 = por %p482, %p483
    %p486 = scmp.ne.s32.totalorder %s471, %s485
    %p487 = scmp.eq.s32.totalorder %s36, 0
    %p488 = por %p486, %p487
    %s490 = sadd.s32 %s489, 1
    %p493 = scmp.eq.s32.totalorder %s30, 1
    %p494 = scmp.ne.s32.totalorder %s489, %s491
    %p495 = scmp.eq.s32.totalorder %s30, 0
    %p496 = por %p494, %p495
    %p497 = scmp.ne.s32.totalorder %s489, %s491
    %p498 = scmp.eq.s32.totalorder %s35, 1
    %p499 = por %p497, %p498
    %p500 = scmp.ne.s32.totalorder %s491, %s492
    %p501 = scmp.eq.s32.totalorder %s35, 0
    %p502 = por %p500, %p501
    %p503 = scmp.ne.s32.totalorder %s491, %s492
    %p504 = scmp.eq.s32.totalorder %s36, 1
    %p505 = por %p503, %p504
    %p507 = scmp.ne.s32.totalorder %s492, %s506
    %p508 = scmp.eq.s32.totalorder %s36, 0
    %p509 = por %p507, %p508
    %s511 = sadd.s32 %s510, 1
    %p514 = scmp.eq.s32.totalorder %s30, 1
    %p515 = scmp.ne.s32.totalorder %s510, %s512
    %p516 = scmp.eq.s32.totalorder %s30, 0
    %p517 = por %p515, %p516
    %p518 = scmp.ne.s32.totalorder %s510, %s512
    %p519 = scmp.eq.s32.totalorder %s35, 1
    %p520 = por %p518, %p519
    %p521 = scmp.ne.s32.totalorder %s512, %s513
    %p522 = scmp.eq.s32.totalorder %s35, 0
    %p523 = por %p521, %p522
    %p524 = scmp.ne.s32.totalorder %s512, %s513
    %p525 = scmp.eq.s32.totalorder %s36, 1
    %p526 = por %p524, %p525
    %p528 = scmp.ne.s32.totalorder %s513, %s527
    %p529 = scmp.eq.s32.totalorder %s36, 0
    %p530 = por %p528, %p529
    %s532 = sadd.s32 %s531, 1
    %p535 = scmp.eq.s32.totalorder %s30, 1
    %p536 = scmp.ne.s32.totalorder %s531, %s533
    %p537 = scmp.eq.s32.totalorder %s30, 0
    %p538 = por %p536, %p537
    %p539 = scmp.ne.s32.totalorder %s531, %s533
    %p540 = scmp.eq.s32.totalorder %s35, 1
    %p541 = por %p539, %p540
    %p542 = scmp.ne.s32.totalorder %s533, %s534
    %p543 = scmp.eq.s32.totalorder %s35, 0
    %p544 = por %p542, %p543
    %p545 = scmp.ne.s32.totalorder %s533, %s534
    %p546 = scmp.eq.s32.totalorder %s36, 1
    %p547 = por %p545, %p546
    %p549 = scmp.ne.s32.totalorder %s534, %s548
    %p550 = scmp.eq.s32.totalorder %s36, 0
    %p551 = por %p549, %p550
    %s552 = ssub.s32 %s30, %s37
    %p553 = scmp.eq.s32.totalorder %s552, 0
    %s555 = sadd.s32 %s554, 1
    %s556 = scalar_select %p553, %s554, %s555
    %p559 = pneg %p553
    %p560 = scmp.eq.s32.totalorder %s30, 1
    %p561 = por %p559, %p560
    %p562 = scmp.ne.s32.totalorder %s554, %s557
    %p563 = scmp.eq.s32.totalorder %s30, 0
    %p564 = por %p562, %p563
    %p565 = scmp.ne.s32.totalorder %s554, %s557
    %p566 = scmp.eq.s32.totalorder %s35, 1
    %p567 = por %p565, %p566
    %p568 = scmp.ne.s32.totalorder %s557, %s558
    %p569 = scmp.eq.s32.totalorder %s35, 0
    %p570 = por %p568, %p569
    %p571 = scmp.ne.s32.totalorder %s557, %s558
    %p572 = scmp.eq.s32.totalorder %s36, 1
    %p573 = por %p571, %p572
    %p575 = scmp.ne.s32.totalorder %s558, %s574
    %p576 = scmp.eq.s32.totalorder %s36, 0
    %p577 = por %p575, %p576
    %p578 = scmp.le.s32.totalorder 1, %s30
    %p579 = scmp.lt.s32.totalorder %s30, 3
    %p580 = pnand %p578, %p579
    %p581 = pneg %p580
    // Predicated region
    $region9: #{iterative_optimization_forward.1} parent=5 // pred_check
      _
    $region10: #{iterative_optimization_forward.1} parent=5 // pred_check_branch
      %583 = sbr.rel (%p580) target = $region12
    $region11: #{iterative_optimization_forward.1} parent=5 // pred_region
      %s584 = ssub.s32 %s30, 1
      // Predicated region
      $region13: #{iterative_optimization_forward.1} parent=11 // pred_check
        %p585 = pneg %p103
      $region14: #{iterative_optimization_forward.1} parent=11 // pred_check_branch
        %587 = sbr.rel (%p585) target = $region16
      $region15: #{iterative_optimization_forward.1} parent=11 // pred_region
        _
      $region16: #{iterative_optimization_forward.1} parent=11 // pred_fallthru
        _
      // Predicated region
      $region17: #{iterative_optimization_forward.1} parent=11 // pred_check
        %p588 = pneg %p124
      $region18: #{iterative_optimization_forward.1} parent=11 // pred_check_branch
        %590 = sbr.rel (%p588) target = $region20
      $region19: #{iterative_optimization_forward.1} parent=11 // pred_region
        _
      $region20: #{iterative_optimization_forward.1} parent=11 // pred_fallthru
        _
      // Predicated region
      $region21: #{iterative_optimization_forward.1} parent=11 // pred_check
        %p591 = pneg %p145
      $region22: #{iterative_optimization_forward.1} parent=11 // pred_check_branch
        %593 = sbr.rel (%p591) target = $region24
      $region23: #{iterative_optimization_forward.1} parent=11 // pred_region
        _
      $region24: #{iterative_optimization_forward.1} parent=11 // pred_fallthru
        _
      // Predicated region
      $region25: #{iterative_optimization_forward.1} parent=11 // pred_check
        %p594 = pneg %p166
      $region26: #{iterative_optimization_forward.1} parent=11 // pred_check_branch
        %596 = sbr.rel (%p594) target = $region28
      $region27: #{iterative_optimization_forward.1} parent=11 // pred_region
        _
      $region28: #{iterative_optimization_forward.1} parent=11 // pred_fallthru
        _
      // Predicated region
      $region29: #{iterative_optimization_forward.1} parent=11 // pred_check
        %p597 = pneg %p187
      $region30: #{iterative_optimization_forward.1} parent=11 // pred_check_branch
        %599 = sbr.rel (%p597) target = $region32
      $region31: #{iterative_optimization_forward.1} parent=11 // pred_region
        _
      $region32: #{iterative_optimization_forward.1} parent=11 // pred_fallthru
        _
      // Predicated region
      $region33: #{iterative_optimization_forward.1} parent=11 // pred_check
        %p600 = pneg %p208
      $region34: #{iterative_optimization_forward.1} parent=11 // pred_check_branch
        %602 = sbr.rel (%p600) target = $region36
      $region35: #{iterative_optimization_forward.1} parent=11 // pred_region
        _
      $region36: #{iterative_optimization_forward.1} parent=11 // pred_fallthru
        _
      // Predicated region
      $region37: #{iterative_optimization_forward.1} parent=11 // pred_check
        %p603 = pneg %p229
      $region38: #{iterative_optimization_forward.1} parent=11 // pred_check_branch
        %605 = sbr.rel (%p603) target = $region40
      $region39: #{iterative_optimization_forward.1} parent=11 // pred_region
        _
      $region40: #{iterative_optimization_forward.1} parent=11 // pred_fallthru
        _
      // Predicated region
      $region41: #{iterative_optimization_forward.1} parent=11 // pred_check
        %p606 = pneg %p250
      $region42: #{iterative_optimization_forward.1} parent=11 // pred_check_branch
        %608 = sbr.rel (%p606) target = $region44
      $region43: #{iterative_optimization_forward.1} parent=11 // pred_region
        _
      $region44: #{iterative_optimization_forward.1} parent=11 // pred_fallthru
        _
      // Predicated region
      $region45: #{iterative_optimization_forward.1} parent=11 // pred_check
        %p609 = pneg %p271
      $region46: #{iterative_optimization_forward.1} parent=11 // pred_check_branch
        %611 = sbr.rel (%p609) target = $region48
      $region47: #{iterative_optimization_forward.1} parent=11 // pred_region
        _
      $region48: #{iterative_optimization_forward.1} parent=11 // pred_fallthru
        _
      // Predicated region
      $region49: #{iterative_optimization_forward.1} parent=11 // pred_check
        %p612 = pneg %p292
      $region50: #{iterative_optimization_forward.1} parent=11 // pred_check_branch
        %614 = sbr.rel (%p612) target = $region52
      $region51: #{iterative_optimization_forward.1} parent=11 // pred_region
        _
      $region52: #{iterative_optimization_forward.1} parent=11 // pred_fallthru
        _
      // Predicated region
      $region53: #{iterative_optimization_forward.1} parent=11 // pred_check
        %p615 = pneg %p313
      $region54: #{iterative_optimization_forward.1} parent=11 // pred_check_branch
        %617 = sbr.rel (%p615) target = $region56
      $region55: #{iterative_optimization_forward.1} parent=11 // pred_region
        _
      $region56: #{iterative_optimization_forward.1} parent=11 // pred_fallthru
        _
      // Predicated region
      $region57: #{iterative_optimization_forward.1} parent=11 // pred_check
        %p618 = pneg %p334
      $region58: #{iterative_optimization_forward.1} parent=11 // pred_check_branch
        %620 = sbr.rel (%p618) target = $region60
      $region59: #{iterative_optimization_forward.1} parent=11 // pred_region
        _
      $region60: #{iterative_optimization_forward.1} parent=11 // pred_fallthru
        _
      // Predicated region
      $region61: #{iterative_optimization_forward.1} parent=11 // pred_check
        %p621 = pneg %p355
      $region62: #{iterative_optimization_forward.1} parent=11 // pred_check_branch
        %623 = sbr.rel (%p621) target = $region64
      $region63: #{iterative_optimization_forward.1} parent=11 // pred_region
        _
      $region64: #{iterative_optimization_forward.1} parent=11 // pred_fallthru
        _
      // Predicated region
      $region65: #{iterative_optimization_forward.1} parent=11 // pred_check
        %p624 = pneg %p376
      $region66: #{iterative_optimization_forward.1} parent=11 // pred_check_branch
        %626 = sbr.rel (%p624) target = $region68
      $region67: #{iterative_optimization_forward.1} parent=11 // pred_region
        _
      $region68: #{iterative_optimization_forward.1} parent=11 // pred_fallthru
        _
      // Predicated region
      $region69: #{iterative_optimization_forward.1} parent=11 // pred_check
        %p627 = pneg %p397
      $region70: #{iterative_optimization_forward.1} parent=11 // pred_check_branch
        %629 = sbr.rel (%p627) target = $region72
      $region71: #{iterative_optimization_forward.1} parent=11 // pred_region
        _
      $region72: #{iterative_optimization_forward.1} parent=11 // pred_fallthru
        _
      // Predicated region
      $region73: #{iterative_optimization_forward.1} parent=11 // pred_check
        %p630 = pneg %p418
      $region74: #{iterative_optimization_forward.1} parent=11 // pred_check_branch
        %632 = sbr.rel (%p630) target = $region76
      $region75: #{iterative_optimization_forward.1} parent=11 // pred_region
        _
      $region76: #{iterative_optimization_forward.1} parent=11 // pred_fallthru
        _
      // Predicated region
      $region77: #{iterative_optimization_forward.1} parent=11 // pred_check
        %p633 = pneg %p439
      $region78: #{iterative_optimization_forward.1} parent=11 // pred_check_branch
        %635 = sbr.rel (%p633) target = $region80
      $region79: #{iterative_optimization_forward.1} parent=11 // pred_region
        _
      $region80: #{iterative_optimization_forward.1} parent=11 // pred_fallthru
        _
      // Predicated region
      $region81: #{iterative_optimization_forward.1} parent=11 // pred_check
        %p636 = pneg %p460
      $region82: #{iterative_optimization_forward.1} parent=11 // pred_check_branch
        %638 = sbr.rel (%p636) target = $region84
      $region83: #{iterative_optimization_forward.1} parent=11 // pred_region
        _
      $region84: #{iterative_optimization_forward.1} parent=11 // pred_fallthru
        _
      // Predicated region
      $region85: #{iterative_optimization_forward.1} parent=11 // pred_check
        %p639 = pneg %p481
      $region86: #{iterative_optimization_forward.1} parent=11 // pred_check_branch
        %641 = sbr.rel (%p639) target = $region88
      $region87: #{iterative_optimization_forward.1} parent=11 // pred_region
        _
      $region88: #{iterative_optimization_forward.1} parent=11 // pred_fallthru
        _
      // Predicated region
      $region89: #{iterative_optimization_forward.1} parent=11 // pred_check
        %p642 = pneg %p502
      $region90: #{iterative_optimization_forward.1} parent=11 // pred_check_branch
        %644 = sbr.rel (%p642) target = $region92
      $region91: #{iterative_optimization_forward.1} parent=11 // pred_region
        _
      $region92: #{iterative_optimization_forward.1} parent=11 // pred_fallthru
        _
      // Predicated region
      $region93: #{iterative_optimization_forward.1} parent=11 // pred_check
        %p645 = pneg %p523
      $region94: #{iterative_optimization_forward.1} parent=11 // pred_check_branch
        %647 = sbr.rel (%p645) target = $region96
      $region95: #{iterative_optimization_forward.1} parent=11 // pred_region
        _
      $region96: #{iterative_optimization_forward.1} parent=11 // pred_fallthru
        _
      // Predicated region
      $region97: #{iterative_optimization_forward.1} parent=11 // pred_check
        %p648 = pneg %p544
      $region98: #{iterative_optimization_forward.1} parent=11 // pred_check_branch
        %650 = sbr.rel (%p648) target = $region100
      $region99: #{iterative_optimization_forward.1} parent=11 // pred_region
        _
      $region100: #{iterative_optimization_forward.1} parent=11 // pred_fallthru
        _
    $region12: #{iterative_optimization_forward.1} parent=5 // pred_fallthru
      _
    %p651 = scmp.lt.s32.totalorder %s30, 2
    // Predicated region
    $region101: #{iterative_optimization_forward.1} parent=5 // pred_check
      %p652 = pneg %p651
    $region102: #{iterative_optimization_forward.1} parent=5 // pred_check_branch
      %654 = sbr.rel (%p652) target = $region104
    $region103: #{iterative_optimization_forward.1} parent=5 // pred_region
      // Predicated region
      $region105: #{iterative_optimization_forward.1} parent=103 // pred_check
        %p655 = pneg %p50
      $region106: #{iterative_optimization_forward.1} parent=103 // pred_check_branch
        %657 = sbr.rel (%p655) target = $region108
      $region107: #{iterative_optimization_forward.1} parent=103 // pred_region
        %p658 = scmp.lt.s32.totalorder %s30, 1
        %s659 = scalar_select %p658, %s30, 1
        %s660 = smul.addr %s659, 2
        %s661 = smul.addr %s660, 8
        %s662 = scalar_lea.vmem %s0, %s661
      $region108: #{iterative_optimization_forward.1} parent=103 // pred_fallthru
        _
      // Predicated region
      $region109: #{iterative_optimization_forward.1} parent=103 // pred_check
        %p663 = pneg %p76
      $region110: #{iterative_optimization_forward.1} parent=103 // pred_check_branch
        %665 = sbr.rel (%p663) target = $region112
      $region111: #{iterative_optimization_forward.1} parent=103 // pred_region
        %p666 = scmp.lt.s32.totalorder %s30, 1
        %s667 = scalar_select %p666, %s30, 1
        %s668 = smul.addr %s667, 2
        %s669 = smul.addr %s668, 8
        %s670 = scalar_lea.vmem %s1, %s669
      $region112: #{iterative_optimization_forward.1} parent=103 // pred_fallthru
        _
    $region104: #{iterative_optimization_forward.1} parent=5 // pred_fallthru
      _
    %p671 = scmp.le.s32.totalorder 1, %s30
    %p672 = scmp.lt.s32.totalorder %s30, 3
    %p673 = pnand %p671, %p672
    %p674 = pneg %p673
    // Predicated region
    $region113: #{iterative_optimization_forward.1} parent=5 // pred_check
      _
    $region114: #{iterative_optimization_forward.1} parent=5 // pred_check_branch
      %676 = sbr.rel (%p673) target = $region116
    $region115: #{iterative_optimization_forward.1} parent=5 // pred_region
      %s677 = ssub.s32 %s30, 1
      %p678 = scmp.lt.s32.totalorder %s35, 1
      %s679 = scalar_select %p678, %s35, 1
      %s680 = smul.addr %s679, 2
      %s681 = smul.addr %s680, 8
      %s682 = scalar_lea.vmem %s0, %s681
      %p683 = pneg %p56
      %p684 = pneg %p53
      %p685 = scmp.lt.s32.totalorder %s35, 1
      %s686 = scalar_select %p685, %s35, 1
      %s687 = smul.addr %s686, 2
      %s688 = smul.addr %s687, 8
      %s689 = scalar_lea.vmem %s1, %s688
      %p690 = pneg %p82
      %p691 = pneg %p79
      %p692 = pneg %p103
      %p693 = pneg %p100
      %p694 = pneg %p124
      %p695 = pneg %p121
      %p696 = pneg %p145
      %p697 = pneg %p142
      %p698 = pneg %p166
      %p699 = pneg %p163
      %p700 = pneg %p187
      %p701 = pneg %p184
      %p702 = pneg %p208
      %p703 = pneg %p205
      %p704 = pneg %p229
      %p705 = pneg %p226
      %p706 = pneg %p250
      %p707 = pneg %p247
      %p708 = pneg %p271
      %p709 = pneg %p268
      %p710 = pneg %p292
      %p711 = pneg %p289
      %p712 = pneg %p313
      %p713 = pneg %p310
      %p714 = pneg %p334
      %p715 = pneg %p331
      %p716 = pneg %p355
      %p717 = pneg %p352
      %p718 = pneg %p376
      %p719 = pneg %p373
      %p720 = pneg %p397
      %p721 = pneg %p394
      %p722 = pneg %p418
      %p723 = pneg %p415
      %p724 = pneg %p439
      %p725 = pneg %p436
      %p726 = pneg %p460
      %p727 = pneg %p457
      %p728 = pneg %p481
      %p729 = pneg %p478
      %p730 = pneg %p502
      %p731 = pneg %p499
      %p732 = pneg %p523
      %p733 = pneg %p520
      %p734 = pneg %p544
      %p735 = pneg %p541
      %p736 = pneg %p570
      %p737 = pneg %p567
      %p738 = scmp.lt.s32.totalorder %s35, 1
      %s739 = scalar_select %p738, %s35, 1
      %s740 = smul.addr %s739, 2
      %s741 = smul.addr %s740, 8
      %s742 = scalar_lea.vmem %s24, %s741
      %p743 = scmp.lt.s32.totalorder %s35, 1
      %s744 = scalar_select %p743, %s35, 1
      %s745 = smul.addr %s744, 2
      %s746 = smul.addr %s745, 8
      %s747 = scalar_lea.vmem %s0, %s746
      %p748 = scmp.lt.s32.totalorder %s35, 1
      %s749 = scalar_select %p748, %s35, 1
      %s750 = smul.addr %s749, 2
      %s751 = smul.addr %s750, 8
      %s752 = scalar_lea.vmem %s1, %s751
      %p753 = scmp.lt.s32.totalorder %s35, 1
      %s754 = scalar_select %p753, %s35, 1
      %s755 = smul.addr %s754, 2
      %s756 = smul.addr %s755, 8
      %s757 = scalar_lea.vmem %s24, %s756
      %758 = vst [vmem:[#allocation2] sm:$0xff] 0.0
      %759 = vst [vmem:[#allocation2 + $0x8] sm:$0xff] 0.0
      %760 = vst [vmem:[#allocation2 + $0x20] sm:$0xff] 0.0
      %761 = vst [vmem:[#allocation2 + $0x28] sm:$0xff] 0.0
      %v762 = vld [vmem:[%s747] sm:$0xff]
      %v763 = vld [vmem:[%s747 + $0x8] sm:$0xff]
      %v764 = vld [vmem:[%s752] sm:$0xff]
      %v765 = vld [vmem:[%s752 + $0x8] sm:$0xff]
      %766 = vst [vmem:[#allocation2 + $0x10] sm:$0xff] %v762
      %767 = vst [vmem:[#allocation2 + $0x18] sm:$0xff] %v763
      %v768 = vld [vmem:[#allocation2 + $0xf] sm:$0xff]
      %v769 = vld [vmem:[#allocation2 + $0x17] sm:$0xff]
      %v770 = vld [vmem:[#allocation2 + $0x10] sm:$0xff]
      %v771 = vld [vmem:[#allocation2 + $0x18] sm:$0xff]
      %v772 = vld [vmem:[#allocation2 + $0x11] sm:$0xff]
      %v773 = vld [vmem:[#allocation2 + $0x19] sm:$0xff]
      %774 = vst [vmem:[#allocation2 + $0x10] sm:$0xff] %v764
      %775 = vst [vmem:[#allocation2 + $0x18] sm:$0xff] %v765
      %v776 = vld [vmem:[#allocation2 + $0xf] sm:$0xff]
      %v777 = vld [vmem:[#allocation2 + $0x17] sm:$0xff]
      %v778 = vld [vmem:[#allocation2 + $0x10] sm:$0xff]
      %v779 = vld [vmem:[#allocation2 + $0x18] sm:$0xff]
      %v780 = vld [vmem:[#allocation2 + $0x11] sm:$0xff]
      %v781 = vld [vmem:[#allocation2 + $0x19] sm:$0xff]
      %v782 = vld [vmem:[%s2] sm:$0xff]
      %v783 = vld [vmem:[%s2 + $0x8] sm:$0xff]
      %v784 = vld [vmem:[%s2 + $0x10] sm:$0xff]
      %v785 = vld [vmem:[%s2 + $0x18] sm:$0xff]
      %v786 = vld [vmem:[%s2 + $0x20] sm:$0xff]
      %v787 = vld [vmem:[%s2 + $0x28] sm:$0xff]
      %v788 = vld [vmem:[%s2 + $0x30] sm:$0xff]
      %v789 = vld [vmem:[%s2 + $0x38] sm:$0xff]
      %v790 = vld [vmem:[%s2 + $0x40] sm:$0xff]
      %v791 = vld [vmem:[%s2 + $0x48] sm:$0xff]
      %v792 = vld [vmem:[%s2 + $0x50] sm:$0xff]
      %v793 = vld [vmem:[%s2 + $0x58] sm:$0xff]
      %v794 = vld [vmem:[%s2 + $0x60] sm:$0xff]
      %v795 = vld [vmem:[%s2 + $0x68] sm:$0xff]
      %v796 = vld [vmem:[%s2 + $0x70] sm:$0xff]
      %v797 = vld [vmem:[%s2 + $0x78] sm:$0xff]
      %v798 = vld [vmem:[%s2 + $0x80] sm:$0xff]
      %v799 = vld [vmem:[%s2 + $0x88] sm:$0xff]
      %v800 = vld [vmem:[%s2 + $0x90] sm:$0xff]
      %v801 = vld [vmem:[%s2 + $0x98] sm:$0xff]
      %v802 = vld [vmem:[%s2 + $0xa0] sm:$0xff]
      %v803 = vld [vmem:[%s2 + $0xa8] sm:$0xff]
      %v804 = vld [vmem:[%s2 + $0xb0] sm:$0xff]
      %v805 = vld [vmem:[%s2 + $0xb8] sm:$0xff]
      %v806 = vld [vmem:[%s2 + $0xc0] sm:$0xff]
      %v807 = vld [vmem:[%s2 + $0xc8] sm:$0xff]
      %v808 = vld [vmem:[%s2 + $0xd0] sm:$0xff]
      %v809 = vld [vmem:[%s2 + $0xd8] sm:$0xff]
      %v810 = vld [vmem:[%s2 + $0xe0] sm:$0xff]
      %v811 = vld [vmem:[%s2 + $0xe8] sm:$0xff]
      %v812 = vld [vmem:[%s2 + $0xf0] sm:$0xff]
      %v813 = vld [vmem:[%s2 + $0xf8] sm:$0xff]
      %v814 = vld [vmem:[%s2 + $0x100] sm:$0xff]
      %v815 = vld [vmem:[%s2 + $0x108] sm:$0xff]
      %v816 = vld [vmem:[%s2 + $0x110] sm:$0xff]
      %v817 = vld [vmem:[%s2 + $0x118] sm:$0xff]
      %v818 = vld [vmem:[%s2 + $0x120] sm:$0xff]
      %v819 = vld [vmem:[%s2 + $0x128] sm:$0xff]
      %v820 = vld [vmem:[%s2 + $0x130] sm:$0xff]
      %v821 = vld [vmem:[%s2 + $0x138] sm:$0xff]
      %v822 = vld [vmem:[%s2 + $0x140] sm:$0xff]
      %v823 = vld [vmem:[%s2 + $0x148] sm:$0xff]
      %v824 = vld [vmem:[%s2 + $0x150] sm:$0xff]
      %v825 = vld [vmem:[%s2 + $0x158] sm:$0xff]
      %v826 = vld [vmem:[%s2 + $0x160] sm:$0xff]
      %v827 = vld [vmem:[%s2 + $0x168] sm:$0xff]
      %v828 = vld [vmem:[%s2 + $0x170] sm:$0xff]
      %v829 = vld [vmem:[%s2 + $0x178] sm:$0xff]
      %v830 = vld [vmem:[%s2 + $0x180] sm:$0xff]
      %v831 = vld [vmem:[%s2 + $0x188] sm:$0xff]
      %v832 = vld [vmem:[%s2 + $0x190] sm:$0xff]
      %v833 = vld [vmem:[%s2 + $0x198] sm:$0xff]
      %v834 = vld [vmem:[%s2 + $0x1a0] sm:$0xff]
      %v835 = vld [vmem:[%s2 + $0x1a8] sm:$0xff]
      %v836 = vld [vmem:[%s2 + $0x1b0] sm:$0xff]
      %v837 = vld [vmem:[%s2 + $0x1b8] sm:$0xff]
      %v838 = vld [vmem:[%s2 + $0x1c0] sm:$0xff]
      %v839 = vld [vmem:[%s2 + $0x1c8] sm:$0xff]
      %v840 = vld [vmem:[%s2 + $0x1d0] sm:$0xff]
      %v841 = vld [vmem:[%s2 + $0x1d8] sm:$0xff]
      %v842 = vld [vmem:[%s2 + $0x1e0] sm:$0xff]
      %v843 = vld [vmem:[%s2 + $0x1e8] sm:$0xff]
      %v844 = vld [vmem:[%s2 + $0x1f0] sm:$0xff]
      %v845 = vld [vmem:[%s2 + $0x1f8] sm:$0xff]
      %v846 = vld [vmem:[%s2 + $0x200] sm:$0xff]
      %v847 = vld [vmem:[%s2 + $0x208] sm:$0xff]
      %v848 = vld [vmem:[%s2 + $0x210] sm:$0xff]
      %v849 = vld [vmem:[%s2 + $0x218] sm:$0xff]
      %v850 = vld [vmem:[%s2 + $0x220] sm:$0xff]
      %v851 = vld [vmem:[%s2 + $0x228] sm:$0xff]
      %v852 = vld [vmem:[%s2 + $0x230] sm:$0xff]
      %v853 = vld [vmem:[%s2 + $0x238] sm:$0xff]
      %v854 = vld [vmem:[%s2 + $0x240] sm:$0xff]
      %v855 = vld [vmem:[%s2 + $0x248] sm:$0xff]
      %v856 = vld [vmem:[%s2 + $0x250] sm:$0xff]
      %v857 = vld [vmem:[%s2 + $0x258] sm:$0xff]
      %v858 = vld [vmem:[%s2 + $0x260] sm:$0xff]
      %v859 = vld [vmem:[%s2 + $0x268] sm:$0xff]
      %v860 = vld [vmem:[%s2 + $0x270] sm:$0xff]
      %v861 = vld [vmem:[%s2 + $0x278] sm:$0xff]
      %v862 = vld [vmem:[%s2 + $0x280] sm:$0xff]
      %v863 = vld [vmem:[%s2 + $0x288] sm:$0xff]
      %v864 = vld [vmem:[%s2 + $0x290] sm:$0xff]
      %v865 = vld [vmem:[%s2 + $0x298] sm:$0xff]
      %v866 = vld [vmem:[%s2 + $0x2a0] sm:$0xff]
      %v867 = vld [vmem:[%s2 + $0x2a8] sm:$0xff]
      %v868 = vld [vmem:[%s2 + $0x2b0] sm:$0xff]
      %v869 = vld [vmem:[%s2 + $0x2b8] sm:$0xff]
      %v870 = vld [vmem:[%s2 + $0x2c0] sm:$0xff]
      %v871 = vld [vmem:[%s2 + $0x2c8] sm:$0xff]
      %v872 = vld [vmem:[%s2 + $0x2d0] sm:$0xff]
      %v873 = vld [vmem:[%s2 + $0x2d8] sm:$0xff]
      %v874 = vld [vmem:[%s2 + $0x2e0] sm:$0xff]
      %v875 = vld [vmem:[%s2 + $0x2e8] sm:$0xff]
      %v876 = vld [vmem:[%s2 + $0x2f0] sm:$0xff]
      %v877 = vld [vmem:[%s2 + $0x2f8] sm:$0xff]
      %v878 = vld [vmem:[%s3] sm:$0x1]
      %v880 = vlaneseq
      %v881 = vshrl.u32 %v880, 7
      %v882 = vsub.s32 0, %v881
      %v883 = vrot.slane %v878, %v882
      %885 = vmatprep.subr.mxu0 0.0
      %886 = vmatpush1.msra.mxu0 %v797
      %887 = vmatprep.subr.mxu0 0.0
      %888 = vmatpush1.msra.mxu0 %v796
      %889 = vmatprep.subr.mxu0 0.0
      %890 = vmatpush1.msra.mxu0 %v795
      %891 = vmatprep.subr.mxu0 0.0
      %892 = vmatpush1.msra.mxu0 %v794
      %893 = vmatprep.subr.mxu0 0.0
      %894 = vmatpush1.msra.mxu0 %v793
      %895 = vmatprep.subr.mxu0 0.0
      %896 = vmatpush1.msra.mxu0 %v792
      %897 = vmatprep.subr.mxu0 0.0
      %898 = vmatpush1.msra.mxu0 %v791
      %899 = vmatprep.subr.mxu0 0.0
      %900 = vmatpush1.msra.mxu0 %v790
      %901 = vmatprep.subr.mxu0 0.0
      %902 = vmatpush1.msra.mxu0 %v789
      %903 = vmatprep.subr.mxu0 0.0
      %904 = vmatpush1.msra.mxu0 %v788
      %905 = vmatprep.subr.mxu0 0.0
      %906 = vmatpush1.msra.mxu0 %v787
      %907 = vmatprep.subr.mxu0 0.0
      %908 = vmatpush1.msra.mxu0 %v786
      %909 = vmatprep.subr.mxu0 0.0
      %910 = vmatpush1.msra.mxu0 %v785
      %911 = vmatprep.subr.mxu0 0.0
      %912 = vmatpush1.msra.mxu0 %v784
      %913 = vmatprep.subr.mxu0 0.0
      %914 = vmatpush1.msra.mxu0 %v783
      %915 = vmatprep.subr.mxu0 0.0
      %916 = vmatpush1.msra.mxu0 %v782
      %917 = vmatprep.subr.mxu0 0.0
      %918 = vmatpush2.msra.mxu0 %v813
      %919 = vmatprep.subr.mxu0 0.0
      %920 = vmatpush2.msra.mxu0 %v812
      %921 = vmatprep.subr.mxu0 0.0
      %922 = vmatpush2.msra.mxu0 %v811
      %923 = vmatprep.subr.mxu0 0.0
      %924 = vmatpush2.msra.mxu0 %v810
      %925 = vmatprep.subr.mxu0 0.0
      %926 = vmatpush2.msra.mxu0 %v809
      %927 = vmatprep.subr.mxu0 0.0
      %928 = vmatpush2.msra.mxu0 %v808
      %929 = vmatprep.subr.mxu0 0.0
      %930 = vmatpush2.msra.mxu0 %v807
      %931 = vmatprep.subr.mxu0 0.0
      %932 = vmatpush2.msra.mxu0 %v806
      %933 = vmatprep.subr.mxu0 0.0
      %934 = vmatpush2.msra.mxu0 %v805
      %935 = vmatprep.subr.mxu0 0.0
      %936 = vmatpush2.msra.mxu0 %v804
      %937 = vmatprep.subr.mxu0 0.0
      %938 = vmatpush2.msra.mxu0 %v803
      %939 = vmatprep.subr.mxu0 0.0
      %940 = vmatpush2.msra.mxu0 %v802
      %941 = vmatprep.subr.mxu0 0.0
      %942 = vmatpush2.msra.mxu0 %v801
      %943 = vmatprep.subr.mxu0 0.0
      %944 = vmatpush2.msra.mxu0 %v800
      %945 = vmatprep.subr.mxu0 0.0
      %946 = vmatpush2.msra.mxu0 %v799
      %947 = vmatprep.subr.mxu0 0.0
      %948 = vmatpush2.msra.mxu0 %v798
      %949 = vmatprep.mubr.f32.mxu0 %v770
      %950 = vmatmul.mubr.f32.gmra.mxu0 %v768
      %v951 = vpop.f32.mrf.mxu0
      %v952 = vadd.f32 %v883, %v951
      %v953 = vpop.f32.mrf.mxu0
      %954 = vmatprep.mubr.f32.mxu0 %v771
      %955 = vmatmul.mubr.f32.gmra.mxu0 %v769
      %v956 = vpop.f32.mrf.mxu0
      %v957 = vadd.f32 %v883, %v956
      %v958 = vpop.f32.mrf.mxu0
      %959 = vdwg.mxu0
      %960 = vmatprep.subr.mxu0 0.0
      %961 = vmatpush1.msra.mxu0 %v829
      %962 = vmatprep.subr.mxu0 0.0
      %963 = vmatpush1.msra.mxu0 %v828
      %964 = vmatprep.subr.mxu0 0.0
      %965 = vmatpush1.msra.mxu0 %v827
      %966 = vmatprep.subr.mxu0 0.0
      %967 = vmatpush1.msra.mxu0 %v826
      %968 = vmatprep.subr.mxu0 0.0
      %969 = vmatpush1.msra.mxu0 %v825
      %970 = vmatprep.subr.mxu0 0.0
      %971 = vmatpush1.msra.mxu0 %v824
      %972 = vmatprep.subr.mxu0 0.0
      %973 = vmatpush1.msra.mxu0 %v823
      %974 = vmatprep.subr.mxu0 0.0
      %975 = vmatpush1.msra.mxu0 %v822
      %976 = vmatprep.subr.mxu0 0.0
      %977 = vmatpush1.msra.mxu0 %v821
      %978 = vmatprep.subr.mxu0 0.0
      %979 = vmatpush1.msra.mxu0 %v820
      %980 = vmatprep.subr.mxu0 0.0
      %981 = vmatpush1.msra.mxu0 %v819
      %982 = vmatprep.subr.mxu0 0.0
      %983 = vmatpush1.msra.mxu0 %v818
      %984 = vmatprep.subr.mxu0 0.0
      %985 = vmatpush1.msra.mxu0 %v817
      %986 = vmatprep.subr.mxu0 0.0
      %987 = vmatpush1.msra.mxu0 %v816
      %988 = vmatprep.subr.mxu0 0.0
      %989 = vmatpush1.msra.mxu0 %v815
      %990 = vmatprep.subr.mxu0 0.0
      %991 = vmatpush1.msra.mxu0 %v814
      %992 = vmatprep.subr.mxu0 0.0
      %993 = vmatpush2.msra.mxu0 %v845
      %994 = vmatprep.subr.mxu0 0.0
      %995 = vmatpush2.msra.mxu0 %v844
      %996 = vmatprep.subr.mxu0 0.0
      %997 = vmatpush2.msra.mxu0 %v843
      %998 = vmatprep.subr.mxu0 0.0
      %999 = vmatpush2.msra.mxu0 %v842
      %1000 = vmatprep.subr.mxu0 0.0
      %1001 = vmatpush2.msra.mxu0 %v841
      %1002 = vmatprep.subr.mxu0 0.0
      %1003 = vmatpush2.msra.mxu0 %v840
      %1004 = vmatprep.subr.mxu0 0.0
      %1005 = vmatpush2.msra.mxu0 %v839
      %1006 = vmatprep.subr.mxu0 0.0
      %1007 = vmatpush2.msra.mxu0 %v838
      %1008 = vmatprep.subr.mxu0 0.0
      %1009 = vmatpush2.msra.mxu0 %v837
      %1010 = vmatprep.subr.mxu0 0.0
      %1011 = vmatpush2.msra.mxu0 %v836
      %1012 = vmatprep.subr.mxu0 0.0
      %1013 = vmatpush2.msra.mxu0 %v835
      %1014 = vmatprep.subr.mxu0 0.0
      %1015 = vmatpush2.msra.mxu0 %v834
      %1016 = vmatprep.subr.mxu0 0.0
      %1017 = vmatpush2.msra.mxu0 %v833
      %1018 = vmatprep.subr.mxu0 0.0
      %1019 = vmatpush2.msra.mxu0 %v832
      %1020 = vmatprep.subr.mxu0 0.0
      %1021 = vmatpush2.msra.mxu0 %v831
      %1022 = vmatprep.subr.mxu0 0.0
      %1023 = vmatpush2.msra.mxu0 %v830
      %1024 = vmatprep.mubr.f32.mxu0 %v776
      %1025 = vmatmul.mubr.f32.gmra.mxu0 %v772
      %v1026 = vpop.f32.mrf.mxu0
      %v1027 = vadd.f32 %v952, %v1026
      %v1028 = vpop.f32.mrf.mxu0
      %1029 = vmatprep.mubr.f32.mxu0 %v777
      %1030 = vmatmul.mubr.f32.gmra.mxu0 %v773
      %v1031 = vpop.f32.mrf.mxu0
      %v1032 = vadd.f32 %v957, %v1031
      %v1033 = vpop.f32.mrf.mxu0
      %1034 = vdwg.mxu0
      %1035 = vmatprep.subr.mxu0 0.0
      %1036 = vmatpush1.msra.mxu0 %v861
      %1037 = vmatprep.subr.mxu0 0.0
      %1038 = vmatpush1.msra.mxu0 %v860
      %1039 = vmatprep.subr.mxu0 0.0
      %1040 = vmatpush1.msra.mxu0 %v859
      %1041 = vmatprep.subr.mxu0 0.0
      %1042 = vmatpush1.msra.mxu0 %v858
      %1043 = vmatprep.subr.mxu0 0.0
      %1044 = vmatpush1.msra.mxu0 %v857
      %1045 = vmatprep.subr.mxu0 0.0
      %1046 = vmatpush1.msra.mxu0 %v856
      %1047 = vmatprep.subr.mxu0 0.0
      %1048 = vmatpush1.msra.mxu0 %v855
      %1049 = vmatprep.subr.mxu0 0.0
      %1050 = vmatpush1.msra.mxu0 %v854
      %1051 = vmatprep.subr.mxu0 0.0
      %1052 = vmatpush1.msra.mxu0 %v853
      %1053 = vmatprep.subr.mxu0 0.0
      %1054 = vmatpush1.msra.mxu0 %v852
      %1055 = vmatprep.subr.mxu0 0.0
      %1056 = vmatpush1.msra.mxu0 %v851
      %1057 = vmatprep.subr.mxu0 0.0
      %1058 = vmatpush1.msra.mxu0 %v850
      %1059 = vmatprep.subr.mxu0 0.0
      %1060 = vmatpush1.msra.mxu0 %v849
      %1061 = vmatprep.subr.mxu0 0.0
      %1062 = vmatpush1.msra.mxu0 %v848
      %1063 = vmatprep.subr.mxu0 0.0
      %1064 = vmatpush1.msra.mxu0 %v847
      %1065 = vmatprep.subr.mxu0 0.0
      %1066 = vmatpush1.msra.mxu0 %v846
      %1067 = vmatprep.subr.mxu0 0.0
      %1068 = vmatpush2.msra.mxu0 %v877
      %1069 = vmatprep.subr.mxu0 0.0
      %1070 = vmatpush2.msra.mxu0 %v876
      %1071 = vmatprep.subr.mxu0 0.0
      %1072 = vmatpush2.msra.mxu0 %v875
      %1073 = vmatprep.subr.mxu0 0.0
      %1074 = vmatpush2.msra.mxu0 %v874
      %1075 = vmatprep.subr.mxu0 0.0
      %1076 = vmatpush2.msra.mxu0 %v873
      %1077 = vmatprep.subr.mxu0 0.0
      %1078 = vmatpush2.msra.mxu0 %v872
      %1079 = vmatprep.subr.mxu0 0.0
      %1080 = vmatpush2.msra.mxu0 %v871
      %1081 = vmatprep.subr.mxu0 0.0
      %1082 = vmatpush2.msra.mxu0 %v870
      %1083 = vmatprep.subr.mxu0 0.0
      %1084 = vmatpush2.msra.mxu0 %v869
      %1085 = vmatprep.subr.mxu0 0.0
      %1086 = vmatpush2.msra.mxu0 %v868
      %1087 = vmatprep.subr.mxu0 0.0
      %1088 = vmatpush2.msra.mxu0 %v867
      %1089 = vmatprep.subr.mxu0 0.0
      %1090 = vmatpush2.msra.mxu0 %v866
      %1091 = vmatprep.subr.mxu0 0.0
      %1092 = vmatpush2.msra.mxu0 %v865
      %1093 = vmatprep.subr.mxu0 0.0
      %1094 = vmatpush2.msra.mxu0 %v864
      %1095 = vmatprep.subr.mxu0 0.0
      %1096 = vmatpush2.msra.mxu0 %v863
      %1097 = vmatprep.subr.mxu0 0.0
      %1098 = vmatpush2.msra.mxu0 %v862
      %1099 = vmatprep.mubr.f32.mxu0 %v780
      %1100 = vmatmul.mubr.f32.gmra.mxu0 %v778
      %v1101 = vpop.f32.mrf.mxu0
      %v1102 = vadd.f32 %v1027, %v1101
      %v1103 = vpop.f32.mrf.mxu0
      %1104 = vmatprep.mubr.f32.mxu0 %v781
      %1105 = vmatmul.mubr.f32.gmra.mxu0 %v779
      %v1106 = vpop.f32.mrf.mxu0
      %v1107 = vadd.f32 %v1032, %v1106
      %v1108 = vpop.f32.mrf.mxu0
      %1109 = vdwg.mxu0
      %v1110 = vmax.f32 %v1102, 0.0
      %v1111 = vmax.f32 %v1107, 0.0
      %1112 = vst [vmem:[#allocation2 + $0x10] sm:$0xff] %v1110
      %1113 = vst [vmem:[#allocation2 + $0x18] sm:$0xff] %v1111
      %v1114 = vld [vmem:[#allocation2 + $0xf] sm:$0xff]
      %v1115 = vld [vmem:[#allocation2 + $0x17] sm:$0xff]
      %v1116 = vld [vmem:[#allocation2 + $0x10] sm:$0xff]
      %v1117 = vld [vmem:[#allocation2 + $0x18] sm:$0xff]
      %v1118 = vld [vmem:[#allocation2 + $0x11] sm:$0xff]
      %v1119 = vld [vmem:[#allocation2 + $0x19] sm:$0xff]
      %v1120 = vld [vmem:[%s4] sm:$0xff]
      %v1121 = vld [vmem:[%s4 + $0x8] sm:$0xff]
      %v1122 = vld [vmem:[%s4 + $0x10] sm:$0xff]
      %v1123 = vld [vmem:[%s4 + $0x18] sm:$0xff]
      %v1124 = vld [vmem:[%s4 + $0x20] sm:$0xff]
      %v1125 = vld [vmem:[%s4 + $0x28] sm:$0xff]
      %v1126 = vld [vmem:[%s4 + $0x30] sm:$0xff]
      %v1127 = vld [vmem:[%s4 + $0x38] sm:$0xff]
      %v1128 = vld [vmem:[%s4 + $0x40] sm:$0xff]
      %v1129 = vld [vmem:[%s4 + $0x48] sm:$0xff]
      %v1130 = vld [vmem:[%s4 + $0x50] sm:$0xff]
      %v1131 = vld [vmem:[%s4 + $0x58] sm:$0xff]
      %v1132 = vld [vmem:[%s4 + $0x60] sm:$0xff]
      %v1133 = vld [vmem:[%s4 + $0x68] sm:$0xff]
      %v1134 = vld [vmem:[%s4 + $0x70] sm:$0xff]
      %v1135 = vld [vmem:[%s4 + $0x78] sm:$0xff]
      %v1136 = vld [vmem:[%s4 + $0x80] sm:$0xff]
      %v1137 = vld [vmem:[%s4 + $0x88] sm:$0xff]
      %v1138 = vld [vmem:[%s4 + $0x90] sm:$0xff]
      %v1139 = vld [vmem:[%s4 + $0x98] sm:$0xff]
      %v1140 = vld [vmem:[%s4 + $0xa0] sm:$0xff]
      %v1141 = vld [vmem:[%s4 + $0xa8] sm:$0xff]
      %v1142 = vld [vmem:[%s4 + $0xb0] sm:$0xff]
      %v1143 = vld [vmem:[%s4 + $0xb8] sm:$0xff]
      %v1144 = vld [vmem:[%s4 + $0xc0] sm:$0xff]
      %v1145 = vld [vmem:[%s4 + $0xc8] sm:$0xff]
      %v1146 = vld [vmem:[%s4 + $0xd0] sm:$0xff]
      %v1147 = vld [vmem:[%s4 + $0xd8] sm:$0xff]
      %v1148 = vld [vmem:[%s4 + $0xe0] sm:$0xff]
      %v1149 = vld [vmem:[%s4 + $0xe8] sm:$0xff]
      %v1150 = vld [vmem:[%s4 + $0xf0] sm:$0xff]
      %v1151 = vld [vmem:[%s4 + $0xf8] sm:$0xff]
      %v1152 = vld [vmem:[%s4 + $0x100] sm:$0xff]
      %v1153 = vld [vmem:[%s4 + $0x108] sm:$0xff]
      %v1154 = vld [vmem:[%s4 + $0x110] sm:$0xff]
      %v1155 = vld [vmem:[%s4 + $0x118] sm:$0xff]
      %v1156 = vld [vmem:[%s4 + $0x120] sm:$0xff]
      %v1157 = vld [vmem:[%s4 + $0x128] sm:$0xff]
      %v1158 = vld [vmem:[%s4 + $0x130] sm:$0xff]
      %v1159 = vld [vmem:[%s4 + $0x138] sm:$0xff]
      %v1160 = vld [vmem:[%s4 + $0x140] sm:$0xff]
      %v1161 = vld [vmem:[%s4 + $0x148] sm:$0xff]
      %v1162 = vld [vmem:[%s4 + $0x150] sm:$0xff]
      %v1163 = vld [vmem:[%s4 + $0x158] sm:$0xff]
      %v1164 = vld [vmem:[%s4 + $0x160] sm:$0xff]
      %v1165 = vld [vmem:[%s4 + $0x168] sm:$0xff]
      %v1166 = vld [vmem:[%s4 + $0x170] sm:$0xff]
      %v1167 = vld [vmem:[%s4 + $0x178] sm:$0xff]
      %v1168 = vld [vmem:[%s5] sm:$0x1]
      %v1170 = vlaneseq
      %v1171 = vshrl.u32 %v1170, 7
      %v1172 = vsub.s32 0, %v1171
      %v1173 = vrot.slane %v1168, %v1172
      %1175 = vmatprep.subr.mxu0 0.0
      %1176 = vmatpush1.msra.mxu0 %v1135
      %1177 = vmatprep.subr.mxu0 0.0
      %1178 = vmatpush1.msra.mxu0 %v1134
      %1179 = vmatprep.subr.mxu0 0.0
      %1180 = vmatpush1.msra.mxu0 %v1133
      %1181 = vmatprep.subr.mxu0 0.0
      %1182 = vmatpush1.msra.mxu0 %v1132
      %1183 = vmatprep.subr.mxu0 0.0
      %1184 = vmatpush1.msra.mxu0 %v1131
      %1185 = vmatprep.subr.mxu0 0.0
      %1186 = vmatpush1.msra.mxu0 %v1130
      %1187 = vmatprep.subr.mxu0 0.0
      %1188 = vmatpush1.msra.mxu0 %v1129
      %1189 = vmatprep.subr.mxu0 0.0
      %1190 = vmatpush1.msra.mxu0 %v1128
      %1191 = vmatprep.subr.mxu0 0.0
      %1192 = vmatpush1.msra.mxu0 %v1127
      %1193 = vmatprep.subr.mxu0 0.0
      %1194 = vmatpush1.msra.mxu0 %v1126
      %1195 = vmatprep.subr.mxu0 0.0
      %1196 = vmatpush1.msra.mxu0 %v1125
      %1197 = vmatprep.subr.mxu0 0.0
      %1198 = vmatpush1.msra.mxu0 %v1124
      %1199 = vmatprep.subr.mxu0 0.0
      %1200 = vmatpush1.msra.mxu0 %v1123
      %1201 = vmatprep.subr.mxu0 0.0
      %1202 = vmatpush1.msra.mxu0 %v1122
      %1203 = vmatprep.subr.mxu0 0.0
      %1204 = vmatpush1.msra.mxu0 %v1121
      %1205 = vmatprep.subr.mxu0 0.0
      %1206 = vmatpush1.msra.mxu0 %v1120
      %1207 = vmatprep.subr.mxu0 0.0
      %1208 = vmatpush2.msra.mxu0 %v1151
      %1209 = vmatprep.subr.mxu0 0.0
      %1210 = vmatpush2.msra.mxu0 %v1150
      %1211 = vmatprep.subr.mxu0 0.0
      %1212 = vmatpush2.msra.mxu0 %v1149
      %1213 = vmatprep.subr.mxu0 0.0
      %1214 = vmatpush2.msra.mxu0 %v1148
      %1215 = vmatprep.subr.mxu0 0.0
      %1216 = vmatpush2.msra.mxu0 %v1147
      %1217 = vmatprep.subr.mxu0 0.0
      %1218 = vmatpush2.msra.mxu0 %v1146
      %1219 = vmatprep.subr.mxu0 0.0
      %1220 = vmatpush2.msra.mxu0 %v1145
      %1221 = vmatprep.subr.mxu0 0.0
      %1222 = vmatpush2.msra.mxu0 %v1144
      %1223 = vmatprep.subr.mxu0 0.0
      %1224 = vmatpush2.msra.mxu0 %v1143
      %1225 = vmatprep.subr.mxu0 0.0
      %1226 = vmatpush2.msra.mxu0 %v1142
      %1227 = vmatprep.subr.mxu0 0.0
      %1228 = vmatpush2.msra.mxu0 %v1141
      %1229 = vmatprep.subr.mxu0 0.0
      %1230 = vmatpush2.msra.mxu0 %v1140
      %1231 = vmatprep.subr.mxu0 0.0
      %1232 = vmatpush2.msra.mxu0 %v1139
      %1233 = vmatprep.subr.mxu0 0.0
      %1234 = vmatpush2.msra.mxu0 %v1138
      %1235 = vmatprep.subr.mxu0 0.0
      %1236 = vmatpush2.msra.mxu0 %v1137
      %1237 = vmatprep.subr.mxu0 0.0
      %1238 = vmatpush2.msra.mxu0 %v1136
      %1239 = vmatprep.mubr.f32.mxu0 %v1116
      %1240 = vmatmul.mubr.f32.gmra.mxu0 %v1114
      %v1241 = vpop.f32.mrf.mxu0
      %v1242 = vadd.f32 %v1173, %v1241
      %v1243 = vpop.f32.mrf.mxu0
      %1244 = vmatprep.mubr.f32.mxu0 %v1117
      %1245 = vmatmul.mubr.f32.gmra.mxu0 %v1115
      %v1246 = vpop.f32.mrf.mxu0
      %v1247 = vadd.f32 %v1173, %v1246
      %v1248 = vpop.f32.mrf.mxu0
      %1249 = vdwg.mxu0
      %1250 = vmatprep.subr.mxu0 0.0
      %1251 = vmatpush1.msra.mxu0 %v1167
      %1252 = vmatprep.subr.mxu0 0.0
      %1253 = vmatpush1.msra.mxu0 %v1166
      %1254 = vmatprep.subr.mxu0 0.0
      %1255 = vmatpush1.msra.mxu0 %v1165
      %1256 = vmatprep.subr.mxu0 0.0
      %1257 = vmatpush1.msra.mxu0 %v1164
      %1258 = vmatprep.subr.mxu0 0.0
      %1259 = vmatpush1.msra.mxu0 %v1163
      %1260 = vmatprep.subr.mxu0 0.0
      %1261 = vmatpush1.msra.mxu0 %v1162
      %1262 = vmatprep.subr.mxu0 0.0
      %1263 = vmatpush1.msra.mxu0 %v1161
      %1264 = vmatprep.subr.mxu0 0.0
      %1265 = vmatpush1.msra.mxu0 %v1160
      %1266 = vmatprep.subr.mxu0 0.0
      %1267 = vmatpush1.msra.mxu0 %v1159
      %1268 = vmatprep.subr.mxu0 0.0
      %1269 = vmatpush1.msra.mxu0 %v1158
      %1270 = vmatprep.subr.mxu0 0.0
      %1271 = vmatpush1.msra.mxu0 %v1157
      %1272 = vmatprep.subr.mxu0 0.0
      %1273 = vmatpush1.msra.mxu0 %v1156
      %1274 = vmatprep.subr.mxu0 0.0
      %1275 = vmatpush1.msra.mxu0 %v1155
      %1276 = vmatprep.subr.mxu0 0.0
      %1277 = vmatpush1.msra.mxu0 %v1154
      %1278 = vmatprep.subr.mxu0 0.0
      %1279 = vmatpush1.msra.mxu0 %v1153
      %1280 = vmatprep.subr.mxu0 0.0
      %1281 = vmatpush1.msra.mxu0 %v1152
      %1282 = vmatprep.subr.mxu0 0.0
      %1283 = vmatpush2.msra.mxu0 0.0
      %1284 = vmatprep.subr.mxu0 0.0
      %1285 = vmatpush2.msra.mxu0 0.0
      %1286 = vmatprep.subr.mxu0 0.0
      %1287 = vmatpush2.msra.mxu0 0.0
      %1288 = vmatprep.subr.mxu0 0.0
      %1289 = vmatpush2.msra.mxu0 0.0
      %1290 = vmatprep.subr.mxu0 0.0
      %1291 = vmatpush2.msra.mxu0 0.0
      %1292 = vmatprep.subr.mxu0 0.0
      %1293 = vmatpush2.msra.mxu0 0.0
      %1294 = vmatprep.subr.mxu0 0.0
      %1295 = vmatpush2.msra.mxu0 0.0
      %1296 = vmatprep.subr.mxu0 0.0
      %1297 = vmatpush2.msra.mxu0 0.0
      %1298 = vmatprep.subr.mxu0 0.0
      %1299 = vmatpush2.msra.mxu0 0.0
      %1300 = vmatprep.subr.mxu0 0.0
      %1301 = vmatpush2.msra.mxu0 0.0
      %1302 = vmatprep.subr.mxu0 0.0
      %1303 = vmatpush2.msra.mxu0 0.0
      %1304 = vmatprep.subr.mxu0 0.0
      %1305 = vmatpush2.msra.mxu0 0.0
      %1306 = vmatprep.subr.mxu0 0.0
      %1307 = vmatpush2.msra.mxu0 0.0
      %1308 = vmatprep.subr.mxu0 0.0
      %1309 = vmatpush2.msra.mxu0 0.0
      %1310 = vmatprep.subr.mxu0 0.0
      %1311 = vmatpush2.msra.mxu0 0.0
      %1312 = vmatprep.subr.mxu0 0.0
      %1313 = vmatpush2.msra.mxu0 0.0
      %1314 = vmatprep.mubr.f32.mxu0 0.0
      %1315 = vmatmul.mubr.f32.gmra.mxu0 %v1118
      %v1316 = vpop.f32.mrf.mxu0
      %v1317 = vadd.f32 %v1242, %v1316
      %v1318 = vpop.f32.mrf.mxu0
      %1319 = vmatprep.mubr.f32.mxu0 0.0
      %1320 = vmatmul.mubr.f32.gmra.mxu0 %v1119
      %v1321 = vpop.f32.mrf.mxu0
      %v1322 = vadd.f32 %v1247, %v1321
      %v1323 = vpop.f32.mrf.mxu0
      %1324 = vdwg.mxu0
      %v1325 = vmax.f32 %v1317, 0.0
      %v1326 = vmax.f32 %v1322, 0.0
      %v1327 = vadd.f32 %v762, %v1325
      %v1328 = vadd.f32 %v763, %v1326
      %1329 = vst [vmem:[#allocation2 + $0x10] sm:$0xff] %v1327
      %1330 = vst [vmem:[#allocation2 + $0x18] sm:$0xff] %v1328
      %v1331 = vld [vmem:[#allocation2 + $0xf] sm:$0xff]
      %v1332 = vld [vmem:[#allocation2 + $0x17] sm:$0xff]
      %v1333 = vld [vmem:[#allocation2 + $0x10] sm:$0xff]
      %v1334 = vld [vmem:[#allocation2 + $0x18] sm:$0xff]
      %v1335 = vld [vmem:[#allocation2 + $0x11] sm:$0xff]
      %v1336 = vld [vmem:[#allocation2 + $0x19] sm:$0xff]
      %v1337 = vld [vmem:[%s6] sm:$0xff]
      %v1338 = vld [vmem:[%s6 + $0x8] sm:$0xff]
      %v1339 = vld [vmem:[%s6 + $0x10] sm:$0xff]
      %v1340 = vld [vmem:[%s6 + $0x18] sm:$0xff]
      %v1341 = vld [vmem:[%s6 + $0x20] sm:$0xff]
      %v1342 = vld [vmem:[%s6 + $0x28] sm:$0xff]
      %v1343 = vld [vmem:[%s6 + $0x30] sm:$0xff]
      %v1344 = vld [vmem:[%s6 + $0x38] sm:$0xff]
      %v1345 = vld [vmem:[%s6 + $0x40] sm:$0xff]
      %v1346 = vld [vmem:[%s6 + $0x48] sm:$0xff]
      %v1347 = vld [vmem:[%s6 + $0x50] sm:$0xff]
      %v1348 = vld [vmem:[%s6 + $0x58] sm:$0xff]
      %v1349 = vld [vmem:[%s6 + $0x60] sm:$0xff]
      %v1350 = vld [vmem:[%s6 + $0x68] sm:$0xff]
      %v1351 = vld [vmem:[%s6 + $0x70] sm:$0xff]
      %v1352 = vld [vmem:[%s6 + $0x78] sm:$0xff]
      %v1353 = vld [vmem:[%s6 + $0x80] sm:$0xff]
      %v1354 = vld [vmem:[%s6 + $0x88] sm:$0xff]
      %v1355 = vld [vmem:[%s6 + $0x90] sm:$0xff]
      %v1356 = vld [vmem:[%s6 + $0x98] sm:$0xff]
      %v1357 = vld [vmem:[%s6 + $0xa0] sm:$0xff]
      %v1358 = vld [vmem:[%s6 + $0xa8] sm:$0xff]
      %v1359 = vld [vmem:[%s6 + $0xb0] sm:$0xff]
      %v1360 = vld [vmem:[%s6 + $0xb8] sm:$0xff]
      %v1361 = vld [vmem:[%s6 + $0xc0] sm:$0xff]
      %v1362 = vld [vmem:[%s6 + $0xc8] sm:$0xff]
      %v1363 = vld [vmem:[%s6 + $0xd0] sm:$0xff]
      %v1364 = vld [vmem:[%s6 + $0xd8] sm:$0xff]
      %v1365 = vld [vmem:[%s6 + $0xe0] sm:$0xff]
      %v1366 = vld [vmem:[%s6 + $0xe8] sm:$0xff]
      %v1367 = vld [vmem:[%s6 + $0xf0] sm:$0xff]
      %v1368 = vld [vmem:[%s6 + $0xf8] sm:$0xff]
      %v1369 = vld [vmem:[%s6 + $0x100] sm:$0xff]
      %v1370 = vld [vmem:[%s6 + $0x108] sm:$0xff]
      %v1371 = vld [vmem:[%s6 + $0x110] sm:$0xff]
      %v1372 = vld [vmem:[%s6 + $0x118] sm:$0xff]
      %v1373 = vld [vmem:[%s6 + $0x120] sm:$0xff]
      %v1374 = vld [vmem:[%s6 + $0x128] sm:$0xff]
      %v1375 = vld [vmem:[%s6 + $0x130] sm:$0xff]
      %v1376 = vld [vmem:[%s6 + $0x138] sm:$0xff]
      %v1377 = vld [vmem:[%s6 + $0x140] sm:$0xff]
      %v1378 = vld [vmem:[%s6 + $0x148] sm:$0xff]
      %v1379 = vld [vmem:[%s6 + $0x150] sm:$0xff]
      %v1380 = vld [vmem:[%s6 + $0x158] sm:$0xff]
      %v1381 = vld [vmem:[%s6 + $0x160] sm:$0xff]
      %v1382 = vld [vmem:[%s6 + $0x168] sm:$0xff]
      %v1383 = vld [vmem:[%s6 + $0x170] sm:$0xff]
      %v1384 = vld [vmem:[%s6 + $0x178] sm:$0xff]
      %v1385 = vld [vmem:[%s7] sm:$0x1]
      %v1387 = vlaneseq
      %v1388 = vshrl.u32 %v1387, 7
      %v1389 = vsub.s32 0, %v1388
      %v1390 = vrot.slane %v1385, %v1389
      %1392 = vmatprep.subr.mxu0 0.0
      %1393 = vmatpush1.msra.mxu0 %v1352
      %1394 = vmatprep.subr.mxu0 0.0
      %1395 = vmatpush1.msra.mxu0 %v1351
      %1396 = vmatprep.subr.mxu0 0.0
      %1397 = vmatpush1.msra.mxu0 %v1350
      %1398 = vmatprep.subr.mxu0 0.0
      %1399 = vmatpush1.msra.mxu0 %v1349
      %1400 = vmatprep.subr.mxu0 0.0
      %1401 = vmatpush1.msra.mxu0 %v1348
      %1402 = vmatprep.subr.mxu0 0.0
      %1403 = vmatpush1.msra.mxu0 %v1347
      %1404 = vmatprep.subr.mxu0 0.0
      %1405 = vmatpush1.msra.mxu0 %v1346
      %1406 = vmatprep.subr.mxu0 0.0
      %1407 = vmatpush1.msra.mxu0 %v1345
      %1408 = vmatprep.subr.mxu0 0.0
      %1409 = vmatpush1.msra.mxu0 %v1344
      %1410 = vmatprep.subr.mxu0 0.0
      %1411 = vmatpush1.msra.mxu0 %v1343
      %1412 = vmatprep.subr.mxu0 0.0
      %1413 = vmatpush1.msra.mxu0 %v1342
      %1414 = vmatprep.subr.mxu0 0.0
      %1415 = vmatpush1.msra.mxu0 %v1341
      %1416 = vmatprep.subr.mxu0 0.0
      %1417 = vmatpush1.msra.mxu0 %v1340
      %1418 = vmatprep.subr.mxu0 0.0
      %1419 = vmatpush1.msra.mxu0 %v1339
      %1420 = vmatprep.subr.mxu0 0.0
      %1421 = vmatpush1.msra.mxu0 %v1338
      %1422 = vmatprep.subr.mxu0 0.0
      %1423 = vmatpush1.msra.mxu0 %v1337
      %1424 = vmatprep.subr.mxu0 0.0
      %1425 = vmatpush2.msra.mxu0 %v1368
      %1426 = vmatprep.subr.mxu0 0.0
      %1427 = vmatpush2.msra.mxu0 %v1367
      %1428 = vmatprep.subr.mxu0 0.0
      %1429 = vmatpush2.msra.mxu0 %v1366
      %1430 = vmatprep.subr.mxu0 0.0
      %1431 = vmatpush2.msra.mxu0 %v1365
      %1432 = vmatprep.subr.mxu0 0.0
      %1433 = vmatpush2.msra.mxu0 %v1364
      %1434 = vmatprep.subr.mxu0 0.0
      %1435 = vmatpush2.msra.mxu0 %v1363
      %1436 = vmatprep.subr.mxu0 0.0
      %1437 = vmatpush2.msra.mxu0 %v1362
      %1438 = vmatprep.subr.mxu0 0.0
      %1439 = vmatpush2.msra.mxu0 %v1361
      %1440 = vmatprep.subr.mxu0 0.0
      %1441 = vmatpush2.msra.mxu0 %v1360
      %1442 = vmatprep.subr.mxu0 0.0
      %1443 = vmatpush2.msra.mxu0 %v1359
      %1444 = vmatprep.subr.mxu0 0.0
      %1445 = vmatpush2.msra.mxu0 %v1358
      %1446 = vmatprep.subr.mxu0 0.0
      %1447 = vmatpush2.msra.mxu0 %v1357
      %1448 = vmatprep.subr.mxu0 0.0
      %1449 = vmatpush2.msra.mxu0 %v1356
      %1450 = vmatprep.subr.mxu0 0.0
      %1451 = vmatpush2.msra.mxu0 %v1355
      %1452 = vmatprep.subr.mxu0 0.0
      %1453 = vmatpush2.msra.mxu0 %v1354
      %1454 = vmatprep.subr.mxu0 0.0
      %1455 = vmatpush2.msra.mxu0 %v1353
      %1456 = vmatprep.mubr.f32.mxu0 %v1333
      %1457 = vmatmul.mubr.f32.gmra.mxu0 %v1331
      %v1458 = vpop.f32.mrf.mxu0
      %v1459 = vadd.f32 %v1390, %v1458
      %v1460 = vpop.f32.mrf.mxu0
      %1461 = vmatprep.mubr.f32.mxu0 %v1334
      %1462 = vmatmul.mubr.f32.gmra.mxu0 %v1332
      %v1463 = vpop.f32.mrf.mxu0
      %v1464 = vadd.f32 %v1390, %v1463
      %v1465 = vpop.f32.mrf.mxu0
      %1466 = vdwg.mxu0
      %1467 = vmatprep.subr.mxu0 0.0
      %1468 = vmatpush1.msra.mxu0 %v1384
      %1469 = vmatprep.subr.mxu0 0.0
      %1470 = vmatpush1.msra.mxu0 %v1383
      %1471 = vmatprep.subr.mxu0 0.0
      %1472 = vmatpush1.msra.mxu0 %v1382
      %1473 = vmatprep.subr.mxu0 0.0
      %1474 = vmatpush1.msra.mxu0 %v1381
      %1475 = vmatprep.subr.mxu0 0.0
      %1476 = vmatpush1.msra.mxu0 %v1380
      %1477 = vmatprep.subr.mxu0 0.0
      %1478 = vmatpush1.msra.mxu0 %v1379
      %1479 = vmatprep.subr.mxu0 0.0
      %1480 = vmatpush1.msra.mxu0 %v1378
      %1481 = vmatprep.subr.mxu0 0.0
      %1482 = vmatpush1.msra.mxu0 %v1377
      %1483 = vmatprep.subr.mxu0 0.0
      %1484 = vmatpush1.msra.mxu0 %v1376
      %1485 = vmatprep.subr.mxu0 0.0
      %1486 = vmatpush1.msra.mxu0 %v1375
      %1487 = vmatprep.subr.mxu0 0.0
      %1488 = vmatpush1.msra.mxu0 %v1374
      %1489 = vmatprep.subr.mxu0 0.0
      %1490 = vmatpush1.msra.mxu0 %v1373
      %1491 = vmatprep.subr.mxu0 0.0
      %1492 = vmatpush1.msra.mxu0 %v1372
      %1493 = vmatprep.subr.mxu0 0.0
      %1494 = vmatpush1.msra.mxu0 %v1371
      %1495 = vmatprep.subr.mxu0 0.0
      %1496 = vmatpush1.msra.mxu0 %v1370
      %1497 = vmatprep.subr.mxu0 0.0
      %1498 = vmatpush1.msra.mxu0 %v1369
      %1499 = vmatprep.subr.mxu0 0.0
      %1500 = vmatpush2.msra.mxu0 0.0
      %1501 = vmatprep.subr.mxu0 0.0
      %1502 = vmatpush2.msra.mxu0 0.0
      %1503 = vmatprep.subr.mxu0 0.0
      %1504 = vmatpush2.msra.mxu0 0.0
      %1505 = vmatprep.subr.mxu0 0.0
      %1506 = vmatpush2.msra.mxu0 0.0
      %1507 = vmatprep.subr.mxu0 0.0
      %1508 = vmatpush2.msra.mxu0 0.0
      %1509 = vmatprep.subr.mxu0 0.0
      %1510 = vmatpush2.msra.mxu0 0.0
      %1511 = vmatprep.subr.mxu0 0.0
      %1512 = vmatpush2.msra.mxu0 0.0
      %1513 = vmatprep.subr.mxu0 0.0
      %1514 = vmatpush2.msra.mxu0 0.0
      %1515 = vmatprep.subr.mxu0 0.0
      %1516 = vmatpush2.msra.mxu0 0.0
      %1517 = vmatprep.subr.mxu0 0.0
      %1518 = vmatpush2.msra.mxu0 0.0
      %1519 = vmatprep.subr.mxu0 0.0
      %1520 = vmatpush2.msra.mxu0 0.0
      %1521 = vmatprep.subr.mxu0 0.0
      %1522 = vmatpush2.msra.mxu0 0.0
      %1523 = vmatprep.subr.mxu0 0.0
      %1524 = vmatpush2.msra.mxu0 0.0
      %1525 = vmatprep.subr.mxu0 0.0
      %1526 = vmatpush2.msra.mxu0 0.0
      %1527 = vmatprep.subr.mxu0 0.0
      %1528 = vmatpush2.msra.mxu0 0.0
      %1529 = vmatprep.subr.mxu0 0.0
      %1530 = vmatpush2.msra.mxu0 0.0
      %1531 = vmatprep.mubr.f32.mxu0 0.0
      %1532 = vmatmul.mubr.f32.gmra.mxu0 %v1335
      %v1533 = vpop.f32.mrf.mxu0
      %v1534 = vadd.f32 %v1459, %v1533
      %v1535 = vpop.f32.mrf.mxu0
      %1536 = vmatprep.mubr.f32.mxu0 0.0
      %1537 = vmatmul.mubr.f32.gmra.mxu0 %v1336
      %v1538 = vpop.f32.mrf.mxu0
      %v1539 = vadd.f32 %v1464, %v1538
      %v1540 = vpop.f32.mrf.mxu0
      %1541 = vdwg.mxu0
      %v1542 = vmax.f32 %v1534, 0.0
      %v1543 = vmax.f32 %v1539, 0.0
      %1544 = vst [vmem:[#allocation2 + $0x10] sm:$0xff] %v1542
      %1545 = vst [vmem:[#allocation2 + $0x18] sm:$0xff] %v1543
      %v1546 = vld [vmem:[#allocation2 + $0xf] sm:$0xff]
      %v1547 = vld [vmem:[#allocation2 + $0x17] sm:$0xff]
      %v1548 = vld [vmem:[#allocation2 + $0x10] sm:$0xff]
      %v1549 = vld [vmem:[#allocation2 + $0x18] sm:$0xff]
      %v1550 = vld [vmem:[#allocation2 + $0x11] sm:$0xff]
      %v1551 = vld [vmem:[#allocation2 + $0x19] sm:$0xff]
      %v1552 = vld [vmem:[%s8] sm:$0xff]
      %v1553 = vld [vmem:[%s8 + $0x8] sm:$0xff]
      %v1554 = vld [vmem:[%s8 + $0x10] sm:$0xff]
      %v1555 = vld [vmem:[%s8 + $0x18] sm:$0xff]
      %v1556 = vld [vmem:[%s8 + $0x20] sm:$0xff]
      %v1557 = vld [vmem:[%s8 + $0x28] sm:$0xff]
      %v1558 = vld [vmem:[%s8 + $0x30] sm:$0xff]
      %v1559 = vld [vmem:[%s8 + $0x38] sm:$0xff]
      %v1560 = vld [vmem:[%s8 + $0x40] sm:$0xff]
      %v1561 = vld [vmem:[%s8 + $0x48] sm:$0xff]
      %v1562 = vld [vmem:[%s8 + $0x50] sm:$0xff]
      %v1563 = vld [vmem:[%s8 + $0x58] sm:$0xff]
      %v1564 = vld [vmem:[%s8 + $0x60] sm:$0xff]
      %v1565 = vld [vmem:[%s8 + $0x68] sm:$0xff]
      %v1566 = vld [vmem:[%s8 + $0x70] sm:$0xff]
      %v1567 = vld [vmem:[%s8 + $0x78] sm:$0xff]
      %v1568 = vld [vmem:[%s8 + $0x80] sm:$0xff]
      %v1569 = vld [vmem:[%s8 + $0x88] sm:$0xff]
      %v1570 = vld [vmem:[%s8 + $0x90] sm:$0xff]
      %v1571 = vld [vmem:[%s8 + $0x98] sm:$0xff]
      %v1572 = vld [vmem:[%s8 + $0xa0] sm:$0xff]
      %v1573 = vld [vmem:[%s8 + $0xa8] sm:$0xff]
      %v1574 = vld [vmem:[%s8 + $0xb0] sm:$0xff]
      %v1575 = vld [vmem:[%s8 + $0xb8] sm:$0xff]
      %v1576 = vld [vmem:[%s8 + $0xc0] sm:$0xff]
      %v1577 = vld [vmem:[%s8 + $0xc8] sm:$0xff]
      %v1578 = vld [vmem:[%s8 + $0xd0] sm:$0xff]
      %v1579 = vld [vmem:[%s8 + $0xd8] sm:$0xff]
      %v1580 = vld [vmem:[%s8 + $0xe0] sm:$0xff]
      %v1581 = vld [vmem:[%s8 + $0xe8] sm:$0xff]
      %v1582 = vld [vmem:[%s8 + $0xf0] sm:$0xff]
      %v1583 = vld [vmem:[%s8 + $0xf8] sm:$0xff]
      %v1584 = vld [vmem:[%s8 + $0x100] sm:$0xff]
      %v1585 = vld [vmem:[%s8 + $0x108] sm:$0xff]
      %v1586 = vld [vmem:[%s8 + $0x110] sm:$0xff]
      %v1587 = vld [vmem:[%s8 + $0x118] sm:$0xff]
      %v1588 = vld [vmem:[%s8 + $0x120] sm:$0xff]
      %v1589 = vld [vmem:[%s8 + $0x128] sm:$0xff]
      %v1590 = vld [vmem:[%s8 + $0x130] sm:$0xff]
      %v1591 = vld [vmem:[%s8 + $0x138] sm:$0xff]
      %v1592 = vld [vmem:[%s8 + $0x140] sm:$0xff]
      %v1593 = vld [vmem:[%s8 + $0x148] sm:$0xff]
      %v1594 = vld [vmem:[%s8 + $0x150] sm:$0xff]
      %v1595 = vld [vmem:[%s8 + $0x158] sm:$0xff]
      %v1596 = vld [vmem:[%s8 + $0x160] sm:$0xff]
      %v1597 = vld [vmem:[%s8 + $0x168] sm:$0xff]
      %v1598 = vld [vmem:[%s8 + $0x170] sm:$0xff]
      %v1599 = vld [vmem:[%s8 + $0x178] sm:$0xff]
      %v1600 = vld [vmem:[%s9] sm:$0x1]
      %v1602 = vlaneseq
      %v1603 = vshrl.u32 %v1602, 7
      %v1604 = vsub.s32 0, %v1603
      %v1605 = vrot.slane %v1600, %v1604
      %1607 = vmatprep.subr.mxu0 0.0
      %1608 = vmatpush1.msra.mxu0 %v1567
      %1609 = vmatprep.subr.mxu0 0.0
      %1610 = vmatpush1.msra.mxu0 %v1566
      %1611 = vmatprep.subr.mxu0 0.0
      %1612 = vmatpush1.msra.mxu0 %v1565
      %1613 = vmatprep.subr.mxu0 0.0
      %1614 = vmatpush1.msra.mxu0 %v1564
      %1615 = vmatprep.subr.mxu0 0.0
      %1616 = vmatpush1.msra.mxu0 %v1563
      %1617 = vmatprep.subr.mxu0 0.0
      %1618 = vmatpush1.msra.mxu0 %v1562
      %1619 = vmatprep.subr.mxu0 0.0
      %1620 = vmatpush1.msra.mxu0 %v1561
      %1621 = vmatprep.subr.mxu0 0.0
      %1622 = vmatpush1.msra.mxu0 %v1560
      %1623 = vmatprep.subr.mxu0 0.0
      %1624 = vmatpush1.msra.mxu0 %v1559
      %1625 = vmatprep.subr.mxu0 0.0
      %1626 = vmatpush1.msra.mxu0 %v1558
      %1627 = vmatprep.subr.mxu0 0.0
      %1628 = vmatpush1.msra.mxu0 %v1557
      %1629 = vmatprep.subr.mxu0 0.0
      %1630 = vmatpush1.msra.mxu0 %v1556
      %1631 = vmatprep.subr.mxu0 0.0
      %1632 = vmatpush1.msra.mxu0 %v1555
      %1633 = vmatprep.subr.mxu0 0.0
      %1634 = vmatpush1.msra.mxu0 %v1554
      %1635 = vmatprep.subr.mxu0 0.0
      %1636 = vmatpush1.msra.mxu0 %v1553
      %1637 = vmatprep.subr.mxu0 0.0
      %1638 = vmatpush1.msra.mxu0 %v1552
      %1639 = vmatprep.subr.mxu0 0.0
      %1640 = vmatpush2.msra.mxu0 %v1583
      %1641 = vmatprep.subr.mxu0 0.0
      %1642 = vmatpush2.msra.mxu0 %v1582
      %1643 = vmatprep.subr.mxu0 0.0
      %1644 = vmatpush2.msra.mxu0 %v1581
      %1645 = vmatprep.subr.mxu0 0.0
      %1646 = vmatpush2.msra.mxu0 %v1580
      %1647 = vmatprep.subr.mxu0 0.0
      %1648 = vmatpush2.msra.mxu0 %v1579
      %1649 = vmatprep.subr.mxu0 0.0
      %1650 = vmatpush2.msra.mxu0 %v1578
      %1651 = vmatprep.subr.mxu0 0.0
      %1652 = vmatpush2.msra.mxu0 %v1577
      %1653 = vmatprep.subr.mxu0 0.0
      %1654 = vmatpush2.msra.mxu0 %v1576
      %1655 = vmatprep.subr.mxu0 0.0
      %1656 = vmatpush2.msra.mxu0 %v1575
      %1657 = vmatprep.subr.mxu0 0.0
      %1658 = vmatpush2.msra.mxu0 %v1574
      %1659 = vmatprep.subr.mxu0 0.0
      %1660 = vmatpush2.msra.mxu0 %v1573
      %1661 = vmatprep.subr.mxu0 0.0
      %1662 = vmatpush2.msra.mxu0 %v1572
      %1663 = vmatprep.subr.mxu0 0.0
      %1664 = vmatpush2.msra.mxu0 %v1571
      %1665 = vmatprep.subr.mxu0 0.0
      %1666 = vmatpush2.msra.mxu0 %v1570
      %1667 = vmatprep.subr.mxu0 0.0
      %1668 = vmatpush2.msra.mxu0 %v1569
      %1669 = vmatprep.subr.mxu0 0.0
      %1670 = vmatpush2.msra.mxu0 %v1568
      %1671 = vmatprep.mubr.f32.mxu0 %v1548
      %1672 = vmatmul.mubr.f32.gmra.mxu0 %v1546
      %v1673 = vpop.f32.mrf.mxu0
      %v1674 = vadd.f32 %v1605, %v1673
      %v1675 = vpop.f32.mrf.mxu0
      %1676 = vmatprep.mubr.f32.mxu0 %v1549
      %1677 = vmatmul.mubr.f32.gmra.mxu0 %v1547
      %v1678 = vpop.f32.mrf.mxu0
      %v1679 = vadd.f32 %v1605, %v1678
      %v1680 = vpop.f32.mrf.mxu0
      %1681 = vdwg.mxu0
      %1682 = vmatprep.subr.mxu0 0.0
      %1683 = vmatpush1.msra.mxu0 %v1599
      %1684 = vmatprep.subr.mxu0 0.0
      %1685 = vmatpush1.msra.mxu0 %v1598
      %1686 = vmatprep.subr.mxu0 0.0
      %1687 = vmatpush1.msra.mxu0 %v1597
      %1688 = vmatprep.subr.mxu0 0.0
      %1689 = vmatpush1.msra.mxu0 %v1596
      %1690 = vmatprep.subr.mxu0 0.0
      %1691 = vmatpush1.msra.mxu0 %v1595
      %1692 = vmatprep.subr.mxu0 0.0
      %1693 = vmatpush1.msra.mxu0 %v1594
      %1694 = vmatprep.subr.mxu0 0.0
      %1695 = vmatpush1.msra.mxu0 %v1593
      %1696 = vmatprep.subr.mxu0 0.0
      %1697 = vmatpush1.msra.mxu0 %v1592
      %1698 = vmatprep.subr.mxu0 0.0
      %1699 = vmatpush1.msra.mxu0 %v1591
      %1700 = vmatprep.subr.mxu0 0.0
      %1701 = vmatpush1.msra.mxu0 %v1590
      %1702 = vmatprep.subr.mxu0 0.0
      %1703 = vmatpush1.msra.mxu0 %v1589
      %1704 = vmatprep.subr.mxu0 0.0
      %1705 = vmatpush1.msra.mxu0 %v1588
      %1706 = vmatprep.subr.mxu0 0.0
      %1707 = vmatpush1.msra.mxu0 %v1587
      %1708 = vmatprep.subr.mxu0 0.0
      %1709 = vmatpush1.msra.mxu0 %v1586
      %1710 = vmatprep.subr.mxu0 0.0
      %1711 = vmatpush1.msra.mxu0 %v1585
      %1712 = vmatprep.subr.mxu0 0.0
      %1713 = vmatpush1.msra.mxu0 %v1584
      %1714 = vmatprep.subr.mxu0 0.0
      %1715 = vmatpush2.msra.mxu0 0.0
      %1716 = vmatprep.subr.mxu0 0.0
      %1717 = vmatpush2.msra.mxu0 0.0
      %1718 = vmatprep.subr.mxu0 0.0
      %1719 = vmatpush2.msra.mxu0 0.0
      %1720 = vmatprep.subr.mxu0 0.0
      %1721 = vmatpush2.msra.mxu0 0.0
      %1722 = vmatprep.subr.mxu0 0.0
      %1723 = vmatpush2.msra.mxu0 0.0
      %1724 = vmatprep.subr.mxu0 0.0
      %1725 = vmatpush2.msra.mxu0 0.0
      %1726 = vmatprep.subr.mxu0 0.0
      %1727 = vmatpush2.msra.mxu0 0.0
      %1728 = vmatprep.subr.mxu0 0.0
      %1729 = vmatpush2.msra.mxu0 0.0
      %1730 = vmatprep.subr.mxu0 0.0
      %1731 = vmatpush2.msra.mxu0 0.0
      %1732 = vmatprep.subr.mxu0 0.0
      %1733 = vmatpush2.msra.mxu0 0.0
      %1734 = vmatprep.subr.mxu0 0.0
      %1735 = vmatpush2.msra.mxu0 0.0
      %1736 = vmatprep.subr.mxu0 0.0
      %1737 = vmatpush2.msra.mxu0 0.0
      %1738 = vmatprep.subr.mxu0 0.0
      %1739 = vmatpush2.msra.mxu0 0.0
      %1740 = vmatprep.subr.mxu0 0.0
      %1741 = vmatpush2.msra.mxu0 0.0
      %1742 = vmatprep.subr.mxu0 0.0
      %1743 = vmatpush2.msra.mxu0 0.0
      %1744 = vmatprep.subr.mxu0 0.0
      %1745 = vmatpush2.msra.mxu0 0.0
      %1746 = vmatprep.mubr.f32.mxu0 0.0
      %1747 = vmatmul.mubr.f32.gmra.mxu0 %v1550
      %v1748 = vpop.f32.mrf.mxu0
      %v1749 = vadd.f32 %v1674, %v1748
      %v1750 = vpop.f32.mrf.mxu0
      %1751 = vmatprep.mubr.f32.mxu0 0.0
      %1752 = vmatmul.mubr.f32.gmra.mxu0 %v1551
      %v1753 = vpop.f32.mrf.mxu0
      %v1754 = vadd.f32 %v1679, %v1753
      %v1755 = vpop.f32.mrf.mxu0
      %1756 = vdwg.mxu0
      %v1757 = vmax.f32 %v1749, 0.0
      %v1758 = vmax.f32 %v1754, 0.0
      %v1759 = vadd.f32 %v1327, %v1757
      %v1760 = vadd.f32 %v1328, %v1758
      %1761 = vst [vmem:[#allocation2 + $0x10] sm:$0xff] %v1759
      %1762 = vst [vmem:[#allocation2 + $0x18] sm:$0xff] %v1760
      %v1763 = vld [vmem:[#allocation2 + $0xf] sm:$0xff]
      %v1764 = vld [vmem:[#allocation2 + $0x17] sm:$0xff]
      %v1765 = vld [vmem:[#allocation2 + $0x10] sm:$0xff]
      %v1766 = vld [vmem:[#allocation2 + $0x18] sm:$0xff]
      %v1767 = vld [vmem:[#allocation2 + $0x11] sm:$0xff]
      %v1768 = vld [vmem:[#allocation2 + $0x19] sm:$0xff]
      %v1769 = vld [vmem:[%s10] sm:$0xff]
      %v1770 = vld [vmem:[%s10 + $0x8] sm:$0xff]
      %v1771 = vld [vmem:[%s10 + $0x10] sm:$0xff]
      %v1772 = vld [vmem:[%s10 + $0x18] sm:$0xff]
      %v1773 = vld [vmem:[%s10 + $0x20] sm:$0xff]
      %v1774 = vld [vmem:[%s10 + $0x28] sm:$0xff]
      %v1775 = vld [vmem:[%s10 + $0x30] sm:$0xff]
      %v1776 = vld [vmem:[%s10 + $0x38] sm:$0xff]
      %v1777 = vld [vmem:[%s10 + $0x40] sm:$0xff]
      %v1778 = vld [vmem:[%s10 + $0x48] sm:$0xff]
      %v1779 = vld [vmem:[%s10 + $0x50] sm:$0xff]
      %v1780 = vld [vmem:[%s10 + $0x58] sm:$0xff]
      %v1781 = vld [vmem:[%s10 + $0x60] sm:$0xff]
      %v1782 = vld [vmem:[%s10 + $0x68] sm:$0xff]
      %v1783 = vld [vmem:[%s10 + $0x70] sm:$0xff]
      %v1784 = vld [vmem:[%s10 + $0x78] sm:$0xff]
      %v1785 = vld [vmem:[%s10 + $0x80] sm:$0xff]
      %v1786 = vld [vmem:[%s10 + $0x88] sm:$0xff]
      %v1787 = vld [vmem:[%s10 + $0x90] sm:$0xff]
      %v1788 = vld [vmem:[%s10 + $0x98] sm:$0xff]
      %v1789 = vld [vmem:[%s10 + $0xa0] sm:$0xff]
      %v1790 = vld [vmem:[%s10 + $0xa8] sm:$0xff]
      %v1791 = vld [vmem:[%s10 + $0xb0] sm:$0xff]
      %v1792 = vld [vmem:[%s10 + $0xb8] sm:$0xff]
      %v1793 = vld [vmem:[%s10 + $0xc0] sm:$0xff]
      %v1794 = vld [vmem:[%s10 + $0xc8] sm:$0xff]
      %v1795 = vld [vmem:[%s10 + $0xd0] sm:$0xff]
      %v1796 = vld [vmem:[%s10 + $0xd8] sm:$0xff]
      %v1797 = vld [vmem:[%s10 + $0xe0] sm:$0xff]
      %v1798 = vld [vmem:[%s10 + $0xe8] sm:$0xff]
      %v1799 = vld [vmem:[%s10 + $0xf0] sm:$0xff]
      %v1800 = vld [vmem:[%s10 + $0xf8] sm:$0xff]
      %v1801 = vld [vmem:[%s10 + $0x100] sm:$0xff]
      %v1802 = vld [vmem:[%s10 + $0x108] sm:$0xff]
      %v1803 = vld [vmem:[%s10 + $0x110] sm:$0xff]
      %v1804 = vld [vmem:[%s10 + $0x118] sm:$0xff]
      %v1805 = vld [vmem:[%s10 + $0x120] sm:$0xff]
      %v1806 = vld [vmem:[%s10 + $0x128] sm:$0xff]
      %v1807 = vld [vmem:[%s10 + $0x130] sm:$0xff]
      %v1808 = vld [vmem:[%s10 + $0x138] sm:$0xff]
      %v1809 = vld [vmem:[%s10 + $0x140] sm:$0xff]
      %v1810 = vld [vmem:[%s10 + $0x148] sm:$0xff]
      %v1811 = vld [vmem:[%s10 + $0x150] sm:$0xff]
      %v1812 = vld [vmem:[%s10 + $0x158] sm:$0xff]
      %v1813 = vld [vmem:[%s10 + $0x160] sm:$0xff]
      %v1814 = vld [vmem:[%s10 + $0x168] sm:$0xff]
      %v1815 = vld [vmem:[%s10 + $0x170] sm:$0xff]
      %v1816 = vld [vmem:[%s10 + $0x178] sm:$0xff]
      %v1817 = vld [vmem:[%s11] sm:$0x1]
      %v1819 = vlaneseq
      %v1820 = vshrl.u32 %v1819, 7
      %v1821 = vsub.s32 0, %v1820
      %v1822 = vrot.slane %v1817, %v1821
      %1824 = vmatprep.subr.mxu0 0.0
      %1825 = vmatpush1.msra.mxu0 %v1784
      %1826 = vmatprep.subr.mxu0 0.0
      %1827 = vmatpush1.msra.mxu0 %v1783
      %1828 = vmatprep.subr.mxu0 0.0
      %1829 = vmatpush1.msra.mxu0 %v1782
      %1830 = vmatprep.subr.mxu0 0.0
      %1831 = vmatpush1.msra.mxu0 %v1781
      %1832 = vmatprep.subr.mxu0 0.0
      %1833 = vmatpush1.msra.mxu0 %v1780
      %1834 = vmatprep.subr.mxu0 0.0
      %1835 = vmatpush1.msra.mxu0 %v1779
      %1836 = vmatprep.subr.mxu0 0.0
      %1837 = vmatpush1.msra.mxu0 %v1778
      %1838 = vmatprep.subr.mxu0 0.0
      %1839 = vmatpush1.msra.mxu0 %v1777
      %1840 = vmatprep.subr.mxu0 0.0
      %1841 = vmatpush1.msra.mxu0 %v1776
      %1842 = vmatprep.subr.mxu0 0.0
      %1843 = vmatpush1.msra.mxu0 %v1775
      %1844 = vmatprep.subr.mxu0 0.0
      %1845 = vmatpush1.msra.mxu0 %v1774
      %1846 = vmatprep.subr.mxu0 0.0
      %1847 = vmatpush1.msra.mxu0 %v1773
      %1848 = vmatprep.subr.mxu0 0.0
      %1849 = vmatpush1.msra.mxu0 %v1772
      %1850 = vmatprep.subr.mxu0 0.0
      %1851 = vmatpush1.msra.mxu0 %v1771
      %1852 = vmatprep.subr.mxu0 0.0
      %1853 = vmatpush1.msra.mxu0 %v1770
      %1854 = vmatprep.subr.mxu0 0.0
      %1855 = vmatpush1.msra.mxu0 %v1769
      %1856 = vmatprep.subr.mxu0 0.0
      %1857 = vmatpush2.msra.mxu0 %v1800
      %1858 = vmatprep.subr.mxu0 0.0
      %1859 = vmatpush2.msra.mxu0 %v1799
      %1860 = vmatprep.subr.mxu0 0.0
      %1861 = vmatpush2.msra.mxu0 %v1798
      %1862 = vmatprep.subr.mxu0 0.0
      %1863 = vmatpush2.msra.mxu0 %v1797
      %1864 = vmatprep.subr.mxu0 0.0
      %1865 = vmatpush2.msra.mxu0 %v1796
      %1866 = vmatprep.subr.mxu0 0.0
      %1867 = vmatpush2.msra.mxu0 %v1795
      %1868 = vmatprep.subr.mxu0 0.0
      %1869 = vmatpush2.msra.mxu0 %v1794
      %1870 = vmatprep.subr.mxu0 0.0
      %1871 = vmatpush2.msra.mxu0 %v1793
      %1872 = vmatprep.subr.mxu0 0.0
      %1873 = vmatpush2.msra.mxu0 %v1792
      %1874 = vmatprep.subr.mxu0 0.0
      %1875 = vmatpush2.msra.mxu0 %v1791
      %1876 = vmatprep.subr.mxu0 0.0
      %1877 = vmatpush2.msra.mxu0 %v1790
      %1878 = vmatprep.subr.mxu0 0.0
      %1879 = vmatpush2.msra.mxu0 %v1789
      %1880 = vmatprep.subr.mxu0 0.0
      %1881 = vmatpush2.msra.mxu0 %v1788
      %1882 = vmatprep.subr.mxu0 0.0
      %1883 = vmatpush2.msra.mxu0 %v1787
      %1884 = vmatprep.subr.mxu0 0.0
      %1885 = vmatpush2.msra.mxu0 %v1786
      %1886 = vmatprep.subr.mxu0 0.0
      %1887 = vmatpush2.msra.mxu0 %v1785
      %1888 = vmatprep.mubr.f32.mxu0 %v1765
      %1889 = vmatmul.mubr.f32.gmra.mxu0 %v1763
      %v1890 = vpop.f32.mrf.mxu0
      %v1891 = vadd.f32 %v1822, %v1890
      %v1892 = vpop.f32.mrf.mxu0
      %1893 = vmatprep.mubr.f32.mxu0 %v1766
      %1894 = vmatmul.mubr.f32.gmra.mxu0 %v1764
      %v1895 = vpop.f32.mrf.mxu0
      %v1896 = vadd.f32 %v1822, %v1895
      %v1897 = vpop.f32.mrf.mxu0
      %1898 = vdwg.mxu0
      %1899 = vmatprep.subr.mxu0 0.0
      %1900 = vmatpush1.msra.mxu0 %v1816
      %1901 = vmatprep.subr.mxu0 0.0
      %1902 = vmatpush1.msra.mxu0 %v1815
      %1903 = vmatprep.subr.mxu0 0.0
      %1904 = vmatpush1.msra.mxu0 %v1814
      %1905 = vmatprep.subr.mxu0 0.0
      %1906 = vmatpush1.msra.mxu0 %v1813
      %1907 = vmatprep.subr.mxu0 0.0
      %1908 = vmatpush1.msra.mxu0 %v1812
      %1909 = vmatprep.subr.mxu0 0.0
      %1910 = vmatpush1.msra.mxu0 %v1811
      %1911 = vmatprep.subr.mxu0 0.0
      %1912 = vmatpush1.msra.mxu0 %v1810
      %1913 = vmatprep.subr.mxu0 0.0
      %1914 = vmatpush1.msra.mxu0 %v1809
      %1915 = vmatprep.subr.mxu0 0.0
      %1916 = vmatpush1.msra.mxu0 %v1808
      %1917 = vmatprep.subr.mxu0 0.0
      %1918 = vmatpush1.msra.mxu0 %v1807
      %1919 = vmatprep.subr.mxu0 0.0
      %1920 = vmatpush1.msra.mxu0 %v1806
      %1921 = vmatprep.subr.mxu0 0.0
      %1922 = vmatpush1.msra.mxu0 %v1805
      %1923 = vmatprep.subr.mxu0 0.0
      %1924 = vmatpush1.msra.mxu0 %v1804
      %1925 = vmatprep.subr.mxu0 0.0
      %1926 = vmatpush1.msra.mxu0 %v1803
      %1927 = vmatprep.subr.mxu0 0.0
      %1928 = vmatpush1.msra.mxu0 %v1802
      %1929 = vmatprep.subr.mxu0 0.0
      %1930 = vmatpush1.msra.mxu0 %v1801
      %1931 = vmatprep.subr.mxu0 0.0
      %1932 = vmatpush2.msra.mxu0 0.0
      %1933 = vmatprep.subr.mxu0 0.0
      %1934 = vmatpush2.msra.mxu0 0.0
      %1935 = vmatprep.subr.mxu0 0.0
      %1936 = vmatpush2.msra.mxu0 0.0
      %1937 = vmatprep.subr.mxu0 0.0
      %1938 = vmatpush2.msra.mxu0 0.0
      %1939 = vmatprep.subr.mxu0 0.0
      %1940 = vmatpush2.msra.mxu0 0.0
      %1941 = vmatprep.subr.mxu0 0.0
      %1942 = vmatpush2.msra.mxu0 0.0
      %1943 = vmatprep.subr.mxu0 0.0
      %1944 = vmatpush2.msra.mxu0 0.0
      %1945 = vmatprep.subr.mxu0 0.0
      %1946 = vmatpush2.msra.mxu0 0.0
      %1947 = vmatprep.subr.mxu0 0.0
      %1948 = vmatpush2.msra.mxu0 0.0
      %1949 = vmatprep.subr.mxu0 0.0
      %1950 = vmatpush2.msra.mxu0 0.0
      %1951 = vmatprep.subr.mxu0 0.0
      %1952 = vmatpush2.msra.mxu0 0.0
      %1953 = vmatprep.subr.mxu0 0.0
      %1954 = vmatpush2.msra.mxu0 0.0
      %1955 = vmatprep.subr.mxu0 0.0
      %1956 = vmatpush2.msra.mxu0 0.0
      %1957 = vmatprep.subr.mxu0 0.0
      %1958 = vmatpush2.msra.mxu0 0.0
      %1959 = vmatprep.subr.mxu0 0.0
      %1960 = vmatpush2.msra.mxu0 0.0
      %1961 = vmatprep.subr.mxu0 0.0
      %1962 = vmatpush2.msra.mxu0 0.0
      %1963 = vmatprep.mubr.f32.mxu0 0.0
      %1964 = vmatmul.mubr.f32.gmra.mxu0 %v1767
      %v1965 = vpop.f32.mrf.mxu0
      %v1966 = vadd.f32 %v1891, %v1965
      %v1967 = vpop.f32.mrf.mxu0
      %1968 = vmatprep.mubr.f32.mxu0 0.0
      %1969 = vmatmul.mubr.f32.gmra.mxu0 %v1768
      %v1970 = vpop.f32.mrf.mxu0
      %v1971 = vadd.f32 %v1896, %v1970
      %v1972 = vpop.f32.mrf.mxu0
      %1973 = vdwg.mxu0
      %v1974 = vmax.f32 %v1966, 0.0
      %v1975 = vmax.f32 %v1971, 0.0
      %1976 = vst [vmem:[#allocation2 + $0x10] sm:$0xff] %v1974
      %1977 = vst [vmem:[#allocation2 + $0x18] sm:$0xff] %v1975
      %v1978 = vld [vmem:[#allocation2 + $0xf] sm:$0xff]
      %v1979 = vld [vmem:[#allocation2 + $0x17] sm:$0xff]
      %v1980 = vld [vmem:[#allocation2 + $0x10] sm:$0xff]
      %v1981 = vld [vmem:[#allocation2 + $0x18] sm:$0xff]
      %v1982 = vld [vmem:[#allocation2 + $0x11] sm:$0xff]
      %v1983 = vld [vmem:[#allocation2 + $0x19] sm:$0xff]
      %v1984 = vld [vmem:[%s12] sm:$0xff]
      %v1985 = vld [vmem:[%s12 + $0x8] sm:$0xff]
      %v1986 = vld [vmem:[%s12 + $0x10] sm:$0xff]
      %v1987 = vld [vmem:[%s12 + $0x18] sm:$0xff]
      %v1988 = vld [vmem:[%s12 + $0x20] sm:$0xff]
      %v1989 = vld [vmem:[%s12 + $0x28] sm:$0xff]
      %v1990 = vld [vmem:[%s12 + $0x30] sm:$0xff]
      %v1991 = vld [vmem:[%s12 + $0x38] sm:$0xff]
      %v1992 = vld [vmem:[%s12 + $0x40] sm:$0xff]
      %v1993 = vld [vmem:[%s12 + $0x48] sm:$0xff]
      %v1994 = vld [vmem:[%s12 + $0x50] sm:$0xff]
      %v1995 = vld [vmem:[%s12 + $0x58] sm:$0xff]
      %v1996 = vld [vmem:[%s12 + $0x60] sm:$0xff]
      %v1997 = vld [vmem:[%s12 + $0x68] sm:$0xff]
      %v1998 = vld [vmem:[%s12 + $0x70] sm:$0xff]
      %v1999 = vld [vmem:[%s12 + $0x78] sm:$0xff]
      %v2000 = vld [vmem:[%s12 + $0x80] sm:$0xff]
      %v2001 = vld [vmem:[%s12 + $0x88] sm:$0xff]
      %v2002 = vld [vmem:[%s12 + $0x90] sm:$0xff]
      %v2003 = vld [vmem:[%s12 + $0x98] sm:$0xff]
      %v2004 = vld [vmem:[%s12 + $0xa0] sm:$0xff]
      %v2005 = vld [vmem:[%s12 + $0xa8] sm:$0xff]
      %v2006 = vld [vmem:[%s12 + $0xb0] sm:$0xff]
      %v2007 = vld [vmem:[%s12 + $0xb8] sm:$0xff]
      %v2008 = vld [vmem:[%s12 + $0xc0] sm:$0xff]
      %v2009 = vld [vmem:[%s12 + $0xc8] sm:$0xff]
      %v2010 = vld [vmem:[%s12 + $0xd0] sm:$0xff]
      %v2011 = vld [vmem:[%s12 + $0xd8] sm:$0xff]
      %v2012 = vld [vmem:[%s12 + $0xe0] sm:$0xff]
      %v2013 = vld [vmem:[%s12 + $0xe8] sm:$0xff]
      %v2014 = vld [vmem:[%s12 + $0xf0] sm:$0xff]
      %v2015 = vld [vmem:[%s12 + $0xf8] sm:$0xff]
      %v2016 = vld [vmem:[%s12 + $0x100] sm:$0xff]
      %v2017 = vld [vmem:[%s12 + $0x108] sm:$0xff]
      %v2018 = vld [vmem:[%s12 + $0x110] sm:$0xff]
      %v2019 = vld [vmem:[%s12 + $0x118] sm:$0xff]
      %v2020 = vld [vmem:[%s12 + $0x120] sm:$0xff]
      %v2021 = vld [vmem:[%s12 + $0x128] sm:$0xff]
      %v2022 = vld [vmem:[%s12 + $0x130] sm:$0xff]
      %v2023 = vld [vmem:[%s12 + $0x138] sm:$0xff]
      %v2024 = vld [vmem:[%s12 + $0x140] sm:$0xff]
      %v2025 = vld [vmem:[%s12 + $0x148] sm:$0xff]
      %v2026 = vld [vmem:[%s12 + $0x150] sm:$0xff]
      %v2027 = vld [vmem:[%s12 + $0x158] sm:$0xff]
      %v2028 = vld [vmem:[%s12 + $0x160] sm:$0xff]
      %v2029 = vld [vmem:[%s12 + $0x168] sm:$0xff]
      %v2030 = vld [vmem:[%s12 + $0x170] sm:$0xff]
      %v2031 = vld [vmem:[%s12 + $0x178] sm:$0xff]
      %v2032 = vld [vmem:[%s13] sm:$0x1]
      %v2034 = vlaneseq
      %v2035 = vshrl.u32 %v2034, 7
      %v2036 = vsub.s32 0, %v2035
      %v2037 = vrot.slane %v2032, %v2036
      %2039 = vmatprep.subr.mxu0 0.0
      %2040 = vmatpush1.msra.mxu0 %v1999
      %2041 = vmatprep.subr.mxu0 0.0
      %2042 = vmatpush1.msra.mxu0 %v1998
      %2043 = vmatprep.subr.mxu0 0.0
      %2044 = vmatpush1.msra.mxu0 %v1997
      %2045 = vmatprep.subr.mxu0 0.0
      %2046 = vmatpush1.msra.mxu0 %v1996
      %2047 = vmatprep.subr.mxu0 0.0
      %2048 = vmatpush1.msra.mxu0 %v1995
      %2049 = vmatprep.subr.mxu0 0.0
      %2050 = vmatpush1.msra.mxu0 %v1994
      %2051 = vmatprep.subr.mxu0 0.0
      %2052 = vmatpush1.msra.mxu0 %v1993
      %2053 = vmatprep.subr.mxu0 0.0
      %2054 = vmatpush1.msra.mxu0 %v1992
      %2055 = vmatprep.subr.mxu0 0.0
      %2056 = vmatpush1.msra.mxu0 %v1991
      %2057 = vmatprep.subr.mxu0 0.0
      %2058 = vmatpush1.msra.mxu0 %v1990
      %2059 = vmatprep.subr.mxu0 0.0
      %2060 = vmatpush1.msra.mxu0 %v1989
      %2061 = vmatprep.subr.mxu0 0.0
      %2062 = vmatpush1.msra.mxu0 %v1988
      %2063 = vmatprep.subr.mxu0 0.0
      %2064 = vmatpush1.msra.mxu0 %v1987
      %2065 = vmatprep.subr.mxu0 0.0
      %2066 = vmatpush1.msra.mxu0 %v1986
      %2067 = vmatprep.subr.mxu0 0.0
      %2068 = vmatpush1.msra.mxu0 %v1985
      %2069 = vmatprep.subr.mxu0 0.0
      %2070 = vmatpush1.msra.mxu0 %v1984
      %2071 = vmatprep.subr.mxu0 0.0
      %2072 = vmatpush2.msra.mxu0 %v2015
      %2073 = vmatprep.subr.mxu0 0.0
      %2074 = vmatpush2.msra.mxu0 %v2014
      %2075 = vmatprep.subr.mxu0 0.0
      %2076 = vmatpush2.msra.mxu0 %v2013
      %2077 = vmatprep.subr.mxu0 0.0
      %2078 = vmatpush2.msra.mxu0 %v2012
      %2079 = vmatprep.subr.mxu0 0.0
      %2080 = vmatpush2.msra.mxu0 %v2011
      %2081 = vmatprep.subr.mxu0 0.0
      %2082 = vmatpush2.msra.mxu0 %v2010
      %2083 = vmatprep.subr.mxu0 0.0
      %2084 = vmatpush2.msra.mxu0 %v2009
      %2085 = vmatprep.subr.mxu0 0.0
      %2086 = vmatpush2.msra.mxu0 %v2008
      %2087 = vmatprep.subr.mxu0 0.0
      %2088 = vmatpush2.msra.mxu0 %v2007
      %2089 = vmatprep.subr.mxu0 0.0
      %2090 = vmatpush2.msra.mxu0 %v2006
      %2091 = vmatprep.subr.mxu0 0.0
      %2092 = vmatpush2.msra.mxu0 %v2005
      %2093 = vmatprep.subr.mxu0 0.0
      %2094 = vmatpush2.msra.mxu0 %v2004
      %2095 = vmatprep.subr.mxu0 0.0
      %2096 = vmatpush2.msra.mxu0 %v2003
      %2097 = vmatprep.subr.mxu0 0.0
      %2098 = vmatpush2.msra.mxu0 %v2002
      %2099 = vmatprep.subr.mxu0 0.0
      %2100 = vmatpush2.msra.mxu0 %v2001
      %2101 = vmatprep.subr.mxu0 0.0
      %2102 = vmatpush2.msra.mxu0 %v2000
      %2103 = vmatprep.mubr.f32.mxu0 %v1980
      %2104 = vmatmul.mubr.f32.gmra.mxu0 %v1978
      %v2105 = vpop.f32.mrf.mxu0
      %v2106 = vadd.f32 %v2037, %v2105
      %v2107 = vpop.f32.mrf.mxu0
      %2108 = vmatprep.mubr.f32.mxu0 %v1981
      %2109 = vmatmul.mubr.f32.gmra.mxu0 %v1979
      %v2110 = vpop.f32.mrf.mxu0
      %v2111 = vadd.f32 %v2037, %v2110
      %v2112 = vpop.f32.mrf.mxu0
      %2113 = vdwg.mxu0
      %2114 = vmatprep.subr.mxu0 0.0
      %2115 = vmatpush1.msra.mxu0 %v2031
      %2116 = vmatprep.subr.mxu0 0.0
      %2117 = vmatpush1.msra.mxu0 %v2030
      %2118 = vmatprep.subr.mxu0 0.0
      %2119 = vmatpush1.msra.mxu0 %v2029
      %2120 = vmatprep.subr.mxu0 0.0
      %2121 = vmatpush1.msra.mxu0 %v2028
      %2122 = vmatprep.subr.mxu0 0.0
      %2123 = vmatpush1.msra.mxu0 %v2027
      %2124 = vmatprep.subr.mxu0 0.0
      %2125 = vmatpush1.msra.mxu0 %v2026
      %2126 = vmatprep.subr.mxu0 0.0
      %2127 = vmatpush1.msra.mxu0 %v2025
      %2128 = vmatprep.subr.mxu0 0.0
      %2129 = vmatpush1.msra.mxu0 %v2024
      %2130 = vmatprep.subr.mxu0 0.0
      %2131 = vmatpush1.msra.mxu0 %v2023
      %2132 = vmatprep.subr.mxu0 0.0
      %2133 = vmatpush1.msra.mxu0 %v2022
      %2134 = vmatprep.subr.mxu0 0.0
      %2135 = vmatpush1.msra.mxu0 %v2021
      %2136 = vmatprep.subr.mxu0 0.0
      %2137 = vmatpush1.msra.mxu0 %v2020
      %2138 = vmatprep.subr.mxu0 0.0
      %2139 = vmatpush1.msra.mxu0 %v2019
      %2140 = vmatprep.subr.mxu0 0.0
      %2141 = vmatpush1.msra.mxu0 %v2018
      %2142 = vmatprep.subr.mxu0 0.0
      %2143 = vmatpush1.msra.mxu0 %v2017
      %2144 = vmatprep.subr.mxu0 0.0
      %2145 = vmatpush1.msra.mxu0 %v2016
      %2146 = vmatprep.subr.mxu0 0.0
      %2147 = vmatpush2.msra.mxu0 0.0
      %2148 = vmatprep.subr.mxu0 0.0
      %2149 = vmatpush2.msra.mxu0 0.0
      %2150 = vmatprep.subr.mxu0 0.0
      %2151 = vmatpush2.msra.mxu0 0.0
      %2152 = vmatprep.subr.mxu0 0.0
      %2153 = vmatpush2.msra.mxu0 0.0
      %2154 = vmatprep.subr.mxu0 0.0
      %2155 = vmatpush2.msra.mxu0 0.0
      %2156 = vmatprep.subr.mxu0 0.0
      %2157 = vmatpush2.msra.mxu0 0.0
      %2158 = vmatprep.subr.mxu0 0.0
      %2159 = vmatpush2.msra.mxu0 0.0
      %2160 = vmatprep.subr.mxu0 0.0
      %2161 = vmatpush2.msra.mxu0 0.0
      %2162 = vmatprep.subr.mxu0 0.0
      %2163 = vmatpush2.msra.mxu0 0.0
      %2164 = vmatprep.subr.mxu0 0.0
      %2165 = vmatpush2.msra.mxu0 0.0
      %2166 = vmatprep.subr.mxu0 0.0
      %2167 = vmatpush2.msra.mxu0 0.0
      %2168 = vmatprep.subr.mxu0 0.0
      %2169 = vmatpush2.msra.mxu0 0.0
      %2170 = vmatprep.subr.mxu0 0.0
      %2171 = vmatpush2.msra.mxu0 0.0
      %2172 = vmatprep.subr.mxu0 0.0
      %2173 = vmatpush2.msra.mxu0 0.0
      %2174 = vmatprep.subr.mxu0 0.0
      %2175 = vmatpush2.msra.mxu0 0.0
      %2176 = vmatprep.subr.mxu0 0.0
      %2177 = vmatpush2.msra.mxu0 0.0
      %2178 = vmatprep.mubr.f32.mxu0 0.0
      %2179 = vmatmul.mubr.f32.gmra.mxu0 %v1982
      %v2180 = vpop.f32.mrf.mxu0
      %v2181 = vadd.f32 %v2106, %v2180
      %v2182 = vpop.f32.mrf.mxu0
      %2183 = vmatprep.mubr.f32.mxu0 0.0
      %2184 = vmatmul.mubr.f32.gmra.mxu0 %v1983
      %v2185 = vpop.f32.mrf.mxu0
      %v2186 = vadd.f32 %v2111, %v2185
      %v2187 = vpop.f32.mrf.mxu0
      %2188 = vdwg.mxu0
      %v2189 = vmax.f32 %v2181, 0.0
      %v2190 = vmax.f32 %v2186, 0.0
      %v2191 = vadd.f32 %v1759, %v2189
      %v2192 = vadd.f32 %v1760, %v2190
      %v2193 = vld [vmem:[%s14] sm:$0xff]
      %v2194 = vld [vmem:[%s14 + $0x8] sm:$0xff]
      %v2195 = vld [vmem:[%s14 + $0x10] sm:$0xff]
      %v2196 = vld [vmem:[%s14 + $0x18] sm:$0xff]
      %v2197 = vld [vmem:[%s14 + $0x20] sm:$0xff]
      %v2198 = vld [vmem:[%s14 + $0x28] sm:$0xff]
      %v2199 = vld [vmem:[%s14 + $0x30] sm:$0xff]
      %v2200 = vld [vmem:[%s14 + $0x38] sm:$0xff]
      %v2201 = vld [vmem:[%s14 + $0x40] sm:$0xff]
      %v2202 = vld [vmem:[%s14 + $0x48] sm:$0xff]
      %v2203 = vld [vmem:[%s14 + $0x50] sm:$0xff]
      %v2204 = vld [vmem:[%s14 + $0x58] sm:$0xff]
      %v2205 = vld [vmem:[%s14 + $0x60] sm:$0xff]
      %v2206 = vld [vmem:[%s14 + $0x68] sm:$0xff]
      %v2207 = vld [vmem:[%s14 + $0x70] sm:$0xff]
      %v2208 = vld [vmem:[%s14 + $0x78] sm:$0xff]
      %v2209 = vld [vmem:[%s15] sm:$0x1]
      %v2211 = vlaneseq
      %v2212 = vshrl.u32 %v2211, 7
      %v2213 = vsub.s32 0, %v2212
      %v2214 = vrot.slane %v2209, %v2213
      %2216 = vmatprep.subr.mxu0 0.0
      %2217 = vmatpush1.msra.mxu0 %v2208
      %2218 = vmatprep.subr.mxu0 0.0
      %2219 = vmatpush1.msra.mxu0 %v2207
      %2220 = vmatprep.subr.mxu0 0.0
      %2221 = vmatpush1.msra.mxu0 %v2206
      %2222 = vmatprep.subr.mxu0 0.0
      %2223 = vmatpush1.msra.mxu0 %v2205
      %2224 = vmatprep.subr.mxu0 0.0
      %2225 = vmatpush1.msra.mxu0 %v2204
      %2226 = vmatprep.subr.mxu0 0.0
      %2227 = vmatpush1.msra.mxu0 %v2203
      %2228 = vmatprep.subr.mxu0 0.0
      %2229 = vmatpush1.msra.mxu0 %v2202
      %2230 = vmatprep.subr.mxu0 0.0
      %2231 = vmatpush1.msra.mxu0 %v2201
      %2232 = vmatprep.subr.mxu0 0.0
      %2233 = vmatpush1.msra.mxu0 %v2200
      %2234 = vmatprep.subr.mxu0 0.0
      %2235 = vmatpush1.msra.mxu0 %v2199
      %2236 = vmatprep.subr.mxu0 0.0
      %2237 = vmatpush1.msra.mxu0 %v2198
      %2238 = vmatprep.subr.mxu0 0.0
      %2239 = vmatpush1.msra.mxu0 %v2197
      %2240 = vmatprep.subr.mxu0 0.0
      %2241 = vmatpush1.msra.mxu0 %v2196
      %2242 = vmatprep.subr.mxu0 0.0
      %2243 = vmatpush1.msra.mxu0 %v2195
      %2244 = vmatprep.subr.mxu0 0.0
      %2245 = vmatpush1.msra.mxu0 %v2194
      %2246 = vmatprep.subr.mxu0 0.0
      %2247 = vmatpush1.msra.mxu0 %v2193
      %2248 = vmatprep.subr.mxu0 0.0
      %2249 = vmatpush2.msra.mxu0 0.0
      %2250 = vmatprep.subr.mxu0 0.0
      %2251 = vmatpush2.msra.mxu0 0.0
      %2252 = vmatprep.subr.mxu0 0.0
      %2253 = vmatpush2.msra.mxu0 0.0
      %2254 = vmatprep.subr.mxu0 0.0
      %2255 = vmatpush2.msra.mxu0 0.0
      %2256 = vmatprep.subr.mxu0 0.0
      %2257 = vmatpush2.msra.mxu0 0.0
      %2258 = vmatprep.subr.mxu0 0.0
      %2259 = vmatpush2.msra.mxu0 0.0
      %2260 = vmatprep.subr.mxu0 0.0
      %2261 = vmatpush2.msra.mxu0 0.0
      %2262 = vmatprep.subr.mxu0 0.0
      %2263 = vmatpush2.msra.mxu0 0.0
      %2264 = vmatprep.subr.mxu0 0.0
      %2265 = vmatpush2.msra.mxu0 0.0
      %2266 = vmatprep.subr.mxu0 0.0
      %2267 = vmatpush2.msra.mxu0 0.0
      %2268 = vmatprep.subr.mxu0 0.0
      %2269 = vmatpush2.msra.mxu0 0.0
      %2270 = vmatprep.subr.mxu0 0.0
      %2271 = vmatpush2.msra.mxu0 0.0
      %2272 = vmatprep.subr.mxu0 0.0
      %2273 = vmatpush2.msra.mxu0 0.0
      %2274 = vmatprep.subr.mxu0 0.0
      %2275 = vmatpush2.msra.mxu0 0.0
      %2276 = vmatprep.subr.mxu0 0.0
      %2277 = vmatpush2.msra.mxu0 0.0
      %2278 = vmatprep.subr.mxu0 0.0
      %2279 = vmatpush2.msra.mxu0 0.0
      %2280 = vmatprep.mubr.f32.mxu0 0.0
      %2281 = vmatmul.mubr.f32.gmra.mxu0 %v2191
      %v2282 = vpop.f32.mrf.mxu0
      %v2283 = vadd.f32 %v2214, %v2282
      %v2284 = vpop.f32.mrf.mxu0
      %2285 = vmatprep.mubr.f32.mxu0 0.0
      %2286 = vmatmul.mubr.f32.gmra.mxu0 %v2192
      %v2287 = vpop.f32.mrf.mxu0
      %v2288 = vadd.f32 %v2214, %v2287
      %v2289 = vpop.f32.mrf.mxu0
      %2290 = vdwg.mxu0
      %v2291 = vmax.f32 %v2283, 0.0
      %v2292 = vmax.f32 %v2288, 0.0
      %2293 = vst [vmem:[#allocation2 + $0x10] sm:$0xff] %v2191
      %2294 = vst [vmem:[#allocation2 + $0x18] sm:$0xff] %v2192
      %v2295 = vld [vmem:[#allocation2 + $0xa] sm:$0xff]
      %v2296 = vld [vmem:[#allocation2 + $0x12] sm:$0xff]
      %v2297 = vld [vmem:[#allocation2 + $0x10] sm:$0xff]
      %v2298 = vld [vmem:[#allocation2 + $0x18] sm:$0xff]
      %v2299 = vld [vmem:[#allocation2 + $0x16] sm:$0xff]
      %v2300 = vld [vmem:[#allocation2 + $0x1e] sm:$0xff]
      %v2301 = vld [vmem:[%s16] sm:$0xff]
      %v2302 = vld [vmem:[%s16 + $0x8] sm:$0xff]
      %v2303 = vld [vmem:[%s16 + $0x10] sm:$0xff]
      %v2304 = vld [vmem:[%s16 + $0x18] sm:$0xff]
      %v2305 = vld [vmem:[%s16 + $0x20] sm:$0xff]
      %v2306 = vld [vmem:[%s16 + $0x28] sm:$0xff]
      %v2307 = vld [vmem:[%s16 + $0x30] sm:$0xff]
      %v2308 = vld [vmem:[%s16 + $0x38] sm:$0xff]
      %v2309 = vld [vmem:[%s16 + $0x40] sm:$0xff]
      %v2310 = vld [vmem:[%s16 + $0x48] sm:$0xff]
      %v2311 = vld [vmem:[%s16 + $0x50] sm:$0xff]
      %v2312 = vld [vmem:[%s16 + $0x58] sm:$0xff]
      %v2313 = vld [vmem:[%s16 + $0x60] sm:$0xff]
      %v2314 = vld [vmem:[%s16 + $0x68] sm:$0xff]
      %v2315 = vld [vmem:[%s16 + $0x70] sm:$0xff]
      %v2316 = vld [vmem:[%s16 + $0x78] sm:$0xff]
      %v2317 = vld [vmem:[%s16 + $0x80] sm:$0xff]
      %v2318 = vld [vmem:[%s16 + $0x88] sm:$0xff]
      %v2319 = vld [vmem:[%s16 + $0x90] sm:$0xff]
      %v2320 = vld [vmem:[%s16 + $0x98] sm:$0xff]
      %v2321 = vld [vmem:[%s16 + $0xa0] sm:$0xff]
      %v2322 = vld [vmem:[%s16 + $0xa8] sm:$0xff]
      %v2323 = vld [vmem:[%s16 + $0xb0] sm:$0xff]
      %v2324 = vld [vmem:[%s16 + $0xb8] sm:$0xff]
      %v2325 = vld [vmem:[%s16 + $0xc0] sm:$0xff]
      %v2326 = vld [vmem:[%s16 + $0xc8] sm:$0xff]
      %v2327 = vld [vmem:[%s16 + $0xd0] sm:$0xff]
      %v2328 = vld [vmem:[%s16 + $0xd8] sm:$0xff]
      %v2329 = vld [vmem:[%s16 + $0xe0] sm:$0xff]
      %v2330 = vld [vmem:[%s16 + $0xe8] sm:$0xff]
      %v2331 = vld [vmem:[%s16 + $0xf0] sm:$0xff]
      %v2332 = vld [vmem:[%s16 + $0xf8] sm:$0xff]
      %v2333 = vld [vmem:[%s16 + $0x100] sm:$0xff]
      %v2334 = vld [vmem:[%s16 + $0x108] sm:$0xff]
      %v2335 = vld [vmem:[%s16 + $0x110] sm:$0xff]
      %v2336 = vld [vmem:[%s16 + $0x118] sm:$0xff]
      %v2337 = vld [vmem:[%s16 + $0x120] sm:$0xff]
      %v2338 = vld [vmem:[%s16 + $0x128] sm:$0xff]
      %v2339 = vld [vmem:[%s16 + $0x130] sm:$0xff]
      %v2340 = vld [vmem:[%s16 + $0x138] sm:$0xff]
      %v2341 = vld [vmem:[%s16 + $0x140] sm:$0xff]
      %v2342 = vld [vmem:[%s16 + $0x148] sm:$0xff]
      %v2343 = vld [vmem:[%s16 + $0x150] sm:$0xff]
      %v2344 = vld [vmem:[%s16 + $0x158] sm:$0xff]
      %v2345 = vld [vmem:[%s16 + $0x160] sm:$0xff]
      %v2346 = vld [vmem:[%s16 + $0x168] sm:$0xff]
      %v2347 = vld [vmem:[%s16 + $0x170] sm:$0xff]
      %v2348 = vld [vmem:[%s16 + $0x178] sm:$0xff]
      %v2349 = vld [vmem:[%s17] sm:$0x1]
      %v2351 = vlaneseq
      %v2352 = vshrl.u32 %v2351, 7
      %v2353 = vsub.s32 0, %v2352
      %v2354 = vrot.slane %v2349, %v2353
      %2356 = vmatprep.subr.mxu0 0.0
      %2357 = vmatpush1.msra.mxu0 %v2316
      %2358 = vmatprep.subr.mxu0 0.0
      %2359 = vmatpush1.msra.mxu0 %v2315
      %2360 = vmatprep.subr.mxu0 0.0
      %2361 = vmatpush1.msra.mxu0 %v2314
      %2362 = vmatprep.subr.mxu0 0.0
      %2363 = vmatpush1.msra.mxu0 %v2313
      %2364 = vmatprep.subr.mxu0 0.0
      %2365 = vmatpush1.msra.mxu0 %v2312
      %2366 = vmatprep.subr.mxu0 0.0
      %2367 = vmatpush1.msra.mxu0 %v2311
      %2368 = vmatprep.subr.mxu0 0.0
      %2369 = vmatpush1.msra.mxu0 %v2310
      %2370 = vmatprep.subr.mxu0 0.0
      %2371 = vmatpush1.msra.mxu0 %v2309
      %2372 = vmatprep.subr.mxu0 0.0
      %2373 = vmatpush1.msra.mxu0 %v2308
      %2374 = vmatprep.subr.mxu0 0.0
      %2375 = vmatpush1.msra.mxu0 %v2307
      %2376 = vmatprep.subr.mxu0 0.0
      %2377 = vmatpush1.msra.mxu0 %v2306
      %2378 = vmatprep.subr.mxu0 0.0
      %2379 = vmatpush1.msra.mxu0 %v2305
      %2380 = vmatprep.subr.mxu0 0.0
      %2381 = vmatpush1.msra.mxu0 %v2304
      %2382 = vmatprep.subr.mxu0 0.0
      %2383 = vmatpush1.msra.mxu0 %v2303
      %2384 = vmatprep.subr.mxu0 0.0
      %2385 = vmatpush1.msra.mxu0 %v2302
      %2386 = vmatprep.subr.mxu0 0.0
      %2387 = vmatpush1.msra.mxu0 %v2301
      %2388 = vmatprep.subr.mxu0 0.0
      %2389 = vmatpush2.msra.mxu0 %v2332
      %2390 = vmatprep.subr.mxu0 0.0
      %2391 = vmatpush2.msra.mxu0 %v2331
      %2392 = vmatprep.subr.mxu0 0.0
      %2393 = vmatpush2.msra.mxu0 %v2330
      %2394 = vmatprep.subr.mxu0 0.0
      %2395 = vmatpush2.msra.mxu0 %v2329
      %2396 = vmatprep.subr.mxu0 0.0
      %2397 = vmatpush2.msra.mxu0 %v2328
      %2398 = vmatprep.subr.mxu0 0.0
      %2399 = vmatpush2.msra.mxu0 %v2327
      %2400 = vmatprep.subr.mxu0 0.0
      %2401 = vmatpush2.msra.mxu0 %v2326
      %2402 = vmatprep.subr.mxu0 0.0
      %2403 = vmatpush2.msra.mxu0 %v2325
      %2404 = vmatprep.subr.mxu0 0.0
      %2405 = vmatpush2.msra.mxu0 %v2324
      %2406 = vmatprep.subr.mxu0 0.0
      %2407 = vmatpush2.msra.mxu0 %v2323
      %2408 = vmatprep.subr.mxu0 0.0
      %2409 = vmatpush2.msra.mxu0 %v2322
      %2410 = vmatprep.subr.mxu0 0.0
      %2411 = vmatpush2.msra.mxu0 %v2321
      %2412 = vmatprep.subr.mxu0 0.0
      %2413 = vmatpush2.msra.mxu0 %v2320
      %2414 = vmatprep.subr.mxu0 0.0
      %2415 = vmatpush2.msra.mxu0 %v2319
      %2416 = vmatprep.subr.mxu0 0.0
      %2417 = vmatpush2.msra.mxu0 %v2318
      %2418 = vmatprep.subr.mxu0 0.0
      %2419 = vmatpush2.msra.mxu0 %v2317
      %2420 = vmatprep.mubr.f32.mxu0 %v2297
      %2421 = vmatmul.mubr.f32.gmra.mxu0 %v2295
      %v2422 = vpop.f32.mrf.mxu0
      %v2423 = vadd.f32 %v2354, %v2422
      %v2424 = vpop.f32.mrf.mxu0
      %2425 = vmatprep.mubr.f32.mxu0 %v2298
      %2426 = vmatmul.mubr.f32.gmra.mxu0 %v2296
      %v2427 = vpop.f32.mrf.mxu0
      %v2428 = vadd.f32 %v2354, %v2427
      %v2429 = vpop.f32.mrf.mxu0
      %2430 = vdwg.mxu0
      %2431 = vmatprep.subr.mxu0 0.0
      %2432 = vmatpush1.msra.mxu0 %v2348
      %2433 = vmatprep.subr.mxu0 0.0
      %2434 = vmatpush1.msra.mxu0 %v2347
      %2435 = vmatprep.subr.mxu0 0.0
      %2436 = vmatpush1.msra.mxu0 %v2346
      %2437 = vmatprep.subr.mxu0 0.0
      %2438 = vmatpush1.msra.mxu0 %v2345
      %2439 = vmatprep.subr.mxu0 0.0
      %2440 = vmatpush1.msra.mxu0 %v2344
      %2441 = vmatprep.subr.mxu0 0.0
      %2442 = vmatpush1.msra.mxu0 %v2343
      %2443 = vmatprep.subr.mxu0 0.0
      %2444 = vmatpush1.msra.mxu0 %v2342
      %2445 = vmatprep.subr.mxu0 0.0
      %2446 = vmatpush1.msra.mxu0 %v2341
      %2447 = vmatprep.subr.mxu0 0.0
      %2448 = vmatpush1.msra.mxu0 %v2340
      %2449 = vmatprep.subr.mxu0 0.0
      %2450 = vmatpush1.msra.mxu0 %v2339
      %2451 = vmatprep.subr.mxu0 0.0
      %2452 = vmatpush1.msra.mxu0 %v2338
      %2453 = vmatprep.subr.mxu0 0.0
      %2454 = vmatpush1.msra.mxu0 %v2337
      %2455 = vmatprep.subr.mxu0 0.0
      %2456 = vmatpush1.msra.mxu0 %v2336
      %2457 = vmatprep.subr.mxu0 0.0
      %2458 = vmatpush1.msra.mxu0 %v2335
      %2459 = vmatprep.subr.mxu0 0.0
      %2460 = vmatpush1.msra.mxu0 %v2334
      %2461 = vmatprep.subr.mxu0 0.0
      %2462 = vmatpush1.msra.mxu0 %v2333
      %2463 = vmatprep.subr.mxu0 0.0
      %2464 = vmatpush2.msra.mxu0 0.0
      %2465 = vmatprep.subr.mxu0 0.0
      %2466 = vmatpush2.msra.mxu0 0.0
      %2467 = vmatprep.subr.mxu0 0.0
      %2468 = vmatpush2.msra.mxu0 0.0
      %2469 = vmatprep.subr.mxu0 0.0
      %2470 = vmatpush2.msra.mxu0 0.0
      %2471 = vmatprep.subr.mxu0 0.0
      %2472 = vmatpush2.msra.mxu0 0.0
      %2473 = vmatprep.subr.mxu0 0.0
      %2474 = vmatpush2.msra.mxu0 0.0
      %2475 = vmatprep.subr.mxu0 0.0
      %2476 = vmatpush2.msra.mxu0 0.0
      %2477 = vmatprep.subr.mxu0 0.0
      %2478 = vmatpush2.msra.mxu0 0.0
      %2479 = vmatprep.subr.mxu0 0.0
      %2480 = vmatpush2.msra.mxu0 0.0
      %2481 = vmatprep.subr.mxu0 0.0
      %2482 = vmatpush2.msra.mxu0 0.0
      %2483 = vmatprep.subr.mxu0 0.0
      %2484 = vmatpush2.msra.mxu0 0.0
      %2485 = vmatprep.subr.mxu0 0.0
      %2486 = vmatpush2.msra.mxu0 0.0
      %2487 = vmatprep.subr.mxu0 0.0
      %2488 = vmatpush2.msra.mxu0 0.0
      %2489 = vmatprep.subr.mxu0 0.0
      %2490 = vmatpush2.msra.mxu0 0.0
      %2491 = vmatprep.subr.mxu0 0.0
      %2492 = vmatpush2.msra.mxu0 0.0
      %2493 = vmatprep.subr.mxu0 0.0
      %2494 = vmatpush2.msra.mxu0 0.0
      %2495 = vmatprep.mubr.f32.mxu0 0.0
      %2496 = vmatmul.mubr.f32.gmra.mxu0 %v2299
      %v2497 = vpop.f32.mrf.mxu0
      %v2498 = vadd.f32 %v2423, %v2497
      %v2499 = vpop.f32.mrf.mxu0
      %2500 = vmatprep.mubr.f32.mxu0 0.0
      %2501 = vmatmul.mubr.f32.gmra.mxu0 %v2300
      %v2502 = vpop.f32.mrf.mxu0
      %v2503 = vadd.f32 %v2428, %v2502
      %v2504 = vpop.f32.mrf.mxu0
      %2505 = vdwg.mxu0
      %v2506 = vmax.f32 %v2498, 0.0
      %v2507 = vmax.f32 %v2503, 0.0
      %v2508 = vld [vmem:[#allocation2 + $0x4] sm:$0xff]
      %v2509 = vld [vmem:[#allocation2 + $0xc] sm:$0xff]
      %v2510 = vld [vmem:[#allocation2 + $0x1c] sm:$0xff]
      %v2511 = vld [vmem:[#allocation2 + $0x24] sm:$0xff]
      %v2512 = vld [vmem:[%s18] sm:$0xff]
      %v2513 = vld [vmem:[%s18 + $0x8] sm:$0xff]
      %v2514 = vld [vmem:[%s18 + $0x10] sm:$0xff]
      %v2515 = vld [vmem:[%s18 + $0x18] sm:$0xff]
      %v2516 = vld [vmem:[%s18 + $0x20] sm:$0xff]
      %v2517 = vld [vmem:[%s18 + $0x28] sm:$0xff]
      %v2518 = vld [vmem:[%s18 + $0x30] sm:$0xff]
      %v2519 = vld [vmem:[%s18 + $0x38] sm:$0xff]
      %v2520 = vld [vmem:[%s18 + $0x40] sm:$0xff]
      %v2521 = vld [vmem:[%s18 + $0x48] sm:$0xff]
      %v2522 = vld [vmem:[%s18 + $0x50] sm:$0xff]
      %v2523 = vld [vmem:[%s18 + $0x58] sm:$0xff]
      %v2524 = vld [vmem:[%s18 + $0x60] sm:$0xff]
      %v2525 = vld [vmem:[%s18 + $0x68] sm:$0xff]
      %v2526 = vld [vmem:[%s18 + $0x70] sm:$0xff]
      %v2527 = vld [vmem:[%s18 + $0x78] sm:$0xff]
      %v2528 = vld [vmem:[%s18 + $0x80] sm:$0xff]
      %v2529 = vld [vmem:[%s18 + $0x88] sm:$0xff]
      %v2530 = vld [vmem:[%s18 + $0x90] sm:$0xff]
      %v2531 = vld [vmem:[%s18 + $0x98] sm:$0xff]
      %v2532 = vld [vmem:[%s18 + $0xa0] sm:$0xff]
      %v2533 = vld [vmem:[%s18 + $0xa8] sm:$0xff]
      %v2534 = vld [vmem:[%s18 + $0xb0] sm:$0xff]
      %v2535 = vld [vmem:[%s18 + $0xb8] sm:$0xff]
      %v2536 = vld [vmem:[%s18 + $0xc0] sm:$0xff]
      %v2537 = vld [vmem:[%s18 + $0xc8] sm:$0xff]
      %v2538 = vld [vmem:[%s18 + $0xd0] sm:$0xff]
      %v2539 = vld [vmem:[%s18 + $0xd8] sm:$0xff]
      %v2540 = vld [vmem:[%s18 + $0xe0] sm:$0xff]
      %v2541 = vld [vmem:[%s18 + $0xe8] sm:$0xff]
      %v2542 = vld [vmem:[%s18 + $0xf0] sm:$0xff]
      %v2543 = vld [vmem:[%s18 + $0xf8] sm:$0xff]
      %v2544 = vld [vmem:[%s18 + $0x100] sm:$0xff]
      %v2545 = vld [vmem:[%s18 + $0x108] sm:$0xff]
      %v2546 = vld [vmem:[%s18 + $0x110] sm:$0xff]
      %v2547 = vld [vmem:[%s18 + $0x118] sm:$0xff]
      %v2548 = vld [vmem:[%s18 + $0x120] sm:$0xff]
      %v2549 = vld [vmem:[%s18 + $0x128] sm:$0xff]
      %v2550 = vld [vmem:[%s18 + $0x130] sm:$0xff]
      %v2551 = vld [vmem:[%s18 + $0x138] sm:$0xff]
      %v2552 = vld [vmem:[%s18 + $0x140] sm:$0xff]
      %v2553 = vld [vmem:[%s18 + $0x148] sm:$0xff]
      %v2554 = vld [vmem:[%s18 + $0x150] sm:$0xff]
      %v2555 = vld [vmem:[%s18 + $0x158] sm:$0xff]
      %v2556 = vld [vmem:[%s18 + $0x160] sm:$0xff]
      %v2557 = vld [vmem:[%s18 + $0x168] sm:$0xff]
      %v2558 = vld [vmem:[%s18 + $0x170] sm:$0xff]
      %v2559 = vld [vmem:[%s18 + $0x178] sm:$0xff]
      %v2560 = vld [vmem:[%s19] sm:$0x1]
      %v2562 = vlaneseq
      %v2563 = vshrl.u32 %v2562, 7
      %v2564 = vsub.s32 0, %v2563
      %v2565 = vrot.slane %v2560, %v2564
      %2567 = vmatprep.subr.mxu0 0.0
      %2568 = vmatpush1.msra.mxu0 %v2527
      %2569 = vmatprep.subr.mxu0 0.0
      %2570 = vmatpush1.msra.mxu0 %v2526
      %2571 = vmatprep.subr.mxu0 0.0
      %2572 = vmatpush1.msra.mxu0 %v2525
      %2573 = vmatprep.subr.mxu0 0.0
      %2574 = vmatpush1.msra.mxu0 %v2524
      %2575 = vmatprep.subr.mxu0 0.0
      %2576 = vmatpush1.msra.mxu0 %v2523
      %2577 = vmatprep.subr.mxu0 0.0
      %2578 = vmatpush1.msra.mxu0 %v2522
      %2579 = vmatprep.subr.mxu0 0.0
      %2580 = vmatpush1.msra.mxu0 %v2521
      %2581 = vmatprep.subr.mxu0 0.0
      %2582 = vmatpush1.msra.mxu0 %v2520
      %2583 = vmatprep.subr.mxu0 0.0
      %2584 = vmatpush1.msra.mxu0 %v2519
      %2585 = vmatprep.subr.mxu0 0.0
      %2586 = vmatpush1.msra.mxu0 %v2518
      %2587 = vmatprep.subr.mxu0 0.0
      %2588 = vmatpush1.msra.mxu0 %v2517
      %2589 = vmatprep.subr.mxu0 0.0
      %2590 = vmatpush1.msra.mxu0 %v2516
      %2591 = vmatprep.subr.mxu0 0.0
      %2592 = vmatpush1.msra.mxu0 %v2515
      %2593 = vmatprep.subr.mxu0 0.0
      %2594 = vmatpush1.msra.mxu0 %v2514
      %2595 = vmatprep.subr.mxu0 0.0
      %2596 = vmatpush1.msra.mxu0 %v2513
      %2597 = vmatprep.subr.mxu0 0.0
      %2598 = vmatpush1.msra.mxu0 %v2512
      %2599 = vmatprep.subr.mxu0 0.0
      %2600 = vmatpush2.msra.mxu0 %v2543
      %2601 = vmatprep.subr.mxu0 0.0
      %2602 = vmatpush2.msra.mxu0 %v2542
      %2603 = vmatprep.subr.mxu0 0.0
      %2604 = vmatpush2.msra.mxu0 %v2541
      %2605 = vmatprep.subr.mxu0 0.0
      %2606 = vmatpush2.msra.mxu0 %v2540
      %2607 = vmatprep.subr.mxu0 0.0
      %2608 = vmatpush2.msra.mxu0 %v2539
      %2609 = vmatprep.subr.mxu0 0.0
      %2610 = vmatpush2.msra.mxu0 %v2538
      %2611 = vmatprep.subr.mxu0 0.0
      %2612 = vmatpush2.msra.mxu0 %v2537
      %2613 = vmatprep.subr.mxu0 0.0
      %2614 = vmatpush2.msra.mxu0 %v2536
      %2615 = vmatprep.subr.mxu0 0.0
      %2616 = vmatpush2.msra.mxu0 %v2535
      %2617 = vmatprep.subr.mxu0 0.0
      %2618 = vmatpush2.msra.mxu0 %v2534
      %2619 = vmatprep.subr.mxu0 0.0
      %2620 = vmatpush2.msra.mxu0 %v2533
      %2621 = vmatprep.subr.mxu0 0.0
      %2622 = vmatpush2.msra.mxu0 %v2532
      %2623 = vmatprep.subr.mxu0 0.0
      %2624 = vmatpush2.msra.mxu0 %v2531
      %2625 = vmatprep.subr.mxu0 0.0
      %2626 = vmatpush2.msra.mxu0 %v2530
      %2627 = vmatprep.subr.mxu0 0.0
      %2628 = vmatpush2.msra.mxu0 %v2529
      %2629 = vmatprep.subr.mxu0 0.0
      %2630 = vmatpush2.msra.mxu0 %v2528
      %2631 = vmatprep.mubr.f32.mxu0 %v2297
      %2632 = vmatmul.mubr.f32.gmra.mxu0 %v2508
      %v2633 = vpop.f32.mrf.mxu0
      %v2634 = vadd.f32 %v2565, %v2633
      %v2635 = vpop.f32.mrf.mxu0
      %2636 = vmatprep.mubr.f32.mxu0 %v2298
      %2637 = vmatmul.mubr.f32.gmra.mxu0 %v2509
      %v2638 = vpop.f32.mrf.mxu0
      %v2639 = vadd.f32 %v2565, %v2638
      %v2640 = vpop.f32.mrf.mxu0
      %2641 = vdwg.mxu0
      %2642 = vmatprep.subr.mxu0 0.0
      %2643 = vmatpush1.msra.mxu0 %v2559
      %2644 = vmatprep.subr.mxu0 0.0
      %2645 = vmatpush1.msra.mxu0 %v2558
      %2646 = vmatprep.subr.mxu0 0.0
      %2647 = vmatpush1.msra.mxu0 %v2557
      %2648 = vmatprep.subr.mxu0 0.0
      %2649 = vmatpush1.msra.mxu0 %v2556
      %2650 = vmatprep.subr.mxu0 0.0
      %2651 = vmatpush1.msra.mxu0 %v2555
      %2652 = vmatprep.subr.mxu0 0.0
      %2653 = vmatpush1.msra.mxu0 %v2554
      %2654 = vmatprep.subr.mxu0 0.0
      %2655 = vmatpush1.msra.mxu0 %v2553
      %2656 = vmatprep.subr.mxu0 0.0
      %2657 = vmatpush1.msra.mxu0 %v2552
      %2658 = vmatprep.subr.mxu0 0.0
      %2659 = vmatpush1.msra.mxu0 %v2551
      %2660 = vmatprep.subr.mxu0 0.0
      %2661 = vmatpush1.msra.mxu0 %v2550
      %2662 = vmatprep.subr.mxu0 0.0
      %2663 = vmatpush1.msra.mxu0 %v2549
      %2664 = vmatprep.subr.mxu0 0.0
      %2665 = vmatpush1.msra.mxu0 %v2548
      %2666 = vmatprep.subr.mxu0 0.0
      %2667 = vmatpush1.msra.mxu0 %v2547
      %2668 = vmatprep.subr.mxu0 0.0
      %2669 = vmatpush1.msra.mxu0 %v2546
      %2670 = vmatprep.subr.mxu0 0.0
      %2671 = vmatpush1.msra.mxu0 %v2545
      %2672 = vmatprep.subr.mxu0 0.0
      %2673 = vmatpush1.msra.mxu0 %v2544
      %2674 = vmatprep.subr.mxu0 0.0
      %2675 = vmatpush2.msra.mxu0 0.0
      %2676 = vmatprep.subr.mxu0 0.0
      %2677 = vmatpush2.msra.mxu0 0.0
      %2678 = vmatprep.subr.mxu0 0.0
      %2679 = vmatpush2.msra.mxu0 0.0
      %2680 = vmatprep.subr.mxu0 0.0
      %2681 = vmatpush2.msra.mxu0 0.0
      %2682 = vmatprep.subr.mxu0 0.0
      %2683 = vmatpush2.msra.mxu0 0.0
      %2684 = vmatprep.subr.mxu0 0.0
      %2685 = vmatpush2.msra.mxu0 0.0
      %2686 = vmatprep.subr.mxu0 0.0
      %2687 = vmatpush2.msra.mxu0 0.0
      %2688 = vmatprep.subr.mxu0 0.0
      %2689 = vmatpush2.msra.mxu0 0.0
      %2690 = vmatprep.subr.mxu0 0.0
      %2691 = vmatpush2.msra.mxu0 0.0
      %2692 = vmatprep.subr.mxu0 0.0
      %2693 = vmatpush2.msra.mxu0 0.0
      %2694 = vmatprep.subr.mxu0 0.0
      %2695 = vmatpush2.msra.mxu0 0.0
      %2696 = vmatprep.subr.mxu0 0.0
      %2697 = vmatpush2.msra.mxu0 0.0
      %2698 = vmatprep.subr.mxu0 0.0
      %2699 = vmatpush2.msra.mxu0 0.0
      %2700 = vmatprep.subr.mxu0 0.0
      %2701 = vmatpush2.msra.mxu0 0.0
      %2702 = vmatprep.subr.mxu0 0.0
      %2703 = vmatpush2.msra.mxu0 0.0
      %2704 = vmatprep.subr.mxu0 0.0
      %2705 = vmatpush2.msra.mxu0 0.0
      %2706 = vmatprep.mubr.f32.mxu0 0.0
      %2707 = vmatmul.mubr.f32.gmra.mxu0 %v2510
      %v2708 = vpop.f32.mrf.mxu0
      %v2709 = vadd.f32 %v2634, %v2708
      %v2710 = vpop.f32.mrf.mxu0
      %2711 = vmatprep.mubr.f32.mxu0 0.0
      %2712 = vmatmul.mubr.f32.gmra.mxu0 %v2511
      %v2713 = vpop.f32.mrf.mxu0
      %v2714 = vadd.f32 %v2639, %v2713
      %v2715 = vpop.f32.mrf.mxu0
      %2716 = vdwg.mxu0
      %v2717 = vmax.f32 %v2709, 0.0
      %v2718 = vmax.f32 %v2714, 0.0
      %v2719 = vld [vmem:[%s20] sm:$0xff]
      %v2720 = vld [vmem:[%s20 + $0x8] sm:$0xff]
      %v2721 = vld [vmem:[%s20 + $0x10] sm:$0xff]
      %v2722 = vld [vmem:[%s20 + $0x18] sm:$0xff]
      %v2723 = vld [vmem:[%s20 + $0x20] sm:$0xff]
      %v2724 = vld [vmem:[%s20 + $0x28] sm:$0xff]
      %v2725 = vld [vmem:[%s20 + $0x30] sm:$0xff]
      %v2726 = vld [vmem:[%s20 + $0x38] sm:$0xff]
      %v2727 = vld [vmem:[%s20 + $0x40] sm:$0xff]
      %v2728 = vld [vmem:[%s20 + $0x48] sm:$0xff]
      %v2729 = vld [vmem:[%s20 + $0x50] sm:$0xff]
      %v2730 = vld [vmem:[%s20 + $0x58] sm:$0xff]
      %v2731 = vld [vmem:[%s20 + $0x60] sm:$0xff]
      %v2732 = vld [vmem:[%s20 + $0x68] sm:$0xff]
      %v2733 = vld [vmem:[%s20 + $0x70] sm:$0xff]
      %v2734 = vld [vmem:[%s20 + $0x78] sm:$0xff]
      %v2735 = vld [vmem:[%s21] sm:$0x1]
      %v2737 = vlaneseq
      %v2738 = vshrl.u32 %v2737, 7
      %v2739 = vsub.s32 0, %v2738
      %v2740 = vrot.slane %v2735, %v2739
      %2742 = vmatprep.subr.mxu0 0.0
      %2743 = vmatpush1.msra.mxu0 %v2734
      %2744 = vmatprep.subr.mxu0 0.0
      %2745 = vmatpush1.msra.mxu0 %v2733
      %2746 = vmatprep.subr.mxu0 0.0
      %2747 = vmatpush1.msra.mxu0 %v2732
      %2748 = vmatprep.subr.mxu0 0.0
      %2749 = vmatpush1.msra.mxu0 %v2731
      %2750 = vmatprep.subr.mxu0 0.0
      %2751 = vmatpush1.msra.mxu0 %v2730
      %2752 = vmatprep.subr.mxu0 0.0
      %2753 = vmatpush1.msra.mxu0 %v2729
      %2754 = vmatprep.subr.mxu0 0.0
      %2755 = vmatpush1.msra.mxu0 %v2728
      %2756 = vmatprep.subr.mxu0 0.0
      %2757 = vmatpush1.msra.mxu0 %v2727
      %2758 = vmatprep.subr.mxu0 0.0
      %2759 = vmatpush1.msra.mxu0 %v2726
      %2760 = vmatprep.subr.mxu0 0.0
      %2761 = vmatpush1.msra.mxu0 %v2725
      %2762 = vmatprep.subr.mxu0 0.0
      %2763 = vmatpush1.msra.mxu0 %v2724
      %2764 = vmatprep.subr.mxu0 0.0
      %2765 = vmatpush1.msra.mxu0 %v2723
      %2766 = vmatprep.subr.mxu0 0.0
      %2767 = vmatpush1.msra.mxu0 %v2722
      %2768 = vmatprep.subr.mxu0 0.0
      %2769 = vmatpush1.msra.mxu0 %v2721
      %2770 = vmatprep.subr.mxu0 0.0
      %2771 = vmatpush1.msra.mxu0 %v2720
      %2772 = vmatprep.subr.mxu0 0.0
      %2773 = vmatpush1.msra.mxu0 %v2719
      %2774 = vmatprep.subr.mxu0 0.0
      %2775 = vmatpush2.msra.mxu0 0.0
      %2776 = vmatprep.subr.mxu0 0.0
      %2777 = vmatpush2.msra.mxu0 0.0
      %2778 = vmatprep.subr.mxu0 0.0
      %2779 = vmatpush2.msra.mxu0 0.0
      %2780 = vmatprep.subr.mxu0 0.0
      %2781 = vmatpush2.msra.mxu0 0.0
      %2782 = vmatprep.subr.mxu0 0.0
      %2783 = vmatpush2.msra.mxu0 0.0
      %2784 = vmatprep.subr.mxu0 0.0
      %2785 = vmatpush2.msra.mxu0 0.0
      %2786 = vmatprep.subr.mxu0 0.0
      %2787 = vmatpush2.msra.mxu0 0.0
      %2788 = vmatprep.subr.mxu0 0.0
      %2789 = vmatpush2.msra.mxu0 0.0
      %2790 = vmatprep.subr.mxu0 0.0
      %2791 = vmatpush2.msra.mxu0 0.0
      %2792 = vmatprep.subr.mxu0 0.0
      %2793 = vmatpush2.msra.mxu0 0.0
      %2794 = vmatprep.subr.mxu0 0.0
      %2795 = vmatpush2.msra.mxu0 0.0
      %2796 = vmatprep.subr.mxu0 0.0
      %2797 = vmatpush2.msra.mxu0 0.0
      %2798 = vmatprep.subr.mxu0 0.0
      %2799 = vmatpush2.msra.mxu0 0.0
      %2800 = vmatprep.subr.mxu0 0.0
      %2801 = vmatpush2.msra.mxu0 0.0
      %2802 = vmatprep.subr.mxu0 0.0
      %2803 = vmatpush2.msra.mxu0 0.0
      %2804 = vmatprep.subr.mxu0 0.0
      %2805 = vmatpush2.msra.mxu0 0.0
      %2806 = vmatprep.mubr.f32.mxu0 0.0
      %2807 = vmatmul.mubr.f32.gmra.mxu0 %v2297
      %v2808 = vpop.f32.mrf.mxu0
      %v2809 = vadd.f32 %v2740, %v2808
      %v2810 = vpop.f32.mrf.mxu0
      %2811 = vmatprep.mubr.f32.mxu0 0.0
      %2812 = vmatmul.mubr.f32.gmra.mxu0 %v2298
      %v2813 = vpop.f32.mrf.mxu0
      %v2814 = vadd.f32 %v2740, %v2813
      %v2815 = vpop.f32.mrf.mxu0
      %2816 = vdwg.mxu0
      %v2817 = vmax.f32 %v2809, 0.0
      %v2818 = vmax.f32 %v2814, 0.0
      %v2819 = vld [vmem:[%s22] sm:$0xff]
      %v2820 = vld [vmem:[%s22 + $0x8] sm:$0xff]
      %v2821 = vld [vmem:[%s22 + $0x10] sm:$0xff]
      %v2822 = vld [vmem:[%s22 + $0x18] sm:$0xff]
      %v2823 = vld [vmem:[%s22 + $0x20] sm:$0xff]
      %v2824 = vld [vmem:[%s22 + $0x28] sm:$0xff]
      %v2825 = vld [vmem:[%s22 + $0x30] sm:$0xff]
      %v2826 = vld [vmem:[%s22 + $0x38] sm:$0xff]
      %v2827 = vld [vmem:[%s22 + $0x40] sm:$0xff]
      %v2828 = vld [vmem:[%s22 + $0x48] sm:$0xff]
      %v2829 = vld [vmem:[%s22 + $0x50] sm:$0xff]
      %v2830 = vld [vmem:[%s22 + $0x58] sm:$0xff]
      %v2831 = vld [vmem:[%s22 + $0x60] sm:$0xff]
      %v2832 = vld [vmem:[%s22 + $0x68] sm:$0xff]
      %v2833 = vld [vmem:[%s22 + $0x70] sm:$0xff]
      %v2834 = vld [vmem:[%s22 + $0x78] sm:$0xff]
      %v2835 = vld [vmem:[%s22 + $0x80] sm:$0xff]
      %v2836 = vld [vmem:[%s22 + $0x88] sm:$0xff]
      %v2837 = vld [vmem:[%s22 + $0x90] sm:$0xff]
      %v2838 = vld [vmem:[%s22 + $0x98] sm:$0xff]
      %v2839 = vld [vmem:[%s22 + $0xa0] sm:$0xff]
      %v2840 = vld [vmem:[%s22 + $0xa8] sm:$0xff]
      %v2841 = vld [vmem:[%s22 + $0xb0] sm:$0xff]
      %v2842 = vld [vmem:[%s22 + $0xb8] sm:$0xff]
      %v2843 = vld [vmem:[%s22 + $0xc0] sm:$0xff]
      %v2844 = vld [vmem:[%s22 + $0xc8] sm:$0xff]
      %v2845 = vld [vmem:[%s22 + $0xd0] sm:$0xff]
      %v2846 = vld [vmem:[%s22 + $0xd8] sm:$0xff]
      %v2847 = vld [vmem:[%s22 + $0xe0] sm:$0xff]
      %v2848 = vld [vmem:[%s22 + $0xe8] sm:$0xff]
      %v2849 = vld [vmem:[%s22 + $0xf0] sm:$0xff]
      %v2850 = vld [vmem:[%s22 + $0xf8] sm:$0xff]
      %v2851 = vld [vmem:[%s22 + $0x100] sm:$0xff]
      %v2852 = vld [vmem:[%s22 + $0x108] sm:$0xff]
      %v2853 = vld [vmem:[%s22 + $0x110] sm:$0xff]
      %v2854 = vld [vmem:[%s22 + $0x118] sm:$0xff]
      %v2855 = vld [vmem:[%s22 + $0x120] sm:$0xff]
      %v2856 = vld [vmem:[%s22 + $0x128] sm:$0xff]
      %v2857 = vld [vmem:[%s22 + $0x130] sm:$0xff]
      %v2858 = vld [vmem:[%s22 + $0x138] sm:$0xff]
      %v2859 = vld [vmem:[%s22 + $0x140] sm:$0xff]
      %v2860 = vld [vmem:[%s22 + $0x148] sm:$0xff]
      %v2861 = vld [vmem:[%s22 + $0x150] sm:$0xff]
      %v2862 = vld [vmem:[%s22 + $0x158] sm:$0xff]
      %v2863 = vld [vmem:[%s22 + $0x160] sm:$0xff]
      %v2864 = vld [vmem:[%s22 + $0x168] sm:$0xff]
      %v2865 = vld [vmem:[%s22 + $0x170] sm:$0xff]
      %v2866 = vld [vmem:[%s22 + $0x178] sm:$0xff]
      %v2867 = vld [vmem:[%s22 + $0x180] sm:$0xff]
      %v2868 = vld [vmem:[%s22 + $0x188] sm:$0xff]
      %v2869 = vld [vmem:[%s22 + $0x190] sm:$0xff]
      %v2870 = vld [vmem:[%s22 + $0x198] sm:$0xff]
      %v2871 = vld [vmem:[%s22 + $0x1a0] sm:$0xff]
      %v2872 = vld [vmem:[%s22 + $0x1a8] sm:$0xff]
      %v2873 = vld [vmem:[%s22 + $0x1b0] sm:$0xff]
      %v2874 = vld [vmem:[%s22 + $0x1b8] sm:$0xff]
      %v2875 = vld [vmem:[%s22 + $0x1c0] sm:$0xff]
      %v2876 = vld [vmem:[%s22 + $0x1c8] sm:$0xff]
      %v2877 = vld [vmem:[%s22 + $0x1d0] sm:$0xff]
      %v2878 = vld [vmem:[%s22 + $0x1d8] sm:$0xff]
      %v2879 = vld [vmem:[%s22 + $0x1e0] sm:$0xff]
      %v2880 = vld [vmem:[%s22 + $0x1e8] sm:$0xff]
      %v2881 = vld [vmem:[%s22 + $0x1f0] sm:$0xff]
      %v2882 = vld [vmem:[%s22 + $0x1f8] sm:$0xff]
      %v2883 = vld [vmem:[%s22 + $0x200] sm:$0xff]
      %v2884 = vld [vmem:[%s22 + $0x208] sm:$0xff]
      %v2885 = vld [vmem:[%s22 + $0x210] sm:$0xff]
      %v2886 = vld [vmem:[%s22 + $0x218] sm:$0xff]
      %v2887 = vld [vmem:[%s22 + $0x220] sm:$0xff]
      %v2888 = vld [vmem:[%s22 + $0x228] sm:$0xff]
      %v2889 = vld [vmem:[%s22 + $0x230] sm:$0xff]
      %v2890 = vld [vmem:[%s22 + $0x238] sm:$0xff]
      %v2891 = vld [vmem:[%s22 + $0x240] sm:$0xff]
      %v2892 = vld [vmem:[%s22 + $0x248] sm:$0xff]
      %v2893 = vld [vmem:[%s22 + $0x250] sm:$0xff]
      %v2894 = vld [vmem:[%s22 + $0x258] sm:$0xff]
      %v2895 = vld [vmem:[%s22 + $0x260] sm:$0xff]
      %v2896 = vld [vmem:[%s22 + $0x268] sm:$0xff]
      %v2897 = vld [vmem:[%s22 + $0x270] sm:$0xff]
      %v2898 = vld [vmem:[%s22 + $0x278] sm:$0xff]
      %v2899 = vld [vmem:[%s23] sm:$0x1]
      %v2901 = vlaneseq
      %v2902 = vshrl.u32 %v2901, 7
      %v2903 = vsub.s32 0, %v2902
      %v2904 = vrot.slane %v2899, %v2903
      %2906 = vmatprep.subr.mxu0 0.0
      %2907 = vmatpush1.msra.mxu0 %v2834
      %2908 = vmatprep.subr.mxu0 0.0
      %2909 = vmatpush1.msra.mxu0 %v2833
      %2910 = vmatprep.subr.mxu0 0.0
      %2911 = vmatpush1.msra.mxu0 %v2832
      %2912 = vmatprep.subr.mxu0 0.0
      %2913 = vmatpush1.msra.mxu0 %v2831
      %2914 = vmatprep.subr.mxu0 0.0
      %2915 = vmatpush1.msra.mxu0 %v2830
      %2916 = vmatprep.subr.mxu0 0.0
      %2917 = vmatpush1.msra.mxu0 %v2829
      %2918 = vmatprep.subr.mxu0 0.0
      %2919 = vmatpush1.msra.mxu0 %v2828
      %2920 = vmatprep.subr.mxu0 0.0
      %2921 = vmatpush1.msra.mxu0 %v2827
      %2922 = vmatprep.subr.mxu0 0.0
      %2923 = vmatpush1.msra.mxu0 %v2826
      %2924 = vmatprep.subr.mxu0 0.0
      %2925 = vmatpush1.msra.mxu0 %v2825
      %2926 = vmatprep.subr.mxu0 0.0
      %2927 = vmatpush1.msra.mxu0 %v2824
      %2928 = vmatprep.subr.mxu0 0.0
      %2929 = vmatpush1.msra.mxu0 %v2823
      %2930 = vmatprep.subr.mxu0 0.0
      %2931 = vmatpush1.msra.mxu0 %v2822
      %2932 = vmatprep.subr.mxu0 0.0
      %2933 = vmatpush1.msra.mxu0 %v2821
      %2934 = vmatprep.subr.mxu0 0.0
      %2935 = vmatpush1.msra.mxu0 %v2820
      %2936 = vmatprep.subr.mxu0 0.0
      %2937 = vmatpush1.msra.mxu0 %v2819
      %2938 = vmatprep.subr.mxu0 0.0
      %2939 = vmatpush2.msra.mxu0 %v2850
      %2940 = vmatprep.subr.mxu0 0.0
      %2941 = vmatpush2.msra.mxu0 %v2849
      %2942 = vmatprep.subr.mxu0 0.0
      %2943 = vmatpush2.msra.mxu0 %v2848
      %2944 = vmatprep.subr.mxu0 0.0
      %2945 = vmatpush2.msra.mxu0 %v2847
      %2946 = vmatprep.subr.mxu0 0.0
      %2947 = vmatpush2.msra.mxu0 %v2846
      %2948 = vmatprep.subr.mxu0 0.0
      %2949 = vmatpush2.msra.mxu0 %v2845
      %2950 = vmatprep.subr.mxu0 0.0
      %2951 = vmatpush2.msra.mxu0 %v2844
      %2952 = vmatprep.subr.mxu0 0.0
      %2953 = vmatpush2.msra.mxu0 %v2843
      %2954 = vmatprep.subr.mxu0 0.0
      %2955 = vmatpush2.msra.mxu0 %v2842
      %2956 = vmatprep.subr.mxu0 0.0
      %2957 = vmatpush2.msra.mxu0 %v2841
      %2958 = vmatprep.subr.mxu0 0.0
      %2959 = vmatpush2.msra.mxu0 %v2840
      %2960 = vmatprep.subr.mxu0 0.0
      %2961 = vmatpush2.msra.mxu0 %v2839
      %2962 = vmatprep.subr.mxu0 0.0
      %2963 = vmatpush2.msra.mxu0 %v2838
      %2964 = vmatprep.subr.mxu0 0.0
      %2965 = vmatpush2.msra.mxu0 %v2837
      %2966 = vmatprep.subr.mxu0 0.0
      %2967 = vmatpush2.msra.mxu0 %v2836
      %2968 = vmatprep.subr.mxu0 0.0
      %2969 = vmatpush2.msra.mxu0 %v2835
      %2970 = vmatprep.mubr.f32.mxu0 %v2291
      %2971 = vmatmul.mubr.f32.gmra.mxu0 %v764
      %v2972 = vpop.f32.mrf.mxu0
      %v2973 = vadd.f32 %v2904, %v2972
      %v2974 = vpop.f32.mrf.mxu0
      %2975 = vmatprep.mubr.f32.mxu0 %v2292
      %2976 = vmatmul.mubr.f32.gmra.mxu0 %v765
      %v2977 = vpop.f32.mrf.mxu0
      %v2978 = vadd.f32 %v2904, %v2977
      %v2979 = vpop.f32.mrf.mxu0
      %2980 = vdwg.mxu0
      %2981 = vmatprep.subr.mxu0 0.0
      %2982 = vmatpush1.msra.mxu0 %v2866
      %2983 = vmatprep.subr.mxu0 0.0
      %2984 = vmatpush1.msra.mxu0 %v2865
      %2985 = vmatprep.subr.mxu0 0.0
      %2986 = vmatpush1.msra.mxu0 %v2864
      %2987 = vmatprep.subr.mxu0 0.0
      %2988 = vmatpush1.msra.mxu0 %v2863
      %2989 = vmatprep.subr.mxu0 0.0
      %2990 = vmatpush1.msra.mxu0 %v2862
      %2991 = vmatprep.subr.mxu0 0.0
      %2992 = vmatpush1.msra.mxu0 %v2861
      %2993 = vmatprep.subr.mxu0 0.0
      %2994 = vmatpush1.msra.mxu0 %v2860
      %2995 = vmatprep.subr.mxu0 0.0
      %2996 = vmatpush1.msra.mxu0 %v2859
      %2997 = vmatprep.subr.mxu0 0.0
      %2998 = vmatpush1.msra.mxu0 %v2858
      %2999 = vmatprep.subr.mxu0 0.0
      %3000 = vmatpush1.msra.mxu0 %v2857
      %3001 = vmatprep.subr.mxu0 0.0
      %3002 = vmatpush1.msra.mxu0 %v2856
      %3003 = vmatprep.subr.mxu0 0.0
      %3004 = vmatpush1.msra.mxu0 %v2855
      %3005 = vmatprep.subr.mxu0 0.0
      %3006 = vmatpush1.msra.mxu0 %v2854
      %3007 = vmatprep.subr.mxu0 0.0
      %3008 = vmatpush1.msra.mxu0 %v2853
      %3009 = vmatprep.subr.mxu0 0.0
      %3010 = vmatpush1.msra.mxu0 %v2852
      %3011 = vmatprep.subr.mxu0 0.0
      %3012 = vmatpush1.msra.mxu0 %v2851
      %3013 = vmatprep.subr.mxu0 0.0
      %3014 = vmatpush2.msra.mxu0 %v2882
      %3015 = vmatprep.subr.mxu0 0.0
      %3016 = vmatpush2.msra.mxu0 %v2881
      %3017 = vmatprep.subr.mxu0 0.0
      %3018 = vmatpush2.msra.mxu0 %v2880
      %3019 = vmatprep.subr.mxu0 0.0
      %3020 = vmatpush2.msra.mxu0 %v2879
      %3021 = vmatprep.subr.mxu0 0.0
      %3022 = vmatpush2.msra.mxu0 %v2878
      %3023 = vmatprep.subr.mxu0 0.0
      %3024 = vmatpush2.msra.mxu0 %v2877
      %3025 = vmatprep.subr.mxu0 0.0
      %3026 = vmatpush2.msra.mxu0 %v2876
      %3027 = vmatprep.subr.mxu0 0.0
      %3028 = vmatpush2.msra.mxu0 %v2875
      %3029 = vmatprep.subr.mxu0 0.0
      %3030 = vmatpush2.msra.mxu0 %v2874
      %3031 = vmatprep.subr.mxu0 0.0
      %3032 = vmatpush2.msra.mxu0 %v2873
      %3033 = vmatprep.subr.mxu0 0.0
      %3034 = vmatpush2.msra.mxu0 %v2872
      %3035 = vmatprep.subr.mxu0 0.0
      %3036 = vmatpush2.msra.mxu0 %v2871
      %3037 = vmatprep.subr.mxu0 0.0
      %3038 = vmatpush2.msra.mxu0 %v2870
      %3039 = vmatprep.subr.mxu0 0.0
      %3040 = vmatpush2.msra.mxu0 %v2869
      %3041 = vmatprep.subr.mxu0 0.0
      %3042 = vmatpush2.msra.mxu0 %v2868
      %3043 = vmatprep.subr.mxu0 0.0
      %3044 = vmatpush2.msra.mxu0 %v2867
      %3045 = vmatprep.mubr.f32.mxu0 %v2717
      %3046 = vmatmul.mubr.f32.gmra.mxu0 %v2506
      %v3047 = vpop.f32.mrf.mxu0
      %v3048 = vadd.f32 %v2973, %v3047
      %v3049 = vpop.f32.mrf.mxu0
      %3050 = vmatprep.mubr.f32.mxu0 %v2718
      %3051 = vmatmul.mubr.f32.gmra.mxu0 %v2507
      %v3052 = vpop.f32.mrf.mxu0
      %v3053 = vadd.f32 %v2978, %v3052
      %v3054 = vpop.f32.mrf.mxu0
      %3055 = vdwg.mxu0
      %3056 = vmatprep.subr.mxu0 0.0
      %3057 = vmatpush1.msra.mxu0 %v2898
      %3058 = vmatprep.subr.mxu0 0.0
      %3059 = vmatpush1.msra.mxu0 %v2897
      %3060 = vmatprep.subr.mxu0 0.0
      %3061 = vmatpush1.msra.mxu0 %v2896
      %3062 = vmatprep.subr.mxu0 0.0
      %3063 = vmatpush1.msra.mxu0 %v2895
      %3064 = vmatprep.subr.mxu0 0.0
      %3065 = vmatpush1.msra.mxu0 %v2894
      %3066 = vmatprep.subr.mxu0 0.0
      %3067 = vmatpush1.msra.mxu0 %v2893
      %3068 = vmatprep.subr.mxu0 0.0
      %3069 = vmatpush1.msra.mxu0 %v2892
      %3070 = vmatprep.subr.mxu0 0.0
      %3071 = vmatpush1.msra.mxu0 %v2891
      %3072 = vmatprep.subr.mxu0 0.0
      %3073 = vmatpush1.msra.mxu0 %v2890
      %3074 = vmatprep.subr.mxu0 0.0
      %3075 = vmatpush1.msra.mxu0 %v2889
      %3076 = vmatprep.subr.mxu0 0.0
      %3077 = vmatpush1.msra.mxu0 %v2888
      %3078 = vmatprep.subr.mxu0 0.0
      %3079 = vmatpush1.msra.mxu0 %v2887
      %3080 = vmatprep.subr.mxu0 0.0
      %3081 = vmatpush1.msra.mxu0 %v2886
      %3082 = vmatprep.subr.mxu0 0.0
      %3083 = vmatpush1.msra.mxu0 %v2885
      %3084 = vmatprep.subr.mxu0 0.0
      %3085 = vmatpush1.msra.mxu0 %v2884
      %3086 = vmatprep.subr.mxu0 0.0
      %3087 = vmatpush1.msra.mxu0 %v2883
      %3088 = vmatprep.subr.mxu0 0.0
      %3089 = vmatpush2.msra.mxu0 0.0
      %3090 = vmatprep.subr.mxu0 0.0
      %3091 = vmatpush2.msra.mxu0 0.0
      %3092 = vmatprep.subr.mxu0 0.0
      %3093 = vmatpush2.msra.mxu0 0.0
      %3094 = vmatprep.subr.mxu0 0.0
      %3095 = vmatpush2.msra.mxu0 0.0
      %3096 = vmatprep.subr.mxu0 0.0
      %3097 = vmatpush2.msra.mxu0 0.0
      %3098 = vmatprep.subr.mxu0 0.0
      %3099 = vmatpush2.msra.mxu0 0.0
      %3100 = vmatprep.subr.mxu0 0.0
      %3101 = vmatpush2.msra.mxu0 0.0
      %3102 = vmatprep.subr.mxu0 0.0
      %3103 = vmatpush2.msra.mxu0 0.0
      %3104 = vmatprep.subr.mxu0 0.0
      %3105 = vmatpush2.msra.mxu0 0.0
      %3106 = vmatprep.subr.mxu0 0.0
      %3107 = vmatpush2.msra.mxu0 0.0
      %3108 = vmatprep.subr.mxu0 0.0
      %3109 = vmatpush2.msra.mxu0 0.0
      %3110 = vmatprep.subr.mxu0 0.0
      %3111 = vmatpush2.msra.mxu0 0.0
      %3112 = vmatprep.subr.mxu0 0.0
      %3113 = vmatpush2.msra.mxu0 0.0
      %3114 = vmatprep.subr.mxu0 0.0
      %3115 = vmatpush2.msra.mxu0 0.0
      %3116 = vmatprep.subr.mxu0 0.0
      %3117 = vmatpush2.msra.mxu0 0.0
      %3118 = vmatprep.subr.mxu0 0.0
      %3119 = vmatpush2.msra.mxu0 0.0
      %3120 = vmatprep.mubr.f32.mxu0 0.0
      %3121 = vmatmul.mubr.f32.gmra.mxu0 %v2817
      %v3122 = vpop.f32.mrf.mxu0
      %v3123 = vadd.f32 %v3048, %v3122
      %v3124 = vpop.f32.mrf.mxu0
      %3125 = vmatprep.mubr.f32.mxu0 0.0
      %3126 = vmatmul.mubr.f32.gmra.mxu0 %v2818
      %v3127 = vpop.f32.mrf.mxu0
      %v3128 = vadd.f32 %v3053, %v3127
      %v3129 = vpop.f32.mrf.mxu0
      %3130 = vdwg.mxu0
      %v3131 = vmax.f32 %v3123, 0.0
      %v3132 = vmax.f32 %v3128, 0.0
      %3133 = vst [vmem:[%s757] sm:$0xff] %v3131
      %3134 = vst [vmem:[%s757 + $0x8] sm:$0xff] %v3132
      %p3135 = scmp.lt.s32.totalorder %s35, 1
      %s3136 = scalar_select %p3135, %s35, 1
      %s3137 = smul.addr %s3136, 2
      %s3138 = smul.addr %s3137, 8
      %s3139 = scalar_lea.vmem %s24, %s3138
      // Predicated region
      $region117: #{iterative_optimization_forward.1} parent=115 // pred_check
        %p3140 = pneg %p567
      $region118: #{iterative_optimization_forward.1} parent=115 // pred_check_branch
        %3142 = sbr.rel (%p3140) target = $region120
      $region119: #{iterative_optimization_forward.1} parent=115 // pred_region
        _
      $region120: #{iterative_optimization_forward.1} parent=115 // pred_fallthru
        _
    $region116: #{iterative_optimization_forward.1} parent=5 // pred_fallthru
      _
    %p3143 = scmp.le.s32.totalorder 2, %s30
    // Predicated region
    $region121: #{iterative_optimization_forward.1} parent=5 // pred_check
      %p3144 = pneg %p3143
    $region122: #{iterative_optimization_forward.1} parent=5 // pred_check_branch
      %3146 = sbr.rel (%p3144) target = $region124
    $region123: #{iterative_optimization_forward.1} parent=5 // pred_region
      %s3147 = ssub.s32 %s30, 2
      // Predicated region
      $region125: #{iterative_optimization_forward.1} parent=123 // pred_check
        %p3148 = pneg %p573
      $region126: #{iterative_optimization_forward.1} parent=123 // pred_check_branch
        %3150 = sbr.rel (%p3148) target = $region128
      $region127: #{iterative_optimization_forward.1} parent=123 // pred_region
        %p3151 = scmp.lt.s32.totalorder %s36, 1
        %s3152 = scalar_select %p3151, %s36, 1
        %s3153 = smul.addr %s3152, 2
        %s3154 = smul.addr %s3153, 8
        %s3155 = scalar_lea.vmem %s24, %s3154
      $region128: #{iterative_optimization_forward.1} parent=123 // pred_fallthru
        _
    $region124: #{iterative_optimization_forward.1} parent=5 // pred_fallthru
      _
  $region6: #{iterative_optimization_forward.1} parent=0 // loop_footer
    %s34 = sadd.s32 1, %s30
  $region7: #{iterative_optimization_forward.1} parent=0 // loop_footer_branch
    %29 = sbr.rel target = $region3
  $region8: #{iterative_optimization_forward.1} parent=0 // loop_exit
    _

</llo_original>
